<compile_context>
chip_gen: v7x
topology: tpu7x:2x2x1
jax: 0.10.0
libtpu: 0.0.40
codegen_flags: <defaults>
</compile_context>

<pallas_src>
import jax
import jax.numpy as jnp
from jax import lax
from jax.experimental import pallas as pl
from jax.experimental.pallas import tpu as pltpu

# ----- model hyper-params (module defaults) -----
D = 8                 # number of pts_linears
W = 256               # hidden width (module default)
INPUT_CH = 3
LATENT_DIM = 8
INPUT_CH_VIEWS = 3
OUTPUT_CH = 4
SKIP = 4              # skips=[4]
C_IN = INPUT_CH + LATENT_DIM                       # 11 (pts + latent)
IN_FULL = INPUT_CH + LATENT_DIM + INPUT_CH_VIEWS   # 14 (raw x width)

TM_MAX = 1024         # rows per grid step (sweep 1024-2048 on big batches)
TM_MIN = 256          # keep lane-dense output stores and (8,128) divisibility


def _pick_tm(n_rows):
    """Largest tile <= TM_MAX, halved while n_tiles < 8 (v7x 2-TC sharding)."""
    tm = TM_MAX
    while tm > TM_MIN and pl.cdiv(n_rows, tm) < 8:
        tm //= 2
    return tm


def nerf_mlp_kernel(x_ref, w0_ref, wskip_ref, wh_ref, b_ref, wout_t_ref, bout_t_ref,
                    o_ref):
    """One tile of rows through the full 8-layer MLP + output head.

    x_ref      : (TM, IN_FULL)     raw input rows (pts, latent, views), f32
    w0_ref     : (IN_FULL, W)      layer-0 weight, view rows zero-padded, bf16
    wskip_ref  : (IN_FULL, W)      x-part of post-skip layer, view rows zero, bf16
    wh_ref     : (D-1, W, W)       h-part weights of layers 1..D-1, bf16
    b_ref      : (D, W)            biases of layers 0..D-1, f32
    wout_t_ref : (OUTPUT_CH, W)    output_linear weight, transposed, bf16
    bout_t_ref : (OUTPUT_CH, 1)    output_linear bias, f32
    o_ref      : (OUTPUT_CH, TM)   transposed (lane-dense) output tile, f32
    """
    x_bf = x_ref[...].astype(jnp.bfloat16)                       # (TM, 14)

    # Layer 0: f32 accumulate + f32 bias/ReLU, carry only the bf16 copy.
    z = jnp.dot(x_bf, w0_ref[...], preferred_element_type=jnp.float32)
    h_bf = jnp.maximum(z + b_ref[0:1, :], 0.0).astype(jnp.bfloat16)

    for j in range(1, D):                                        # unrolled at trace time
        z = jnp.dot(h_bf, wh_ref[j - 1], preferred_element_type=jnp.float32)
        if j == SKIP + 1:
            # h was cat([pts, latent, h_prev]) in the reference; split the matmul.
            # Direct sum of two dots -> MRB in-place accumulate on v7x.
            z = z + jnp.dot(x_bf, wskip_ref[...], preferred_element_type=jnp.float32)
        h_bf = jnp.maximum(z + b_ref[j:j + 1, :], 0.0).astype(jnp.bfloat16)

    # Transposed head: (4, W) contracted against (TM, W) on the last dim of both
    # -> (4, TM).  Last dim TM >= 128 => unmasked lane-dense stores + dense DMA.
    out_t = lax.dot_general(
        wout_t_ref[...], h_bf,
        dimension_numbers=(((1,), (1,)), ((), ())),
        preferred_element_type=jnp.float32)
    o_ref[...] = out_t + bout_t_ref[...]


@jax.jit
def nerf_forward(x, kparams):
    """x: (N, IN_FULL) float32; kparams from pack_params(). Returns (N, OUTPUT_CH) f32."""
    w0, wskip, wh, b, wout_t, bout_t = kparams
    N = x.shape[0]
    tm = _pick_tm(N)
    n_tiles = pl.cdiv(N, tm)
    n_pad = n_tiles * tm
    if n_pad != N:
        x = jnp.pad(x, ((0, n_pad - N), (0, 0)))                 # remainder handling

    out_t = pl.pallas_call(
        nerf_mlp_kernel,
        out_shape=jax.ShapeDtypeStruct((OUTPUT_CH, n_pad), jnp.float32),
        grid_spec=pltpu.PrefetchScalarGridSpec(
            num_scalar_prefetch=0,
            grid=(n_tiles,),
            in_specs=[
                pl.BlockSpec((tm, IN_FULL), lambda i: (i, 0)),
                pl.BlockSpec((IN_FULL, W), lambda i: (0, 0)),
                pl.BlockSpec((IN_FULL, W), lambda i: (0, 0)),
                pl.BlockSpec((D - 1, W, W), lambda i: (0, 0, 0)),
                pl.BlockSpec((D, W), lambda i: (0, 0)),
                pl.BlockSpec((OUTPUT_CH, W), lambda i: (0, 0)),
                pl.BlockSpec((OUTPUT_CH, 1), lambda i: (0, 0)),
            ],
            out_specs=pl.BlockSpec((OUTPUT_CH, tm), lambda i: (0, i)),
        ),
        compiler_params=pltpu.CompilerParams(
            dimension_semantics=("parallel",),
        ),
    )(x, w0, wskip, wh, b, wout_t, bout_t)

    # (OUTPUT_CH, n_pad) -> (N, OUTPUT_CH); tiny (16 B/row) epilogue in XLA.
    return out_t[:, :N].T


def init_params(key):
    """Deterministic init (uniform +/-1/sqrt(fan_in), matching PyTorch's scale).

    Weights are pre-rounded to bf16 values (stored as f32) so the bf16 MXU kernel
    and the f32 JAX reference see bit-identical weights; biases stay f32.
    """
    def lin_w(k, fan_in, shape):
        bound = 1.0 / jnp.sqrt(jnp.float32(fan_in))
        w = jax.random.uniform(k, shape, jnp.float32, -bound, bound)
        return w.astype(jnp.bfloat16).astype(jnp.float32)

    def lin_b(k, fan_in, shape):
        bound = 1.0 / jnp.sqrt(jnp.float32(fan_in))
        return jax.random.uniform(k, shape, jnp.float32, -bound, bound)

    keys = jax.random.split(key, 2 * D + 4)
    # layer 0: (C_IN, W)
    w0 = lin_w(keys[0], C_IN, (C_IN, W))
    b_list = [lin_b(keys[1], C_IN, (W,))]
    # layers 1..D-1 h-part weights; layer SKIP+1 also has an x-part (wskip)
    wh_list = []
    wskip = None
    for j in range(1, D):
        fan_in = W + C_IN if j == SKIP + 1 else W
        wh_list.append(lin_w(keys[2 * j], fan_in, (W, W)))
        b_list.append(lin_b(keys[2 * j + 1], fan_in, (W,)))
        if j == SKIP + 1:
            wskip = lin_w(keys[2 * D], fan_in, (C_IN, W))
    wh = jnp.stack(wh_list, axis=0)                  # (D-1, W, W)
    b = jnp.stack(b_list, axis=0)                    # (D, W)
    wout = lin_w(keys[2 * D + 1], W, (W, OUTPUT_CH))
    bout = lin_b(keys[2 * D + 2], W, (OUTPUT_CH,))
    return (w0, wskip, wh, b, wout, bout)


def pack_params(params):
    """Convert reference-layout f32 params to the kernel layout / dtypes."""
    w0, wskip, wh, b, wout, bout = params
    pad = ((0, INPUT_CH_VIEWS), (0, 0))              # zero rows for unused view cols
    w0_p = jnp.pad(w0, pad).astype(jnp.bfloat16)         # (IN_FULL, W)
    wskip_p = jnp.pad(wskip, pad).astype(jnp.bfloat16)   # (IN_FULL, W)
    wh_b = wh.astype(jnp.bfloat16)                       # (D-1, W, W)
    wout_t = wout.T.astype(jnp.bfloat16)                 # (OUTPUT_CH, W)
    bout_t = bout.reshape(OUTPUT_CH, 1)                  # (OUTPUT_CH, 1) f32
    return (w0_p, wskip_p, wh_b, b, wout_t, bout_t)


def nerf_forward_ref(x, params):
    """Pure-JAX f32 reference mirroring the PyTorch forward (default config).

    Note: the kernel casts activations to bf16 between layers (f32 accumulation);
    the 1e-2 tolerance below is the documented budget for that difference at this
    init / input scale.
    """
    w0, wskip, wh, b, wout, bout = params
    x_in = x[:, :C_IN]                                   # cat([input_pts, input_latent])
    h = jax.nn.relu(x_in @ w0 + b[0])
    for j in range(1, D):
        if j == SKIP + 1:
            # reference concatenates [input_pts, input_latent, h] then applies Linear
            w_full = jnp.concatenate([wskip, wh[j - 1]], axis=0)   # (C_IN + W, W)
            h = jax.nn.relu(jnp.concatenate([x_in, h], axis=-1) @ w_full + b[j])
        else:
            h = jax.nn.relu(h @ wh[j - 1] + b[j])
    return h @ wout + bout


if __name__ == "__main__":
    key = jax.random.PRNGKey(0)
    k_param, k_x = jax.random.split(key)

    params = init_params(k_param)
    kparams = pack_params(params)

    N = 1000  # not a multiple of TM -> exercises the padded remainder path
    x = jax.random.normal(k_x, (N, IN_FULL), jnp.float32)

    out = jax.block_until_ready(nerf_forward(x, kparams))
    ref = nerf_forward_ref(x, params)

    assert out.shape == (N, OUTPUT_CH)
    assert bool(jnp.allclose(out, ref, atol=1e-2, rtol=1e-2)), "mismatch vs JAX reference"

    print("KERNEL_OK")
</pallas_src>

<mosaic_0001>
module attributes {stable_mosaic.version = 11 : i64} {
  func.func @nerf_mlp_kernel(%arg0: i32, %arg1: memref<256x14xf32, #tpu.memory_space<vmem>>, %arg2: memref<14x256xbf16, #tpu.memory_space<vmem>>, %arg3: memref<14x256xbf16, #tpu.memory_space<vmem>>, %arg4: memref<7x256x256xbf16, #tpu.memory_space<vmem>>, %arg5: memref<8x256xf32, #tpu.memory_space<vmem>>, %arg6: memref<4x256xbf16, #tpu.memory_space<vmem>>, %arg7: memref<4x1xf32, #tpu.memory_space<vmem>>, %arg8: memref<4x256xf32, #tpu.memory_space<vmem>>) attributes {dimension_semantics = [#tpu.dimension_semantics<parallel>], iteration_bounds = array<i64: 4>, scalar_prefetch = 0 : i64, scratch_operands = 0 : i64, tpu.core_type = #tpu.core_type<tc>, window_params = [{transform_indices = @transform_0, window_bounds = array<i64: 256, 14>}, {pipeline_mode = #tpu.pipeline_mode<synchronous>, transform_indices = @transform_1, window_bounds = array<i64: 14, 256>}, {pipeline_mode = #tpu.pipeline_mode<synchronous>, transform_indices = @transform_2, window_bounds = array<i64: 14, 256>}, {pipeline_mode = #tpu.pipeline_mode<synchronous>, transform_indices = @transform_3, window_bounds = array<i64: 7, 256, 256>}, {pipeline_mode = #tpu.pipeline_mode<synchronous>, transform_indices = @transform_4, window_bounds = array<i64: 8, 256>}, {pipeline_mode = #tpu.pipeline_mode<synchronous>, transform_indices = @transform_5, window_bounds = array<i64: 4, 256>}, {pipeline_mode = #tpu.pipeline_mode<synchronous>, transform_indices = @transform_6, window_bounds = array<i64: 4, 1>}, {transform_indices = @transform_7, window_bounds = array<i64: 4, 256>}]} {
    %c0 = arith.constant 0 : index
    %c0_0 = arith.constant 0 : index
    %0 = vector.load %arg1[%c0, %c0_0] : memref<256x14xf32, #tpu.memory_space<vmem>>, vector<256x14xf32>
    %1 = arith.truncf %0 : vector<256x14xf32> to vector<256x14xbf16>
    %c0_1 = arith.constant 0 : index
    %c0_2 = arith.constant 0 : index
    %2 = vector.load %arg2[%c0_1, %c0_2] : memref<14x256xbf16, #tpu.memory_space<vmem>>, vector<14x256xbf16>
    %cst = arith.constant dense<0.000000e+00> : vector<256x256xf32>
    %3 = tpu.matmul %1, %2, %cst {dimension_numbers = #tpu.dot_dimension_numbers<[1], [0], [0], [1], [0, 0, 1, 1], [], []>} : vector<256x14xbf16>, vector<14x256xbf16>, vector<256x256xf32> -> vector<256x256xf32>
    %c0_3 = arith.constant 0 : index
    %c0_4 = arith.constant 0 : index
    %4 = vector.load %arg5[%c0_3, %c0_4] : memref<8x256xf32, #tpu.memory_space<vmem>>, vector<1x256xf32>
    %5 = vector.broadcast %4 : vector<1x256xf32> to vector<256x256xf32>
    %6 = arith.addf %3, %5 : vector<256x256xf32>
    %cst_5 = arith.constant 0.000000e+00 : f32
    %7 = vector.broadcast %cst_5 : f32 to vector<256x256xf32>
    %8 = arith.maximumf %6, %7 : vector<256x256xf32>
    %9 = arith.truncf %8 : vector<256x256xf32> to vector<256x256xbf16>
    %c0_6 = arith.constant 0 : index
    %c0_7 = arith.constant 0 : index
    %c0_8 = arith.constant 0 : index
    %10 = vector.load %arg4[%c0_6, %c0_7, %c0_8] : memref<7x256x256xbf16, #tpu.memory_space<vmem>>, vector<1x256x256xbf16>
    %11 = vector.shape_cast %10 : vector<1x256x256xbf16> to vector<256x256xbf16>
    %cst_9 = arith.constant dense<0.000000e+00> : vector<256x256xf32>
    %12 = tpu.matmul %9, %11, %cst_9 {dimension_numbers = #tpu.dot_dimension_numbers<[1], [0], [0], [1], [0, 0, 1, 1], [], []>} : vector<256x256xbf16>, vector<256x256xbf16>, vector<256x256xf32> -> vector<256x256xf32>
    %c1 = arith.constant 1 : index
    %c0_10 = arith.constant 0 : index
    %13 = vector.load %arg5[%c1, %c0_10] : memref<8x256xf32, #tpu.memory_space<vmem>>, vector<1x256xf32>
    %14 = vector.broadcast %13 : vector<1x256xf32> to vector<256x256xf32>
    %15 = arith.addf %12, %14 : vector<256x256xf32>
    %cst_11 = arith.constant 0.000000e+00 : f32
    %16 = vector.broadcast %cst_11 : f32 to vector<256x256xf32>
    %17 = arith.maximumf %15, %16 : vector<256x256xf32>
    %18 = arith.truncf %17 : vector<256x256xf32> to vector<256x256xbf16>
    %c1_12 = arith.constant 1 : index
    %c0_13 = arith.constant 0 : index
    %c0_14 = arith.constant 0 : index
    %19 = vector.load %arg4[%c1_12, %c0_13, %c0_14] : memref<7x256x256xbf16, #tpu.memory_space<vmem>>, vector<1x256x256xbf16>
    %20 = vector.shape_cast %19 : vector<1x256x256xbf16> to vector<256x256xbf16>
    %cst_15 = arith.constant dense<0.000000e+00> : vector<256x256xf32>
    %21 = tpu.matmul %18, %20, %cst_15 {dimension_numbers = #tpu.dot_dimension_numbers<[1], [0], [0], [1], [0, 0, 1, 1], [], []>} : vector<256x256xbf16>, vector<256x256xbf16>, vector<256x256xf32> -> vector<256x256xf32>
    %c2 = arith.constant 2 : index
    %c0_16 = arith.constant 0 : index
    %22 = vector.load %arg5[%c2, %c0_16] : memref<8x256xf32, #tpu.memory_space<vmem>>, vector<1x256xf32>
    %23 = vector.broadcast %22 : vector<1x256xf32> to vector<256x256xf32>
    %24 = arith.addf %21, %23 : vector<256x256xf32>
    %cst_17 = arith.constant 0.000000e+00 : f32
    %25 = vector.broadcast %cst_17 : f32 to vector<256x256xf32>
    %26 = arith.maximumf %24, %25 : vector<256x256xf32>
    %27 = arith.truncf %26 : vector<256x256xf32> to vector<256x256xbf16>
    %c2_18 = arith.constant 2 : index
    %c0_19 = arith.constant 0 : index
    %c0_20 = arith.constant 0 : index
    %28 = vector.load %arg4[%c2_18, %c0_19, %c0_20] : memref<7x256x256xbf16, #tpu.memory_space<vmem>>, vector<1x256x256xbf16>
    %29 = vector.shape_cast %28 : vector<1x256x256xbf16> to vector<256x256xbf16>
    %cst_21 = arith.constant dense<0.000000e+00> : vector<256x256xf32>
    %30 = tpu.matmul %27, %29, %cst_21 {dimension_numbers = #tpu.dot_dimension_numbers<[1], [0], [0], [1], [0, 0, 1, 1], [], []>} : vector<256x256xbf16>, vector<256x256xbf16>, vector<256x256xf32> -> vector<256x256xf32>
    %c3 = arith.constant 3 : index
    %c0_22 = arith.constant 0 : index
    %31 = vector.load %arg5[%c3, %c0_22] : memref<8x256xf32, #tpu.memory_space<vmem>>, vector<1x256xf32>
    %32 = vector.broadcast %31 : vector<1x256xf32> to vector<256x256xf32>
    %33 = arith.addf %30, %32 : vector<256x256xf32>
    %cst_23 = arith.constant 0.000000e+00 : f32
    %34 = vector.broadcast %cst_23 : f32 to vector<256x256xf32>
    %35 = arith.maximumf %33, %34 : vector<256x256xf32>
    %36 = arith.truncf %35 : vector<256x256xf32> to vector<256x256xbf16>
    %c3_24 = arith.constant 3 : index
    %c0_25 = arith.constant 0 : index
    %c0_26 = arith.constant 0 : index
    %37 = vector.load %arg4[%c3_24, %c0_25, %c0_26] : memref<7x256x256xbf16, #tpu.memory_space<vmem>>, vector<1x256x256xbf16>
    %38 = vector.shape_cast %37 : vector<1x256x256xbf16> to vector<256x256xbf16>
    %cst_27 = arith.constant dense<0.000000e+00> : vector<256x256xf32>
    %39 = tpu.matmul %36, %38, %cst_27 {dimension_numbers = #tpu.dot_dimension_numbers<[1], [0], [0], [1], [0, 0, 1, 1], [], []>} : vector<256x256xbf16>, vector<256x256xbf16>, vector<256x256xf32> -> vector<256x256xf32>
    %c4 = arith.constant 4 : index
    %c0_28 = arith.constant 0 : index
    %40 = vector.load %arg5[%c4, %c0_28] : memref<8x256xf32, #tpu.memory_space<vmem>>, vector<1x256xf32>
    %41 = vector.broadcast %40 : vector<1x256xf32> to vector<256x256xf32>
    %42 = arith.addf %39, %41 : vector<256x256xf32>
    %cst_29 = arith.constant 0.000000e+00 : f32
    %43 = vector.broadcast %cst_29 : f32 to vector<256x256xf32>
    %44 = arith.maximumf %42, %43 : vector<256x256xf32>
    %45 = arith.truncf %44 : vector<256x256xf32> to vector<256x256xbf16>
    %c4_30 = arith.constant 4 : index
    %c0_31 = arith.constant 0 : index
    %c0_32 = arith.constant 0 : index
    %46 = vector.load %arg4[%c4_30, %c0_31, %c0_32] : memref<7x256x256xbf16, #tpu.memory_space<vmem>>, vector<1x256x256xbf16>
    %47 = vector.shape_cast %46 : vector<1x256x256xbf16> to vector<256x256xbf16>
    %cst_33 = arith.constant dense<0.000000e+00> : vector<256x256xf32>
    %48 = tpu.matmul %45, %47, %cst_33 {dimension_numbers = #tpu.dot_dimension_numbers<[1], [0], [0], [1], [0, 0, 1, 1], [], []>} : vector<256x256xbf16>, vector<256x256xbf16>, vector<256x256xf32> -> vector<256x256xf32>
    %c0_34 = arith.constant 0 : index
    %c0_35 = arith.constant 0 : index
    %49 = vector.load %arg3[%c0_34, %c0_35] : memref<14x256xbf16, #tpu.memory_space<vmem>>, vector<14x256xbf16>
    %cst_36 = arith.constant dense<0.000000e+00> : vector<256x256xf32>
    %50 = tpu.matmul %1, %49, %cst_36 {dimension_numbers = #tpu.dot_dimension_numbers<[1], [0], [0], [1], [0, 0, 1, 1], [], []>} : vector<256x14xbf16>, vector<14x256xbf16>, vector<256x256xf32> -> vector<256x256xf32>
    %51 = arith.addf %48, %50 : vector<256x256xf32>
    %c5 = arith.constant 5 : index
    %c0_37 = arith.constant 0 : index
    %52 = vector.load %arg5[%c5, %c0_37] : memref<8x256xf32, #tpu.memory_space<vmem>>, vector<1x256xf32>
    %53 = vector.broadcast %52 : vector<1x256xf32> to vector<256x256xf32>
    %54 = arith.addf %51, %53 : vector<256x256xf32>
    %cst_38 = arith.constant 0.000000e+00 : f32
    %55 = vector.broadcast %cst_38 : f32 to vector<256x256xf32>
    %56 = arith.maximumf %54, %55 : vector<256x256xf32>
    %57 = arith.truncf %56 : vector<256x256xf32> to vector<256x256xbf16>
    %c5_39 = arith.constant 5 : index
    %c0_40 = arith.constant 0 : index
    %c0_41 = arith.constant 0 : index
    %58 = vector.load %arg4[%c5_39, %c0_40, %c0_41] : memref<7x256x256xbf16, #tpu.memory_space<vmem>>, vector<1x256x256xbf16>
    %59 = vector.shape_cast %58 : vector<1x256x256xbf16> to vector<256x256xbf16>
    %cst_42 = arith.constant dense<0.000000e+00> : vector<256x256xf32>
    %60 = tpu.matmul %57, %59, %cst_42 {dimension_numbers = #tpu.dot_dimension_numbers<[1], [0], [0], [1], [0, 0, 1, 1], [], []>} : vector<256x256xbf16>, vector<256x256xbf16>, vector<256x256xf32> -> vector<256x256xf32>
    %c6 = arith.constant 6 : index
    %c0_43 = arith.constant 0 : index
    %61 = vector.load %arg5[%c6, %c0_43] : memref<8x256xf32, #tpu.memory_space<vmem>>, vector<1x256xf32>
    %62 = vector.broadcast %61 : vector<1x256xf32> to vector<256x256xf32>
    %63 = arith.addf %60, %62 : vector<256x256xf32>
    %cst_44 = arith.constant 0.000000e+00 : f32
    %64 = vector.broadcast %cst_44 : f32 to vector<256x256xf32>
    %65 = arith.maximumf %63, %64 : vector<256x256xf32>
    %66 = arith.truncf %65 : vector<256x256xf32> to vector<256x256xbf16>
    %c6_45 = arith.constant 6 : index
    %c0_46 = arith.constant 0 : index
    %c0_47 = arith.constant 0 : index
    %67 = vector.load %arg4[%c6_45, %c0_46, %c0_47] : memref<7x256x256xbf16, #tpu.memory_space<vmem>>, vector<1x256x256xbf16>
    %68 = vector.shape_cast %67 : vector<1x256x256xbf16> to vector<256x256xbf16>
    %cst_48 = arith.constant dense<0.000000e+00> : vector<256x256xf32>
    %69 = tpu.matmul %66, %68, %cst_48 {dimension_numbers = #tpu.dot_dimension_numbers<[1], [0], [0], [1], [0, 0, 1, 1], [], []>} : vector<256x256xbf16>, vector<256x256xbf16>, vector<256x256xf32> -> vector<256x256xf32>
    %c7 = arith.constant 7 : index
    %c0_49 = arith.constant 0 : index
    %70 = vector.load %arg5[%c7, %c0_49] : memref<8x256xf32, #tpu.memory_space<vmem>>, vector<1x256xf32>
    %71 = vector.broadcast %70 : vector<1x256xf32> to vector<256x256xf32>
    %72 = arith.addf %69, %71 : vector<256x256xf32>
    %cst_50 = arith.constant 0.000000e+00 : f32
    %73 = vector.broadcast %cst_50 : f32 to vector<256x256xf32>
    %74 = arith.maximumf %72, %73 : vector<256x256xf32>
    %75 = arith.truncf %74 : vector<256x256xf32> to vector<256x256xbf16>
    %c0_51 = arith.constant 0 : index
    %c0_52 = arith.constant 0 : index
    %76 = vector.load %arg6[%c0_51, %c0_52] : memref<4x256xbf16, #tpu.memory_space<vmem>>, vector<4x256xbf16>
    %cst_53 = arith.constant dense<0.000000e+00> : vector<4x256xf32>
    %77 = tpu.matmul %76, %75, %cst_53 {dimension_numbers = #tpu.dot_dimension_numbers<[1], [1], [0], [0], [0, 0, 1, 0], [], []>} : vector<4x256xbf16>, vector<256x256xbf16>, vector<4x256xf32> -> vector<4x256xf32>
    %c0_54 = arith.constant 0 : index
    %c0_55 = arith.constant 0 : index
    %78 = vector.load %arg7[%c0_54, %c0_55] : memref<4x1xf32, #tpu.memory_space<vmem>>, vector<4x1xf32>
    %79 = vector.broadcast %78 : vector<4x1xf32> to vector<4x256xf32>
    %80 = arith.addf %77, %79 : vector<4x256xf32>
    %c0_56 = arith.constant 0 : index
    %c0_57 = arith.constant 0 : index
    %81 = vector.load %arg8[%c0_56, %c0_57] : memref<4x256xf32, #tpu.memory_space<vmem>>, vector<4x256xf32>
    tpu.vector_store %arg8[%c0_56, %c0_57], %80 {strides = array<i32>} : memref<4x256xf32, #tpu.memory_space<vmem>>, vector<4x256xf32>,
    return
  }
  func.func @transform_0(%arg0: i32) -> (i32, i32) {
    %c0_i32 = arith.constant 0 : i32
    %c0_i32_0 = arith.constant 0 : i32
    return %arg0, %c0_i32 : i32, i32
  }
  func.func @transform_1(%arg0: i32) -> (i32, i32) {
    %c0_i32 = arith.constant 0 : i32
    %c0_i32_0 = arith.constant 0 : i32
    %c0_i32_1 = arith.constant 0 : i32
    return %c0_i32, %c0_i32_0 : i32, i32
  }
  func.func @transform_2(%arg0: i32) -> (i32, i32) {
    %c0_i32 = arith.constant 0 : i32
    %c0_i32_0 = arith.constant 0 : i32
    %c0_i32_1 = arith.constant 0 : i32
    return %c0_i32, %c0_i32_0 : i32, i32
  }
  func.func @transform_3(%arg0: i32) -> (i32, i32, i32) {
    %c0_i32 = arith.constant 0 : i32
    %c0_i32_0 = arith.constant 0 : i32
    %c0_i32_1 = arith.constant 0 : i32
    %c0_i32_2 = arith.constant 0 : i32
    return %c0_i32, %c0_i32_0, %c0_i32_1 : i32, i32, i32
  }
  func.func @transform_4(%arg0: i32) -> (i32, i32) {
    %c0_i32 = arith.constant 0 : i32
    %c0_i32_0 = arith.constant 0 : i32
    %c0_i32_1 = arith.constant 0 : i32
    return %c0_i32, %c0_i32_0 : i32, i32
  }
  func.func @transform_5(%arg0: i32) -> (i32, i32) {
    %c0_i32 = arith.constant 0 : i32
    %c0_i32_0 = arith.constant 0 : i32
    %c0_i32_1 = arith.constant 0 : i32
    return %c0_i32, %c0_i32_0 : i32, i32
  }
  func.func @transform_6(%arg0: i32) -> (i32, i32) {
    %c0_i32 = arith.constant 0 : i32
    %c0_i32_0 = arith.constant 0 : i32
    %c0_i32_1 = arith.constant 0 : i32
    return %c0_i32, %c0_i32_0 : i32, i32
  }
  func.func @transform_7(%arg0: i32) -> (i32, i32) {
    %c0_i32 = arith.constant 0 : i32
    %c0_i32_0 = arith.constant 0 : i32
    return %c0_i32, %arg0 : i32, i32
  }
}

</mosaic_0001>

<llo_original>
// kernel: nerf_forward.1
$region0: #{nerf_forward.1}
  #allocation0 [shape = 'u32[]', space=smem, size = 0x4, offset = 0x4, fixed_abs, tag = 'smem constant byte address 0x4 - core index']
  #allocation1 [shape = 'u32[144,128]{1,0:T(1,128)}', space=vmem, size = 0x12000, scoped, tag = 'internal scratch']
  %s0 = inlined_call_operand.vmem [shape: f32[1024,14], index: 0, kind: input, shape index: {}]
  %s1 = inlined_call_operand.vmem [shape: bf16[14,256], index: 1, kind: input, shape index: {}]
  %s2 = inlined_call_operand.vmem [shape: bf16[14,256], index: 2, kind: input, shape index: {}]
  %s3 = inlined_call_operand.vmem [shape: bf16[7,256,256], index: 3, kind: input, shape index: {}]
  %s4 = inlined_call_operand.vmem [shape: f32[8,256], index: 4, kind: input, shape index: {}]
  %s5 = inlined_call_operand.vmem [shape: bf16[4,256], index: 5, kind: input, shape index: {}]
  %s6 = inlined_call_operand.vmem [shape: f32[4,1], index: 6, kind: input, shape index: {}]
  %s7 = inlined_call_operand.vmem [shape: f32[4,1024], index: 7, kind: output, shape index: {}]
  %s8 = sld [smem:[#allocation0]]
  $region61: #{nerf_forward.1} parent=0
    _
  %s10 = ssub.s32 1, %s8
  %s11 = scalar_select 0, %s10, %s8
  loop: start=0, step=1, limit=6
  $region2: #{nerf_forward.1} parent=0 // loop_pre_header
    _
  $region3: #{nerf_forward.1} parent=0 // loop_header
    %s13 = sphi 0, %s17
    %p14 = scmp.ge.s32.totalorder %s13, 6
    %s23 = sphi 0, %s25
    %s26 = sphi 0, %s23
    %s27 = sphi 0, %s26
    %s43 = sphi 0, %s27
    %s47 = sphi 0, %s47
    %s49 = sphi 0, %s47
    %s50 = sphi 0, %s49
    %s64 = sphi 0, %s50
    %s68 = sphi 0, %s68
    %s70 = sphi 0, %s68
    %s71 = sphi 0, %s70
    %s85 = sphi 0, %s71
    %s89 = sphi 0, %s89
    %s91 = sphi 0, %s89
    %s92 = sphi 0, %s91
    %s106 = sphi 0, %s92
    %s110 = sphi 0, %s110
    %s112 = sphi 0, %s110
    %s113 = sphi 0, %s112
    %s127 = sphi 0, %s113
    %s131 = sphi 0, %s131
    %s133 = sphi 0, %s131
    %s134 = sphi 0, %s133
    %s148 = sphi 0, %s134
    %s152 = sphi 0, %s152
    %s154 = sphi 0, %s152
    %s155 = sphi 0, %s154
    %s169 = sphi 0, %s155
    %s175 = sphi 0, %s177
    %s178 = sphi 0, %s175
    %s179 = sphi 0, %s178
    %s195 = sphi 0, %s179
  $region4: #{nerf_forward.1} parent=0 // loop_header_branch
    %16 = sbr.rel (%p14) target = $region8
  $region5: #{nerf_forward.1} parent=0 // loop_body
    %s18 = ssub.s32 %s13, 1
    %s19 = ssub.s32 %s13, 2
    %s20 = sadd.s32 %s13, 1
    %s21 = ssub.s32 %s13, %s20
    %p22 = scmp.eq.s32.totalorder %s21, 0
    %s24 = sadd.s32 %s23, 1
    %s25 = scalar_select %p22, %s23, %s24
    %p28 = pneg %p22
    %p29 = scmp.eq.s32.totalorder %s13, 3
    %p30 = por %p28, %p29
    %p31 = scmp.ne.s32.totalorder %s23, %s26
    %p32 = scmp.eq.s32.totalorder %s13, 0
    %p33 = por %p31, %p32
    %p34 = scmp.ne.s32.totalorder %s23, %s26
    %p35 = scmp.eq.s32.totalorder %s18, 3
    %p36 = por %p34, %p35
    %p37 = scmp.ne.s32.totalorder %s26, %s27
    %p38 = scmp.eq.s32.totalorder %s18, 0
    %p39 = por %p37, %p38
    %p40 = scmp.ne.s32.totalorder %s26, %s27
    %p41 = scmp.eq.s32.totalorder %s19, 3
    %p42 = por %p40, %p41
    %p44 = scmp.ne.s32.totalorder %s27, %s43
    %p45 = scmp.eq.s32.totalorder %s19, 0
    %p46 = por %p44, %p45
    %s48 = sadd.s32 %s47, 1
    %p51 = scmp.eq.s32.totalorder %s13, 3
    %p52 = scmp.ne.s32.totalorder %s47, %s49
    %p53 = scmp.eq.s32.totalorder %s13, 0
    %p54 = por %p52, %p53
    %p55 = scmp.ne.s32.totalorder %s47, %s49
    %p56 = scmp.eq.s32.totalorder %s18, 3
    %p57 = por %p55, %p56
    %p58 = scmp.ne.s32.totalorder %s49, %s50
    %p59 = scmp.eq.s32.totalorder %s18, 0
    %p60 = por %p58, %p59
    %p61 = scmp.ne.s32.totalorder %s49, %s50
    %p62 = scmp.eq.s32.totalorder %s19, 3
    %p63 = por %p61, %p62
    %p65 = scmp.ne.s32.totalorder %s50, %s64
    %p66 = scmp.eq.s32.totalorder %s19, 0
    %p67 = por %p65, %p66
    %s69 = sadd.s32 %s68, 1
    %p72 = scmp.eq.s32.totalorder %s13, 3
    %p73 = scmp.ne.s32.totalorder %s68, %s70
    %p74 = scmp.eq.s32.totalorder %s13, 0
    %p75 = por %p73, %p74
    %p76 = scmp.ne.s32.totalorder %s68, %s70
    %p77 = scmp.eq.s32.totalorder %s18, 3
    %p78 = por %p76, %p77
    %p79 = scmp.ne.s32.totalorder %s70, %s71
    %p80 = scmp.eq.s32.totalorder %s18, 0
    %p81 = por %p79, %p80
    %p82 = scmp.ne.s32.totalorder %s70, %s71
    %p83 = scmp.eq.s32.totalorder %s19, 3
    %p84 = por %p82, %p83
    %p86 = scmp.ne.s32.totalorder %s71, %s85
    %p87 = scmp.eq.s32.totalorder %s19, 0
    %p88 = por %p86, %p87
    %s90 = sadd.s32 %s89, 1
    %p93 = scmp.eq.s32.totalorder %s13, 3
    %p94 = scmp.ne.s32.totalorder %s89, %s91
    %p95 = scmp.eq.s32.totalorder %s13, 0
    %p96 = por %p94, %p95
    %p97 = scmp.ne.s32.totalorder %s89, %s91
    %p98 = scmp.eq.s32.totalorder %s18, 3
    %p99 = por %p97, %p98
    %p100 = scmp.ne.s32.totalorder %s91, %s92
    %p101 = scmp.eq.s32.totalorder %s18, 0
    %p102 = por %p100, %p101
    %p103 = scmp.ne.s32.totalorder %s91, %s92
    %p104 = scmp.eq.s32.totalorder %s19, 3
    %p105 = por %p103, %p104
    %p107 = scmp.ne.s32.totalorder %s92, %s106
    %p108 = scmp.eq.s32.totalorder %s19, 0
    %p109 = por %p107, %p108
    %s111 = sadd.s32 %s110, 1
    %p114 = scmp.eq.s32.totalorder %s13, 3
    %p115 = scmp.ne.s32.totalorder %s110, %s112
    %p116 = scmp.eq.s32.totalorder %s13, 0
    %p117 = por %p115, %p116
    %p118 = scmp.ne.s32.totalorder %s110, %s112
    %p119 = scmp.eq.s32.totalorder %s18, 3
    %p120 = por %p118, %p119
    %p121 = scmp.ne.s32.totalorder %s112, %s113
    %p122 = scmp.eq.s32.totalorder %s18, 0
    %p123 = por %p121, %p122
    %p124 = scmp.ne.s32.totalorder %s112, %s113
    %p125 = scmp.eq.s32.totalorder %s19, 3
    %p126 = por %p124, %p125
    %p128 = scmp.ne.s32.totalorder %s113, %s127
    %p129 = scmp.eq.s32.totalorder %s19, 0
    %p130 = por %p128, %p129
    %s132 = sadd.s32 %s131, 1
    %p135 = scmp.eq.s32.totalorder %s13, 3
    %p136 = scmp.ne.s32.totalorder %s131, %s133
    %p137 = scmp.eq.s32.totalorder %s13, 0
    %p138 = por %p136, %p137
    %p139 = scmp.ne.s32.totalorder %s131, %s133
    %p140 = scmp.eq.s32.totalorder %s18, 3
    %p141 = por %p139, %p140
    %p142 = scmp.ne.s32.totalorder %s133, %s134
    %p143 = scmp.eq.s32.totalorder %s18, 0
    %p144 = por %p142, %p143
    %p145 = scmp.ne.s32.totalorder %s133, %s134
    %p146 = scmp.eq.s32.totalorder %s19, 3
    %p147 = por %p145, %p146
    %p149 = scmp.ne.s32.totalorder %s134, %s148
    %p150 = scmp.eq.s32.totalorder %s19, 0
    %p151 = por %p149, %p150
    %s153 = sadd.s32 %s152, 1
    %p156 = scmp.eq.s32.totalorder %s13, 3
    %p157 = scmp.ne.s32.totalorder %s152, %s154
    %p158 = scmp.eq.s32.totalorder %s13, 0
    %p159 = por %p157, %p158
    %p160 = scmp.ne.s32.totalorder %s152, %s154
    %p161 = scmp.eq.s32.totalorder %s18, 3
    %p162 = por %p160, %p161
    %p163 = scmp.ne.s32.totalorder %s154, %s155
    %p164 = scmp.eq.s32.totalorder %s18, 0
    %p165 = por %p163, %p164
    %p166 = scmp.ne.s32.totalorder %s154, %s155
    %p167 = scmp.eq.s32.totalorder %s19, 3
    %p168 = por %p166, %p167
    %p170 = scmp.ne.s32.totalorder %s155, %s169
    %p171 = scmp.eq.s32.totalorder %s19, 0
    %p172 = por %p170, %p171
    %s173 = ssub.s32 %s13, %s20
    %p174 = scmp.eq.s32.totalorder %s173, 0
    %s176 = sadd.s32 %s175, 1
    %s177 = scalar_select %p174, %s175, %s176
    %p180 = pneg %p174
    %p181 = scmp.eq.s32.totalorder %s13, 3
    %p182 = por %p180, %p181
    %p183 = scmp.ne.s32.totalorder %s175, %s178
    %p184 = scmp.eq.s32.totalorder %s13, 0
    %p185 = por %p183, %p184
    %p186 = scmp.ne.s32.totalorder %s175, %s178
    %p187 = scmp.eq.s32.totalorder %s18, 3
    %p188 = por %p186, %p187
    %p189 = scmp.ne.s32.totalorder %s178, %s179
    %p190 = scmp.eq.s32.totalorder %s18, 0
    %p191 = por %p189, %p190
    %p192 = scmp.ne.s32.totalorder %s178, %s179
    %p193 = scmp.eq.s32.totalorder %s19, 3
    %p194 = por %p192, %p193
    %p196 = scmp.ne.s32.totalorder %s179, %s195
    %p197 = scmp.eq.s32.totalorder %s19, 0
    %p198 = por %p196, %p197
    %p199 = scmp.le.s32.totalorder 1, %s13
    %p200 = scmp.lt.s32.totalorder %s13, 5
    %p201 = pnand %p199, %p200
    %p202 = pneg %p201
    // Predicated region
    $region9: #{nerf_forward.1} parent=5 // pred_check
      _
    $region10: #{nerf_forward.1} parent=5 // pred_check_branch
      %204 = sbr.rel (%p201) target = $region12
    $region11: #{nerf_forward.1} parent=5 // pred_region
      %s205 = ssub.s32 %s13, 1
      // Predicated region
      $region13: #{nerf_forward.1} parent=11 // pred_check
        %p206 = pneg %p60
      $region14: #{nerf_forward.1} parent=11 // pred_check_branch
        %208 = sbr.rel (%p206) target = $region16
      $region15: #{nerf_forward.1} parent=11 // pred_region
        _
      $region16: #{nerf_forward.1} parent=11 // pred_fallthru
        _
      // Predicated region
      $region17: #{nerf_forward.1} parent=11 // pred_check
        %p209 = pneg %p81
      $region18: #{nerf_forward.1} parent=11 // pred_check_branch
        %211 = sbr.rel (%p209) target = $region20
      $region19: #{nerf_forward.1} parent=11 // pred_region
        _
      $region20: #{nerf_forward.1} parent=11 // pred_fallthru
        _
      // Predicated region
      $region21: #{nerf_forward.1} parent=11 // pred_check
        %p212 = pneg %p102
      $region22: #{nerf_forward.1} parent=11 // pred_check_branch
        %214 = sbr.rel (%p212) target = $region24
      $region23: #{nerf_forward.1} parent=11 // pred_region
        _
      $region24: #{nerf_forward.1} parent=11 // pred_fallthru
        _
      // Predicated region
      $region25: #{nerf_forward.1} parent=11 // pred_check
        %p215 = pneg %p123
      $region26: #{nerf_forward.1} parent=11 // pred_check_branch
        %217 = sbr.rel (%p215) target = $region28
      $region27: #{nerf_forward.1} parent=11 // pred_region
        _
      $region28: #{nerf_forward.1} parent=11 // pred_fallthru
        _
      // Predicated region
      $region29: #{nerf_forward.1} parent=11 // pred_check
        %p218 = pneg %p144
      $region30: #{nerf_forward.1} parent=11 // pred_check_branch
        %220 = sbr.rel (%p218) target = $region32
      $region31: #{nerf_forward.1} parent=11 // pred_region
        _
      $region32: #{nerf_forward.1} parent=11 // pred_fallthru
        _
      // Predicated region
      $region33: #{nerf_forward.1} parent=11 // pred_check
        %p221 = pneg %p165
      $region34: #{nerf_forward.1} parent=11 // pred_check_branch
        %223 = sbr.rel (%p221) target = $region36
      $region35: #{nerf_forward.1} parent=11 // pred_region
        _
      $region36: #{nerf_forward.1} parent=11 // pred_fallthru
        _
    $region12: #{nerf_forward.1} parent=5 // pred_fallthru
      _
    %p224 = scmp.lt.s32.totalorder %s13, 4
    // Predicated region
    $region37: #{nerf_forward.1} parent=5 // pred_check
      %p225 = pneg %p224
    $region38: #{nerf_forward.1} parent=5 // pred_check_branch
      %227 = sbr.rel (%p225) target = $region40
    $region39: #{nerf_forward.1} parent=5 // pred_region
      // Predicated region
      $region41: #{nerf_forward.1} parent=39 // pred_check
        %p228 = pneg %p33
      $region42: #{nerf_forward.1} parent=39 // pred_check_branch
        %230 = sbr.rel (%p228) target = $region44
      $region43: #{nerf_forward.1} parent=39 // pred_region
        %s231 = smul.u32 32, %s13
        %p232 = scmp.lt.s32.totalorder %s231, 127
        %s233 = scalar_select %p232, %s231, 127
        %s234 = smul.addr %s233, 8
        %s235 = scalar_lea.vmem %s0, %s234
        %s236 = smul.u32 32, %s13
      $region44: #{nerf_forward.1} parent=39 // pred_fallthru
        _
    $region40: #{nerf_forward.1} parent=5 // pred_fallthru
      _
    %p237 = scmp.le.s32.totalorder 1, %s13
    %p238 = scmp.lt.s32.totalorder %s13, 5
    %p239 = pnand %p237, %p238
    %p240 = pneg %p239
    // Predicated region
    $region45: #{nerf_forward.1} parent=5 // pred_check
      _
    $region46: #{nerf_forward.1} parent=5 // pred_check_branch
      %242 = sbr.rel (%p239) target = $region48
    $region47: #{nerf_forward.1} parent=5 // pred_region
      %s243 = ssub.s32 %s13, 1
      %s244 = smul.u32 32, %s18
      %p245 = scmp.lt.s32.totalorder %s244, 127
      %s246 = scalar_select %p245, %s244, 127
      %s247 = smul.addr %s246, 8
      %s248 = scalar_lea.vmem %s0, %s247
      %p249 = pneg %p39
      %p250 = pneg %p36
      %p251 = pneg %p60
      %p252 = pneg %p57
      %p253 = pneg %p81
      %p254 = pneg %p78
      %p255 = pneg %p102
      %p256 = pneg %p99
      %p257 = pneg %p123
      %p258 = pneg %p120
      %p259 = pneg %p144
      %p260 = pneg %p141
      %p261 = pneg %p165
      %p262 = pneg %p162
      %p263 = pneg %p191
      %p264 = pneg %p188
      %s265 = smul.u32 2, %s18
      %p266 = scmp.lt.s32.totalorder %s265, 7
      %s267 = scalar_select %p266, %s265, 7
      %s268 = smul.addr %s267, 4
      %s269 = scalar_lea.vmem %s7, %s268
      %s270 = smul.u32 32, %s18
      %p271 = scmp.lt.s32.totalorder %s270, 127
      %s272 = scalar_select %p271, %s270, 127
      %s273 = smul.addr %s272, 8
      %s274 = scalar_lea.vmem %s0, %s273
      %s275 = smul.u32 32, %s18
      %s276 = smul.u32 2, %s18
      %p277 = scmp.lt.s32.totalorder %s276, 7
      %s278 = scalar_select %p277, %s276, 7
      %s279 = smul.addr %s278, 4
      %s280 = scalar_lea.vmem %s7, %s279
      %s281 = smul.u32 2, %s18
      %v283 = vld [vmem:[%s274] sm:$0xff]
      %v284 = vld [vmem:[%s274 + $0x8] sm:$0xff]
      %v285 = vld [vmem:[%s274 + $0x10] sm:$0xff]
      %v286 = vld [vmem:[%s274 + $0x18] sm:$0xff]
      %v287 = vld [vmem:[%s274 + $0x20] sm:$0xff]
      %v288 = vld [vmem:[%s274 + $0x28] sm:$0xff]
      %v289 = vld [vmem:[%s274 + $0x30] sm:$0xff]
      %v290 = vld [vmem:[%s274 + $0x38] sm:$0xff]
      %v291 = vld [vmem:[%s274 + $0x40] sm:$0xff]
      %v292 = vld [vmem:[%s274 + $0x48] sm:$0xff]
      %v293 = vld [vmem:[%s274 + $0x50] sm:$0xff]
      %v294 = vld [vmem:[%s274 + $0x58] sm:$0xff]
      %v295 = vld [vmem:[%s274 + $0x60] sm:$0xff]
      %v296 = vld [vmem:[%s274 + $0x68] sm:$0xff]
      %v297 = vld [vmem:[%s274 + $0x70] sm:$0xff]
      %v298 = vld [vmem:[%s274 + $0x78] sm:$0xff]
      %v299 = vld [vmem:[%s274 + $0x80] sm:$0xff]
      %v300 = vld [vmem:[%s274 + $0x88] sm:$0xff]
      %v301 = vld [vmem:[%s274 + $0x90] sm:$0xff]
      %v302 = vld [vmem:[%s274 + $0x98] sm:$0xff]
      %v303 = vld [vmem:[%s274 + $0xa0] sm:$0xff]
      %v304 = vld [vmem:[%s274 + $0xa8] sm:$0xff]
      %v305 = vld [vmem:[%s274 + $0xb0] sm:$0xff]
      %v306 = vld [vmem:[%s274 + $0xb8] sm:$0xff]
      %v307 = vld [vmem:[%s274 + $0xc0] sm:$0xff]
      %v308 = vld [vmem:[%s274 + $0xc8] sm:$0xff]
      %v309 = vld [vmem:[%s274 + $0xd0] sm:$0xff]
      %v310 = vld [vmem:[%s274 + $0xd8] sm:$0xff]
      %v311 = vld [vmem:[%s274 + $0xe0] sm:$0xff]
      %v312 = vld [vmem:[%s274 + $0xe8] sm:$0xff]
      %v313 = vld [vmem:[%s274 + $0xf0] sm:$0xff]
      %v314 = vld [vmem:[%s274 + $0xf8] sm:$0xff]
      %v315 = vpack.c.bf16 %v284, %v283
      %v316 = vpack.c.bf16 %v286, %v285
      %v317 = vpack.c.bf16 %v288, %v287
      %v318 = vpack.c.bf16 %v290, %v289
      %v319 = vpack.c.bf16 %v292, %v291
      %v320 = vpack.c.bf16 %v294, %v293
      %v321 = vpack.c.bf16 %v296, %v295
      %v322 = vpack.c.bf16 %v298, %v297
      %v323 = vpack.c.bf16 %v300, %v299
      %v324 = vpack.c.bf16 %v302, %v301
      %v325 = vpack.c.bf16 %v304, %v303
      %v326 = vpack.c.bf16 %v306, %v305
      %v327 = vpack.c.bf16 %v308, %v307
      %v328 = vpack.c.bf16 %v310, %v309
      %v329 = vpack.c.bf16 %v312, %v311
      %v330 = vpack.c.bf16 %v314, %v313
      %v331 = vld [vmem:[%s1] sm:$0xff]
      %v332 = vld [vmem:[%s1 + $0x8] sm:$0x77]
      %v333 = vld [vmem:[%s4] ss:$8 sm:$0x3]
      %v335 = vlaneseq
      %v336 = vshrl.u32 %v335, 7
      %v337 = vsub.s32 0, %v336
      %v338 = vrot.slane %v333, %v337
      %v339 = vlaneseq
      %v340 = vshrl.u32 %v339, 7
      %v341 = vsub.s32 1, %v340
      %v342 = vrot.slane %v333, %v341
      %v347 = vunpack.c.l.b16 %v331
      %v348 = vunpack.c.h.b16 %v331
      %v349 = vunpack.c.l.b16 %v332
      %v350 = vunpack.c.h.b16 %v332
      %v351 = vpack.c.b16 %v349, %v347
      %v352 = vpack.c.b16 %v350, %v348
      %vm353 = vcmask 113664
      %v355 = vsel %vm353, %v315, 0
      %v358 = vsel %vm353, %v316, 0
      %v361 = vsel %vm353, %v317, 0
      %v364 = vsel %vm353, %v318, 0
      %v367 = vsel %vm353, %v319, 0
      %v370 = vsel %vm353, %v320, 0
      %v373 = vsel %vm353, %v321, 0
      %v376 = vsel %vm353, %v322, 0
      %v379 = vsel %vm353, %v323, 0
      %v382 = vsel %vm353, %v324, 0
      %v385 = vsel %vm353, %v325, 0
      %v388 = vsel %vm353, %v326, 0
      %v391 = vsel %vm353, %v327, 0
      %v394 = vsel %vm353, %v328, 0
      %v397 = vsel %vm353, %v329, 0
      %v400 = vsel %vm353, %v330, 0
      %vm402 = vcmask 1046528
      %v404 = vsel %vm402, %v351, 0
      %v407 = vsel %vm402, %v352, 0
      %409 = vmatprep.subr.bf16.mxu0 %v407
      %410 = vmatpush1.bf16.msra.mxu0 %v404
      %411 = vmatprep.subr.bf16.mxu0 0
      %412 = vmatpush1.bf16.msra.mxu0 0
      %413 = vmatprep.subr.bf16.mxu0 0
      %414 = vmatpush1.bf16.msra.mxu0 0
      %415 = vmatprep.subr.bf16.mxu0 0
      %416 = vmatpush1.bf16.msra.mxu0 0
      %417 = vmatprep.subr.bf16.mxu0 0
      %418 = vmatpush1.bf16.msra.mxu0 0
      %419 = vmatprep.subr.bf16.mxu0 0
      %420 = vmatpush1.bf16.msra.mxu0 0
      %421 = vmatprep.subr.bf16.mxu0 0
      %422 = vmatpush1.bf16.msra.mxu0 0
      %423 = vmatprep.subr.bf16.mxu0 0
      %424 = vmatpush1.bf16.msra.mxu0 0
      %425 = vmatprep.subr.bf16.mxu0 0
      %426 = vmatpush1.bf16.msra.mxu0 0
      %427 = vmatprep.subr.bf16.mxu0 0
      %428 = vmatpush1.bf16.msra.mxu0 0
      %429 = vmatprep.subr.bf16.mxu0 0
      %430 = vmatpush1.bf16.msra.mxu0 0
      %431 = vmatprep.subr.bf16.mxu0 0
      %432 = vmatpush1.bf16.msra.mxu0 0
      %433 = vmatprep.subr.bf16.mxu0 0
      %434 = vmatpush1.bf16.msra.mxu0 0
      %435 = vmatprep.subr.bf16.mxu0 0
      %436 = vmatpush1.bf16.msra.mxu0 0
      %437 = vmatprep.subr.bf16.mxu0 0
      %438 = vmatpush1.bf16.msra.mxu0 0
      %439 = vmatprep.subr.bf16.mxu0 0
      %440 = vmatpush1.bf16.msra.mxu0 0
      %441 = vmatprep.mubr.bf16.mxu0 0
      %442 = vmatmul.mubr.bf16.gmra.mrb[0].mxu0 %v355
      %v443 = vpop.f32.mrb[0].mxu0
      %v444 = vadd.f32 %v338, %v443
      %v445 = vpop.f32.mrb[0].mxu0
      %v446 = vadd.f32 %v342, %v445
      %v447 = vpop.f32.mrb[0].mxu0
      %v448 = vadd.f32 %v338, %v447
      %v449 = vpop.f32.mrb[0].mxu0
      %v450 = vadd.f32 %v342, %v449
      %451 = vmatprep.mubr.bf16.mxu0 0
      %452 = vmatmul.mubr.bf16.gmra.mrb[0].mxu0 %v358
      %v453 = vpop.f32.mrb[0].mxu0
      %v454 = vadd.f32 %v338, %v453
      %v455 = vpop.f32.mrb[0].mxu0
      %v456 = vadd.f32 %v342, %v455
      %v457 = vpop.f32.mrb[0].mxu0
      %v458 = vadd.f32 %v338, %v457
      %v459 = vpop.f32.mrb[0].mxu0
      %v460 = vadd.f32 %v342, %v459
      %461 = vmatprep.mubr.bf16.mxu0 0
      %462 = vmatmul.mubr.bf16.gmra.mrb[0].mxu0 %v361
      %v463 = vpop.f32.mrb[0].mxu0
      %v464 = vadd.f32 %v338, %v463
      %v465 = vpop.f32.mrb[0].mxu0
      %v466 = vadd.f32 %v342, %v465
      %v467 = vpop.f32.mrb[0].mxu0
      %v468 = vadd.f32 %v338, %v467
      %v469 = vpop.f32.mrb[0].mxu0
      %v470 = vadd.f32 %v342, %v469
      %471 = vmatprep.mubr.bf16.mxu0 0
      %472 = vmatmul.mubr.bf16.gmra.mrb[0].mxu0 %v364
      %v473 = vpop.f32.mrb[0].mxu0
      %v474 = vadd.f32 %v338, %v473
      %v475 = vpop.f32.mrb[0].mxu0
      %v476 = vadd.f32 %v342, %v475
      %v477 = vpop.f32.mrb[0].mxu0
      %v478 = vadd.f32 %v338, %v477
      %v479 = vpop.f32.mrb[0].mxu0
      %v480 = vadd.f32 %v342, %v479
      %481 = vmatprep.mubr.bf16.mxu0 0
      %482 = vmatmul.mubr.bf16.gmra.mrb[0].mxu0 %v367
      %v483 = vpop.f32.mrb[0].mxu0
      %v484 = vadd.f32 %v338, %v483
      %v485 = vpop.f32.mrb[0].mxu0
      %v486 = vadd.f32 %v342, %v485
      %v487 = vpop.f32.mrb[0].mxu0
      %v488 = vadd.f32 %v338, %v487
      %v489 = vpop.f32.mrb[0].mxu0
      %v490 = vadd.f32 %v342, %v489
      %491 = vmatprep.mubr.bf16.mxu0 0
      %492 = vmatmul.mubr.bf16.gmra.mrb[0].mxu0 %v370
      %v493 = vpop.f32.mrb[0].mxu0
      %v494 = vadd.f32 %v338, %v493
      %v495 = vpop.f32.mrb[0].mxu0
      %v496 = vadd.f32 %v342, %v495
      %v497 = vpop.f32.mrb[0].mxu0
      %v498 = vadd.f32 %v338, %v497
      %v499 = vpop.f32.mrb[0].mxu0
      %v500 = vadd.f32 %v342, %v499
      %501 = vmatprep.mubr.bf16.mxu0 0
      %502 = vmatmul.mubr.bf16.gmra.mrb[0].mxu0 %v373
      %v503 = vpop.f32.mrb[0].mxu0
      %v504 = vadd.f32 %v338, %v503
      %v505 = vpop.f32.mrb[0].mxu0
      %v506 = vadd.f32 %v342, %v505
      %v507 = vpop.f32.mrb[0].mxu0
      %v508 = vadd.f32 %v338, %v507
      %v509 = vpop.f32.mrb[0].mxu0
      %v510 = vadd.f32 %v342, %v509
      %511 = vmatprep.mubr.bf16.mxu0 0
      %512 = vmatmul.mubr.bf16.gmra.mrb[0].mxu0 %v376
      %v513 = vpop.f32.mrb[0].mxu0
      %v514 = vadd.f32 %v338, %v513
      %v515 = vpop.f32.mrb[0].mxu0
      %v516 = vadd.f32 %v342, %v515
      %v517 = vpop.f32.mrb[0].mxu0
      %v518 = vadd.f32 %v338, %v517
      %v519 = vpop.f32.mrb[0].mxu0
      %v520 = vadd.f32 %v342, %v519
      %521 = vmatprep.mubr.bf16.mxu0 0
      %522 = vmatmul.mubr.bf16.gmra.mrb[0].mxu0 %v379
      %v523 = vpop.f32.mrb[0].mxu0
      %v524 = vadd.f32 %v338, %v523
      %v525 = vpop.f32.mrb[0].mxu0
      %v526 = vadd.f32 %v342, %v525
      %v527 = vpop.f32.mrb[0].mxu0
      %v528 = vadd.f32 %v338, %v527
      %v529 = vpop.f32.mrb[0].mxu0
      %v530 = vadd.f32 %v342, %v529
      %531 = vmatprep.mubr.bf16.mxu0 0
      %532 = vmatmul.mubr.bf16.gmra.mrb[0].mxu0 %v382
      %v533 = vpop.f32.mrb[0].mxu0
      %v534 = vadd.f32 %v338, %v533
      %v535 = vpop.f32.mrb[0].mxu0
      %v536 = vadd.f32 %v342, %v535
      %v537 = vpop.f32.mrb[0].mxu0
      %v538 = vadd.f32 %v338, %v537
      %v539 = vpop.f32.mrb[0].mxu0
      %v540 = vadd.f32 %v342, %v539
      %541 = vmatprep.mubr.bf16.mxu0 0
      %542 = vmatmul.mubr.bf16.gmra.mrb[0].mxu0 %v385
      %v543 = vpop.f32.mrb[0].mxu0
      %v544 = vadd.f32 %v338, %v543
      %v545 = vpop.f32.mrb[0].mxu0
      %v546 = vadd.f32 %v342, %v545
      %v547 = vpop.f32.mrb[0].mxu0
      %v548 = vadd.f32 %v338, %v547
      %v549 = vpop.f32.mrb[0].mxu0
      %v550 = vadd.f32 %v342, %v549
      %551 = vmatprep.mubr.bf16.mxu0 0
      %552 = vmatmul.mubr.bf16.gmra.mrb[0].mxu0 %v388
      %v553 = vpop.f32.mrb[0].mxu0
      %v554 = vadd.f32 %v338, %v553
      %v555 = vpop.f32.mrb[0].mxu0
      %v556 = vadd.f32 %v342, %v555
      %v557 = vpop.f32.mrb[0].mxu0
      %v558 = vadd.f32 %v338, %v557
      %v559 = vpop.f32.mrb[0].mxu0
      %v560 = vadd.f32 %v342, %v559
      %561 = vmatprep.mubr.bf16.mxu0 0
      %562 = vmatmul.mubr.bf16.gmra.mrb[0].mxu0 %v391
      %v563 = vpop.f32.mrb[0].mxu0
      %v564 = vadd.f32 %v338, %v563
      %v565 = vpop.f32.mrb[0].mxu0
      %v566 = vadd.f32 %v342, %v565
      %v567 = vpop.f32.mrb[0].mxu0
      %v568 = vadd.f32 %v338, %v567
      %v569 = vpop.f32.mrb[0].mxu0
      %v570 = vadd.f32 %v342, %v569
      %571 = vmatprep.mubr.bf16.mxu0 0
      %572 = vmatmul.mubr.bf16.gmra.mrb[0].mxu0 %v394
      %v573 = vpop.f32.mrb[0].mxu0
      %v574 = vadd.f32 %v338, %v573
      %v575 = vpop.f32.mrb[0].mxu0
      %v576 = vadd.f32 %v342, %v575
      %v577 = vpop.f32.mrb[0].mxu0
      %v578 = vadd.f32 %v338, %v577
      %v579 = vpop.f32.mrb[0].mxu0
      %v580 = vadd.f32 %v342, %v579
      %581 = vmatprep.mubr.bf16.mxu0 0
      %582 = vmatmul.mubr.bf16.gmra.mrb[0].mxu0 %v397
      %v583 = vpop.f32.mrb[0].mxu0
      %v584 = vadd.f32 %v338, %v583
      %v585 = vpop.f32.mrb[0].mxu0
      %v586 = vadd.f32 %v342, %v585
      %v587 = vpop.f32.mrb[0].mxu0
      %v588 = vadd.f32 %v338, %v587
      %v589 = vpop.f32.mrb[0].mxu0
      %v590 = vadd.f32 %v342, %v589
      %591 = vmatprep.mubr.bf16.mxu0 0
      %592 = vmatmul.mubr.bf16.gmra.mrb[0].mxu0 %v400
      %v593 = vpop.f32.mrb[0].mxu0
      %v594 = vadd.f32 %v338, %v593
      %v595 = vpop.f32.mrb[0].mxu0
      %v596 = vadd.f32 %v342, %v595
      %v597 = vpop.f32.mrb[0].mxu0
      %v598 = vadd.f32 %v338, %v597
      %v599 = vpop.f32.mrb[0].mxu0
      %v600 = vadd.f32 %v342, %v599
      %601 = vdwg.mxu0
      %v602 = vmax.f32 %v444, 0.0
      %v603 = vmax.f32 %v446, 0.0
      %v604 = vmax.f32 %v448, 0.0
      %v605 = vmax.f32 %v450, 0.0
      %v606 = vmax.f32 %v454, 0.0
      %v607 = vmax.f32 %v456, 0.0
      %v608 = vmax.f32 %v458, 0.0
      %v609 = vmax.f32 %v460, 0.0
      %v610 = vmax.f32 %v464, 0.0
      %v611 = vmax.f32 %v466, 0.0
      %v612 = vmax.f32 %v468, 0.0
      %v613 = vmax.f32 %v470, 0.0
      %v614 = vmax.f32 %v474, 0.0
      %v615 = vmax.f32 %v476, 0.0
      %v616 = vmax.f32 %v478, 0.0
      %v617 = vmax.f32 %v480, 0.0
      %v618 = vmax.f32 %v484, 0.0
      %v619 = vmax.f32 %v486, 0.0
      %v620 = vmax.f32 %v488, 0.0
      %v621 = vmax.f32 %v490, 0.0
      %v622 = vmax.f32 %v494, 0.0
      %v623 = vmax.f32 %v496, 0.0
      %v624 = vmax.f32 %v498, 0.0
      %v625 = vmax.f32 %v500, 0.0
      %v626 = vmax.f32 %v504, 0.0
      %v627 = vmax.f32 %v506, 0.0
      %v628 = vmax.f32 %v508, 0.0
      %v629 = vmax.f32 %v510, 0.0
      %v630 = vmax.f32 %v514, 0.0
      %v631 = vmax.f32 %v516, 0.0
      %v632 = vmax.f32 %v518, 0.0
      %v633 = vmax.f32 %v520, 0.0
      %v634 = vmax.f32 %v524, 0.0
      %v635 = vmax.f32 %v526, 0.0
      %v636 = vmax.f32 %v528, 0.0
      %v637 = vmax.f32 %v530, 0.0
      %v638 = vmax.f32 %v534, 0.0
      %v639 = vmax.f32 %v536, 0.0
      %v640 = vmax.f32 %v538, 0.0
      %v641 = vmax.f32 %v540, 0.0
      %v642 = vmax.f32 %v544, 0.0
      %v643 = vmax.f32 %v546, 0.0
      %v644 = vmax.f32 %v548, 0.0
      %v645 = vmax.f32 %v550, 0.0
      %v646 = vmax.f32 %v554, 0.0
      %v647 = vmax.f32 %v556, 0.0
      %v648 = vmax.f32 %v558, 0.0
      %v649 = vmax.f32 %v560, 0.0
      %v650 = vmax.f32 %v564, 0.0
      %v651 = vmax.f32 %v566, 0.0
      %v652 = vmax.f32 %v568, 0.0
      %v653 = vmax.f32 %v570, 0.0
      %v654 = vmax.f32 %v574, 0.0
      %v655 = vmax.f32 %v576, 0.0
      %v656 = vmax.f32 %v578, 0.0
      %v657 = vmax.f32 %v580, 0.0
      %v658 = vmax.f32 %v584, 0.0
      %v659 = vmax.f32 %v586, 0.0
      %v660 = vmax.f32 %v588, 0.0
      %v661 = vmax.f32 %v590, 0.0
      %v662 = vmax.f32 %v594, 0.0
      %v663 = vmax.f32 %v596, 0.0
      %v664 = vmax.f32 %v598, 0.0
      %v665 = vmax.f32 %v600, 0.0
      %v666 = vpack.c.bf16 %v604, %v602
      %v667 = vpack.c.bf16 %v605, %v603
      %v668 = vpack.c.bf16 %v608, %v606
      %v669 = vpack.c.bf16 %v609, %v607
      %v670 = vpack.c.bf16 %v612, %v610
      %v671 = vpack.c.bf16 %v613, %v611
      %v672 = vpack.c.bf16 %v616, %v614
      %v673 = vpack.c.bf16 %v617, %v615
      %v674 = vpack.c.bf16 %v620, %v618
      %v675 = vpack.c.bf16 %v621, %v619
      %v676 = vpack.c.bf16 %v624, %v622
      %v677 = vpack.c.bf16 %v625, %v623
      %v678 = vpack.c.bf16 %v628, %v626
      %v679 = vpack.c.bf16 %v629, %v627
      %v680 = vpack.c.bf16 %v632, %v630
      %v681 = vpack.c.bf16 %v633, %v631
      %v682 = vpack.c.bf16 %v636, %v634
      %v683 = vpack.c.bf16 %v637, %v635
      %v684 = vpack.c.bf16 %v640, %v638
      %v685 = vpack.c.bf16 %v641, %v639
      %v686 = vpack.c.bf16 %v644, %v642
      %v687 = vpack.c.bf16 %v645, %v643
      %v688 = vpack.c.bf16 %v648, %v646
      %v689 = vpack.c.bf16 %v649, %v647
      %v690 = vpack.c.bf16 %v652, %v650
      %v691 = vpack.c.bf16 %v653, %v651
      %v692 = vpack.c.bf16 %v656, %v654
      %v693 = vpack.c.bf16 %v657, %v655
      %v694 = vpack.c.bf16 %v660, %v658
      %v695 = vpack.c.bf16 %v661, %v659
      %v696 = vpack.c.bf16 %v664, %v662
      %v697 = vpack.c.bf16 %v665, %v663
      %v698 = vld [vmem:[%s3] sm:$0xff]
      %v699 = vld [vmem:[%s3 + $0x8] sm:$0xff]
      %v700 = vld [vmem:[%s3 + $0x10] sm:$0xff]
      %v701 = vld [vmem:[%s3 + $0x18] sm:$0xff]
      %v702 = vld [vmem:[%s3 + $0x20] sm:$0xff]
      %v703 = vld [vmem:[%s3 + $0x28] sm:$0xff]
      %v704 = vld [vmem:[%s3 + $0x30] sm:$0xff]
      %v705 = vld [vmem:[%s3 + $0x38] sm:$0xff]
      %v706 = vld [vmem:[%s3 + $0x40] sm:$0xff]
      %v707 = vld [vmem:[%s3 + $0x48] sm:$0xff]
      %v708 = vld [vmem:[%s3 + $0x50] sm:$0xff]
      %v709 = vld [vmem:[%s3 + $0x58] sm:$0xff]
      %v710 = vld [vmem:[%s3 + $0x60] sm:$0xff]
      %v711 = vld [vmem:[%s3 + $0x68] sm:$0xff]
      %v712 = vld [vmem:[%s3 + $0x70] sm:$0xff]
      %v713 = vld [vmem:[%s3 + $0x78] sm:$0xff]
      %v714 = vld [vmem:[%s3 + $0x80] sm:$0xff]
      %v715 = vld [vmem:[%s3 + $0x88] sm:$0xff]
      %v716 = vld [vmem:[%s3 + $0x90] sm:$0xff]
      %v717 = vld [vmem:[%s3 + $0x98] sm:$0xff]
      %v718 = vld [vmem:[%s3 + $0xa0] sm:$0xff]
      %v719 = vld [vmem:[%s3 + $0xa8] sm:$0xff]
      %v720 = vld [vmem:[%s3 + $0xb0] sm:$0xff]
      %v721 = vld [vmem:[%s3 + $0xb8] sm:$0xff]
      %v722 = vld [vmem:[%s3 + $0xc0] sm:$0xff]
      %v723 = vld [vmem:[%s3 + $0xc8] sm:$0xff]
      %v724 = vld [vmem:[%s3 + $0xd0] sm:$0xff]
      %v725 = vld [vmem:[%s3 + $0xd8] sm:$0xff]
      %v726 = vld [vmem:[%s3 + $0xe0] sm:$0xff]
      %v727 = vld [vmem:[%s3 + $0xe8] sm:$0xff]
      %v728 = vld [vmem:[%s3 + $0xf0] sm:$0xff]
      %v729 = vld [vmem:[%s3 + $0xf8] sm:$0xff]
      %s730 = scalar_lea.vmem %s4, 1
      %v731 = vld [vmem:[%s730] ss:$8 sm:$0x3]
      %v733 = vlaneseq
      %v734 = vshrl.u32 %v733, 7
      %v735 = vsub.s32 0, %v734
      %v736 = vrot.slane %v731, %v735
      %v737 = vlaneseq
      %v738 = vshrl.u32 %v737, 7
      %v739 = vsub.s32 1, %v738
      %v740 = vrot.slane %v731, %v739
      %v775 = vunpack.c.l.b16 %v698
      %v776 = vunpack.c.h.b16 %v698
      %v777 = vunpack.c.l.b16 %v699
      %v778 = vunpack.c.h.b16 %v699
      %v779 = vunpack.c.l.b16 %v700
      %v780 = vunpack.c.h.b16 %v700
      %v781 = vunpack.c.l.b16 %v701
      %v782 = vunpack.c.h.b16 %v701
      %v783 = vunpack.c.l.b16 %v702
      %v784 = vunpack.c.h.b16 %v702
      %v785 = vunpack.c.l.b16 %v703
      %v786 = vunpack.c.h.b16 %v703
      %v787 = vunpack.c.l.b16 %v704
      %v788 = vunpack.c.h.b16 %v704
      %v789 = vunpack.c.l.b16 %v705
      %v790 = vunpack.c.h.b16 %v705
      %v791 = vunpack.c.l.b16 %v706
      %v792 = vunpack.c.h.b16 %v706
      %v793 = vunpack.c.l.b16 %v707
      %v794 = vunpack.c.h.b16 %v707
      %v795 = vunpack.c.l.b16 %v708
      %v796 = vunpack.c.h.b16 %v708
      %v797 = vunpack.c.l.b16 %v709
      %v798 = vunpack.c.h.b16 %v709
      %v799 = vunpack.c.l.b16 %v710
      %v800 = vunpack.c.h.b16 %v710
      %v801 = vunpack.c.l.b16 %v711
      %v802 = vunpack.c.h.b16 %v711
      %v803 = vunpack.c.l.b16 %v712
      %v804 = vunpack.c.h.b16 %v712
      %v805 = vunpack.c.l.b16 %v713
      %v806 = vunpack.c.h.b16 %v713
      %v807 = vunpack.c.l.b16 %v714
      %v808 = vunpack.c.h.b16 %v714
      %v809 = vunpack.c.l.b16 %v715
      %v810 = vunpack.c.h.b16 %v715
      %v811 = vunpack.c.l.b16 %v716
      %v812 = vunpack.c.h.b16 %v716
      %v813 = vunpack.c.l.b16 %v717
      %v814 = vunpack.c.h.b16 %v717
      %v815 = vunpack.c.l.b16 %v718
      %v816 = vunpack.c.h.b16 %v718
      %v817 = vunpack.c.l.b16 %v719
      %v818 = vunpack.c.h.b16 %v719
      %v819 = vunpack.c.l.b16 %v720
      %v820 = vunpack.c.h.b16 %v720
      %v821 = vunpack.c.l.b16 %v721
      %v822 = vunpack.c.h.b16 %v721
      %v823 = vunpack.c.l.b16 %v722
      %v824 = vunpack.c.h.b16 %v722
      %v825 = vunpack.c.l.b16 %v723
      %v826 = vunpack.c.h.b16 %v723
      %v827 = vunpack.c.l.b16 %v724
      %v828 = vunpack.c.h.b16 %v724
      %v829 = vunpack.c.l.b16 %v725
      %v830 = vunpack.c.h.b16 %v725
      %v831 = vunpack.c.l.b16 %v726
      %v832 = vunpack.c.h.b16 %v726
      %v833 = vunpack.c.l.b16 %v727
      %v834 = vunpack.c.h.b16 %v727
      %v835 = vunpack.c.l.b16 %v728
      %v836 = vunpack.c.h.b16 %v728
      %v837 = vunpack.c.l.b16 %v729
      %v838 = vunpack.c.h.b16 %v729
      %v839 = vpack.c.b16 %v777, %v775
      %v840 = vpack.c.b16 %v778, %v776
      %v841 = vpack.c.b16 %v781, %v779
      %v842 = vpack.c.b16 %v782, %v780
      %v843 = vpack.c.b16 %v785, %v783
      %v844 = vpack.c.b16 %v786, %v784
      %v845 = vpack.c.b16 %v789, %v787
      %v846 = vpack.c.b16 %v790, %v788
      %v847 = vpack.c.b16 %v793, %v791
      %v848 = vpack.c.b16 %v794, %v792
      %v849 = vpack.c.b16 %v797, %v795
      %v850 = vpack.c.b16 %v798, %v796
      %v851 = vpack.c.b16 %v801, %v799
      %v852 = vpack.c.b16 %v802, %v800
      %v853 = vpack.c.b16 %v805, %v803
      %v854 = vpack.c.b16 %v806, %v804
      %v855 = vpack.c.b16 %v809, %v807
      %v856 = vpack.c.b16 %v810, %v808
      %v857 = vpack.c.b16 %v813, %v811
      %v858 = vpack.c.b16 %v814, %v812
      %v859 = vpack.c.b16 %v817, %v815
      %v860 = vpack.c.b16 %v818, %v816
      %v861 = vpack.c.b16 %v821, %v819
      %v862 = vpack.c.b16 %v822, %v820
      %v863 = vpack.c.b16 %v825, %v823
      %v864 = vpack.c.b16 %v826, %v824
      %v865 = vpack.c.b16 %v829, %v827
      %v866 = vpack.c.b16 %v830, %v828
      %v867 = vpack.c.b16 %v833, %v831
      %v868 = vpack.c.b16 %v834, %v832
      %v869 = vpack.c.b16 %v837, %v835
      %v870 = vpack.c.b16 %v838, %v836
      %903 = vmatprep.subr.bf16.mxu0 %v840
      %904 = vmatpush1.bf16.msra.mxu0 %v839
      %905 = vmatprep.subr.bf16.mxu0 %v842
      %906 = vmatpush1.bf16.msra.mxu0 %v841
      %907 = vmatprep.subr.bf16.mxu0 %v844
      %908 = vmatpush1.bf16.msra.mxu0 %v843
      %909 = vmatprep.subr.bf16.mxu0 %v846
      %910 = vmatpush1.bf16.msra.mxu0 %v845
      %911 = vmatprep.subr.bf16.mxu0 %v848
      %912 = vmatpush1.bf16.msra.mxu0 %v847
      %913 = vmatprep.subr.bf16.mxu0 %v850
      %914 = vmatpush1.bf16.msra.mxu0 %v849
      %915 = vmatprep.subr.bf16.mxu0 %v852
      %916 = vmatpush1.bf16.msra.mxu0 %v851
      %917 = vmatprep.subr.bf16.mxu0 %v854
      %918 = vmatpush1.bf16.msra.mxu0 %v853
      %919 = vmatprep.subr.bf16.mxu0 %v856
      %920 = vmatpush1.bf16.msra.mxu0 %v855
      %921 = vmatprep.subr.bf16.mxu0 %v858
      %922 = vmatpush1.bf16.msra.mxu0 %v857
      %923 = vmatprep.subr.bf16.mxu0 %v860
      %924 = vmatpush1.bf16.msra.mxu0 %v859
      %925 = vmatprep.subr.bf16.mxu0 %v862
      %926 = vmatpush1.bf16.msra.mxu0 %v861
      %927 = vmatprep.subr.bf16.mxu0 %v864
      %928 = vmatpush1.bf16.msra.mxu0 %v863
      %929 = vmatprep.subr.bf16.mxu0 %v866
      %930 = vmatpush1.bf16.msra.mxu0 %v865
      %931 = vmatprep.subr.bf16.mxu0 %v868
      %932 = vmatpush1.bf16.msra.mxu0 %v867
      %933 = vmatprep.subr.bf16.mxu0 %v870
      %934 = vmatpush1.bf16.msra.mxu0 %v869
      %935 = vmatprep.mubr.bf16.mxu0 %v667
      %936 = vmatmul.mubr.bf16.gmra.mrb[0].mxu0 %v666
      %v937 = vpop.f32.mrb[0].mxu0
      %v938 = vadd.f32 %v736, %v937
      %v939 = vpop.f32.mrb[0].mxu0
      %v940 = vadd.f32 %v740, %v939
      %v941 = vpop.f32.mrb[0].mxu0
      %v942 = vadd.f32 %v736, %v941
      %v943 = vpop.f32.mrb[0].mxu0
      %v944 = vadd.f32 %v740, %v943
      %945 = vmatprep.mubr.bf16.mxu0 %v669
      %946 = vmatmul.mubr.bf16.gmra.mrb[0].mxu0 %v668
      %v947 = vpop.f32.mrb[0].mxu0
      %v948 = vadd.f32 %v736, %v947
      %v949 = vpop.f32.mrb[0].mxu0
      %v950 = vadd.f32 %v740, %v949
      %v951 = vpop.f32.mrb[0].mxu0
      %v952 = vadd.f32 %v736, %v951
      %v953 = vpop.f32.mrb[0].mxu0
      %v954 = vadd.f32 %v740, %v953
      %955 = vmatprep.mubr.bf16.mxu0 %v671
      %956 = vmatmul.mubr.bf16.gmra.mrb[0].mxu0 %v670
      %v957 = vpop.f32.mrb[0].mxu0
      %v958 = vadd.f32 %v736, %v957
      %v959 = vpop.f32.mrb[0].mxu0
      %v960 = vadd.f32 %v740, %v959
      %v961 = vpop.f32.mrb[0].mxu0
      %v962 = vadd.f32 %v736, %v961
      %v963 = vpop.f32.mrb[0].mxu0
      %v964 = vadd.f32 %v740, %v963
      %965 = vmatprep.mubr.bf16.mxu0 %v673
      %966 = vmatmul.mubr.bf16.gmra.mrb[0].mxu0 %v672
      %v967 = vpop.f32.mrb[0].mxu0
      %v968 = vadd.f32 %v736, %v967
      %v969 = vpop.f32.mrb[0].mxu0
      %v970 = vadd.f32 %v740, %v969
      %v971 = vpop.f32.mrb[0].mxu0
      %v972 = vadd.f32 %v736, %v971
      %v973 = vpop.f32.mrb[0].mxu0
      %v974 = vadd.f32 %v740, %v973
      %975 = vmatprep.mubr.bf16.mxu0 %v675
      %976 = vmatmul.mubr.bf16.gmra.mrb[0].mxu0 %v674
      %v977 = vpop.f32.mrb[0].mxu0
      %v978 = vadd.f32 %v736, %v977
      %v979 = vpop.f32.mrb[0].mxu0
      %v980 = vadd.f32 %v740, %v979
      %v981 = vpop.f32.mrb[0].mxu0
      %v982 = vadd.f32 %v736, %v981
      %v983 = vpop.f32.mrb[0].mxu0
      %v984 = vadd.f32 %v740, %v983
      %985 = vmatprep.mubr.bf16.mxu0 %v677
      %986 = vmatmul.mubr.bf16.gmra.mrb[0].mxu0 %v676
      %v987 = vpop.f32.mrb[0].mxu0
      %v988 = vadd.f32 %v736, %v987
      %v989 = vpop.f32.mrb[0].mxu0
      %v990 = vadd.f32 %v740, %v989
      %v991 = vpop.f32.mrb[0].mxu0
      %v992 = vadd.f32 %v736, %v991
      %v993 = vpop.f32.mrb[0].mxu0
      %v994 = vadd.f32 %v740, %v993
      %995 = vmatprep.mubr.bf16.mxu0 %v679
      %996 = vmatmul.mubr.bf16.gmra.mrb[0].mxu0 %v678
      %v997 = vpop.f32.mrb[0].mxu0
      %v998 = vadd.f32 %v736, %v997
      %v999 = vpop.f32.mrb[0].mxu0
      %v1000 = vadd.f32 %v740, %v999
      %v1001 = vpop.f32.mrb[0].mxu0
      %v1002 = vadd.f32 %v736, %v1001
      %v1003 = vpop.f32.mrb[0].mxu0
      %v1004 = vadd.f32 %v740, %v1003
      %1005 = vmatprep.mubr.bf16.mxu0 %v681
      %1006 = vmatmul.mubr.bf16.gmra.mrb[0].mxu0 %v680
      %v1007 = vpop.f32.mrb[0].mxu0
      %v1008 = vadd.f32 %v736, %v1007
      %v1009 = vpop.f32.mrb[0].mxu0
      %v1010 = vadd.f32 %v740, %v1009
      %v1011 = vpop.f32.mrb[0].mxu0
      %v1012 = vadd.f32 %v736, %v1011
      %v1013 = vpop.f32.mrb[0].mxu0
      %v1014 = vadd.f32 %v740, %v1013
      %1015 = vmatprep.mubr.bf16.mxu0 %v683
      %1016 = vmatmul.mubr.bf16.gmra.mrb[0].mxu0 %v682
      %v1017 = vpop.f32.mrb[0].mxu0
      %v1018 = vadd.f32 %v736, %v1017
      %v1019 = vpop.f32.mrb[0].mxu0
      %v1020 = vadd.f32 %v740, %v1019
      %v1021 = vpop.f32.mrb[0].mxu0
      %v1022 = vadd.f32 %v736, %v1021
      %v1023 = vpop.f32.mrb[0].mxu0
      %v1024 = vadd.f32 %v740, %v1023
      %1025 = vmatprep.mubr.bf16.mxu0 %v685
      %1026 = vmatmul.mubr.bf16.gmra.mrb[0].mxu0 %v684
      %v1027 = vpop.f32.mrb[0].mxu0
      %v1028 = vadd.f32 %v736, %v1027
      %v1029 = vpop.f32.mrb[0].mxu0
      %v1030 = vadd.f32 %v740, %v1029
      %v1031 = vpop.f32.mrb[0].mxu0
      %v1032 = vadd.f32 %v736, %v1031
      %v1033 = vpop.f32.mrb[0].mxu0
      %v1034 = vadd.f32 %v740, %v1033
      %1035 = vmatprep.mubr.bf16.mxu0 %v687
      %1036 = vmatmul.mubr.bf16.gmra.mrb[0].mxu0 %v686
      %v1037 = vpop.f32.mrb[0].mxu0
      %v1038 = vadd.f32 %v736, %v1037
      %v1039 = vpop.f32.mrb[0].mxu0
      %v1040 = vadd.f32 %v740, %v1039
      %v1041 = vpop.f32.mrb[0].mxu0
      %v1042 = vadd.f32 %v736, %v1041
      %v1043 = vpop.f32.mrb[0].mxu0
      %v1044 = vadd.f32 %v740, %v1043
      %1045 = vmatprep.mubr.bf16.mxu0 %v689
      %1046 = vmatmul.mubr.bf16.gmra.mrb[0].mxu0 %v688
      %v1047 = vpop.f32.mrb[0].mxu0
      %v1048 = vadd.f32 %v736, %v1047
      %v1049 = vpop.f32.mrb[0].mxu0
      %v1050 = vadd.f32 %v740, %v1049
      %v1051 = vpop.f32.mrb[0].mxu0
      %v1052 = vadd.f32 %v736, %v1051
      %v1053 = vpop.f32.mrb[0].mxu0
      %v1054 = vadd.f32 %v740, %v1053
      %1055 = vmatprep.mubr.bf16.mxu0 %v691
      %1056 = vmatmul.mubr.bf16.gmra.mrb[0].mxu0 %v690
      %v1057 = vpop.f32.mrb[0].mxu0
      %v1058 = vadd.f32 %v736, %v1057
      %v1059 = vpop.f32.mrb[0].mxu0
      %v1060 = vadd.f32 %v740, %v1059
      %v1061 = vpop.f32.mrb[0].mxu0
      %v1062 = vadd.f32 %v736, %v1061
      %v1063 = vpop.f32.mrb[0].mxu0
      %v1064 = vadd.f32 %v740, %v1063
      %1065 = vmatprep.mubr.bf16.mxu0 %v693
      %1066 = vmatmul.mubr.bf16.gmra.mrb[0].mxu0 %v692
      %v1067 = vpop.f32.mrb[0].mxu0
      %v1068 = vadd.f32 %v736, %v1067
      %v1069 = vpop.f32.mrb[0].mxu0
      %v1070 = vadd.f32 %v740, %v1069
      %v1071 = vpop.f32.mrb[0].mxu0
      %v1072 = vadd.f32 %v736, %v1071
      %v1073 = vpop.f32.mrb[0].mxu0
      %v1074 = vadd.f32 %v740, %v1073
      %1075 = vmatprep.mubr.bf16.mxu0 %v695
      %1076 = vmatmul.mubr.bf16.gmra.mrb[0].mxu0 %v694
      %v1077 = vpop.f32.mrb[0].mxu0
      %v1078 = vadd.f32 %v736, %v1077
      %v1079 = vpop.f32.mrb[0].mxu0
      %v1080 = vadd.f32 %v740, %v1079
      %v1081 = vpop.f32.mrb[0].mxu0
      %v1082 = vadd.f32 %v736, %v1081
      %v1083 = vpop.f32.mrb[0].mxu0
      %v1084 = vadd.f32 %v740, %v1083
      %1085 = vmatprep.mubr.bf16.mxu0 %v697
      %1086 = vmatmul.mubr.bf16.gmra.mrb[0].mxu0 %v696
      %v1087 = vpop.f32.mrb[0].mxu0
      %v1088 = vadd.f32 %v736, %v1087
      %v1089 = vpop.f32.mrb[0].mxu0
      %v1090 = vadd.f32 %v740, %v1089
      %v1091 = vpop.f32.mrb[0].mxu0
      %v1092 = vadd.f32 %v736, %v1091
      %v1093 = vpop.f32.mrb[0].mxu0
      %v1094 = vadd.f32 %v740, %v1093
      %1095 = vdwg.mxu0
      %v1096 = vmax.f32 %v938, 0.0
      %v1097 = vmax.f32 %v940, 0.0
      %v1098 = vmax.f32 %v942, 0.0
      %v1099 = vmax.f32 %v944, 0.0
      %v1100 = vmax.f32 %v948, 0.0
      %v1101 = vmax.f32 %v950, 0.0
      %v1102 = vmax.f32 %v952, 0.0
      %v1103 = vmax.f32 %v954, 0.0
      %v1104 = vmax.f32 %v958, 0.0
      %v1105 = vmax.f32 %v960, 0.0
      %v1106 = vmax.f32 %v962, 0.0
      %v1107 = vmax.f32 %v964, 0.0
      %v1108 = vmax.f32 %v968, 0.0
      %v1109 = vmax.f32 %v970, 0.0
      %v1110 = vmax.f32 %v972, 0.0
      %v1111 = vmax.f32 %v974, 0.0
      %v1112 = vmax.f32 %v978, 0.0
      %v1113 = vmax.f32 %v980, 0.0
      %v1114 = vmax.f32 %v982, 0.0
      %v1115 = vmax.f32 %v984, 0.0
      %v1116 = vmax.f32 %v988, 0.0
      %v1117 = vmax.f32 %v990, 0.0
      %v1118 = vmax.f32 %v992, 0.0
      %v1119 = vmax.f32 %v994, 0.0
      %v1120 = vmax.f32 %v998, 0.0
      %v1121 = vmax.f32 %v1000, 0.0
      %v1122 = vmax.f32 %v1002, 0.0
      %v1123 = vmax.f32 %v1004, 0.0
      %v1124 = vmax.f32 %v1008, 0.0
      %v1125 = vmax.f32 %v1010, 0.0
      %v1126 = vmax.f32 %v1012, 0.0
      %v1127 = vmax.f32 %v1014, 0.0
      %v1128 = vmax.f32 %v1018, 0.0
      %v1129 = vmax.f32 %v1020, 0.0
      %v1130 = vmax.f32 %v1022, 0.0
      %v1131 = vmax.f32 %v1024, 0.0
      %v1132 = vmax.f32 %v1028, 0.0
      %v1133 = vmax.f32 %v1030, 0.0
      %v1134 = vmax.f32 %v1032, 0.0
      %v1135 = vmax.f32 %v1034, 0.0
      %v1136 = vmax.f32 %v1038, 0.0
      %v1137 = vmax.f32 %v1040, 0.0
      %v1138 = vmax.f32 %v1042, 0.0
      %v1139 = vmax.f32 %v1044, 0.0
      %v1140 = vmax.f32 %v1048, 0.0
      %v1141 = vmax.f32 %v1050, 0.0
      %v1142 = vmax.f32 %v1052, 0.0
      %v1143 = vmax.f32 %v1054, 0.0
      %v1144 = vmax.f32 %v1058, 0.0
      %v1145 = vmax.f32 %v1060, 0.0
      %v1146 = vmax.f32 %v1062, 0.0
      %v1147 = vmax.f32 %v1064, 0.0
      %v1148 = vmax.f32 %v1068, 0.0
      %v1149 = vmax.f32 %v1070, 0.0
      %v1150 = vmax.f32 %v1072, 0.0
      %v1151 = vmax.f32 %v1074, 0.0
      %v1152 = vmax.f32 %v1078, 0.0
      %v1153 = vmax.f32 %v1080, 0.0
      %v1154 = vmax.f32 %v1082, 0.0
      %v1155 = vmax.f32 %v1084, 0.0
      %v1156 = vmax.f32 %v1088, 0.0
      %v1157 = vmax.f32 %v1090, 0.0
      %v1158 = vmax.f32 %v1092, 0.0
      %v1159 = vmax.f32 %v1094, 0.0
      %v1160 = vpack.c.bf16 %v1098, %v1096
      %v1161 = vpack.c.bf16 %v1099, %v1097
      %v1162 = vpack.c.bf16 %v1102, %v1100
      %v1163 = vpack.c.bf16 %v1103, %v1101
      %v1164 = vpack.c.bf16 %v1106, %v1104
      %v1165 = vpack.c.bf16 %v1107, %v1105
      %v1166 = vpack.c.bf16 %v1110, %v1108
      %v1167 = vpack.c.bf16 %v1111, %v1109
      %v1168 = vpack.c.bf16 %v1114, %v1112
      %v1169 = vpack.c.bf16 %v1115, %v1113
      %v1170 = vpack.c.bf16 %v1118, %v1116
      %v1171 = vpack.c.bf16 %v1119, %v1117
      %v1172 = vpack.c.bf16 %v1122, %v1120
      %v1173 = vpack.c.bf16 %v1123, %v1121
      %v1174 = vpack.c.bf16 %v1126, %v1124
      %v1175 = vpack.c.bf16 %v1127, %v1125
      %v1176 = vpack.c.bf16 %v1130, %v1128
      %v1177 = vpack.c.bf16 %v1131, %v1129
      %v1178 = vpack.c.bf16 %v1134, %v1132
      %v1179 = vpack.c.bf16 %v1135, %v1133
      %v1180 = vpack.c.bf16 %v1138, %v1136
      %v1181 = vpack.c.bf16 %v1139, %v1137
      %v1182 = vpack.c.bf16 %v1142, %v1140
      %v1183 = vpack.c.bf16 %v1143, %v1141
      %v1184 = vpack.c.bf16 %v1146, %v1144
      %v1185 = vpack.c.bf16 %v1147, %v1145
      %v1186 = vpack.c.bf16 %v1150, %v1148
      %v1187 = vpack.c.bf16 %v1151, %v1149
      %v1188 = vpack.c.bf16 %v1154, %v1152
      %v1189 = vpack.c.bf16 %v1155, %v1153
      %v1190 = vpack.c.bf16 %v1158, %v1156
      %v1191 = vpack.c.bf16 %v1159, %v1157
      %s1192 = scalar_lea.vmem %s3, 256
      %v1193 = vld [vmem:[%s1192] sm:$0xff]
      %v1194 = vld [vmem:[%s1192 + $0x8] sm:$0xff]
      %v1195 = vld [vmem:[%s1192 + $0x10] sm:$0xff]
      %v1196 = vld [vmem:[%s1192 + $0x18] sm:$0xff]
      %v1197 = vld [vmem:[%s1192 + $0x20] sm:$0xff]
      %v1198 = vld [vmem:[%s1192 + $0x28] sm:$0xff]
      %v1199 = vld [vmem:[%s1192 + $0x30] sm:$0xff]
      %v1200 = vld [vmem:[%s1192 + $0x38] sm:$0xff]
      %v1201 = vld [vmem:[%s1192 + $0x40] sm:$0xff]
      %v1202 = vld [vmem:[%s1192 + $0x48] sm:$0xff]
      %v1203 = vld [vmem:[%s1192 + $0x50] sm:$0xff]
      %v1204 = vld [vmem:[%s1192 + $0x58] sm:$0xff]
      %v1205 = vld [vmem:[%s1192 + $0x60] sm:$0xff]
      %v1206 = vld [vmem:[%s1192 + $0x68] sm:$0xff]
      %v1207 = vld [vmem:[%s1192 + $0x70] sm:$0xff]
      %v1208 = vld [vmem:[%s1192 + $0x78] sm:$0xff]
      %v1209 = vld [vmem:[%s1192 + $0x80] sm:$0xff]
      %v1210 = vld [vmem:[%s1192 + $0x88] sm:$0xff]
      %v1211 = vld [vmem:[%s1192 + $0x90] sm:$0xff]
      %v1212 = vld [vmem:[%s1192 + $0x98] sm:$0xff]
      %v1213 = vld [vmem:[%s1192 + $0xa0] sm:$0xff]
      %v1214 = vld [vmem:[%s1192 + $0xa8] sm:$0xff]
      %v1215 = vld [vmem:[%s1192 + $0xb0] sm:$0xff]
      %v1216 = vld [vmem:[%s1192 + $0xb8] sm:$0xff]
      %v1217 = vld [vmem:[%s1192 + $0xc0] sm:$0xff]
      %v1218 = vld [vmem:[%s1192 + $0xc8] sm:$0xff]
      %v1219 = vld [vmem:[%s1192 + $0xd0] sm:$0xff]
      %v1220 = vld [vmem:[%s1192 + $0xd8] sm:$0xff]
      %v1221 = vld [vmem:[%s1192 + $0xe0] sm:$0xff]
      %v1222 = vld [vmem:[%s1192 + $0xe8] sm:$0xff]
      %v1223 = vld [vmem:[%s1192 + $0xf0] sm:$0xff]
      %v1224 = vld [vmem:[%s1192 + $0xf8] sm:$0xff]
      %s1225 = scalar_lea.vmem %s4, 2
      %v1226 = vld [vmem:[%s1225] ss:$8 sm:$0x3]
      %v1228 = vlaneseq
      %v1229 = vshrl.u32 %v1228, 7
      %v1230 = vsub.s32 0, %v1229
      %v1231 = vrot.slane %v1226, %v1230
      %v1232 = vlaneseq
      %v1233 = vshrl.u32 %v1232, 7
      %v1234 = vsub.s32 1, %v1233
      %v1235 = vrot.slane %v1226, %v1234
      %v1270 = vunpack.c.l.b16 %v1193
      %v1271 = vunpack.c.h.b16 %v1193
      %v1272 = vunpack.c.l.b16 %v1194
      %v1273 = vunpack.c.h.b16 %v1194
      %v1274 = vunpack.c.l.b16 %v1195
      %v1275 = vunpack.c.h.b16 %v1195
      %v1276 = vunpack.c.l.b16 %v1196
      %v1277 = vunpack.c.h.b16 %v1196
      %v1278 = vunpack.c.l.b16 %v1197
      %v1279 = vunpack.c.h.b16 %v1197
      %v1280 = vunpack.c.l.b16 %v1198
      %v1281 = vunpack.c.h.b16 %v1198
      %v1282 = vunpack.c.l.b16 %v1199
      %v1283 = vunpack.c.h.b16 %v1199
      %v1284 = vunpack.c.l.b16 %v1200
      %v1285 = vunpack.c.h.b16 %v1200
      %v1286 = vunpack.c.l.b16 %v1201
      %v1287 = vunpack.c.h.b16 %v1201
      %v1288 = vunpack.c.l.b16 %v1202
      %v1289 = vunpack.c.h.b16 %v1202
      %v1290 = vunpack.c.l.b16 %v1203
      %v1291 = vunpack.c.h.b16 %v1203
      %v1292 = vunpack.c.l.b16 %v1204
      %v1293 = vunpack.c.h.b16 %v1204
      %v1294 = vunpack.c.l.b16 %v1205
      %v1295 = vunpack.c.h.b16 %v1205
      %v1296 = vunpack.c.l.b16 %v1206
      %v1297 = vunpack.c.h.b16 %v1206
      %v1298 = vunpack.c.l.b16 %v1207
      %v1299 = vunpack.c.h.b16 %v1207
      %v1300 = vunpack.c.l.b16 %v1208
      %v1301 = vunpack.c.h.b16 %v1208
      %v1302 = vunpack.c.l.b16 %v1209
      %v1303 = vunpack.c.h.b16 %v1209
      %v1304 = vunpack.c.l.b16 %v1210
      %v1305 = vunpack.c.h.b16 %v1210
      %v1306 = vunpack.c.l.b16 %v1211
      %v1307 = vunpack.c.h.b16 %v1211
      %v1308 = vunpack.c.l.b16 %v1212
      %v1309 = vunpack.c.h.b16 %v1212
      %v1310 = vunpack.c.l.b16 %v1213
      %v1311 = vunpack.c.h.b16 %v1213
      %v1312 = vunpack.c.l.b16 %v1214
      %v1313 = vunpack.c.h.b16 %v1214
      %v1314 = vunpack.c.l.b16 %v1215
      %v1315 = vunpack.c.h.b16 %v1215
      %v1316 = vunpack.c.l.b16 %v1216
      %v1317 = vunpack.c.h.b16 %v1216
      %v1318 = vunpack.c.l.b16 %v1217
      %v1319 = vunpack.c.h.b16 %v1217
      %v1320 = vunpack.c.l.b16 %v1218
      %v1321 = vunpack.c.h.b16 %v1218
      %v1322 = vunpack.c.l.b16 %v1219
      %v1323 = vunpack.c.h.b16 %v1219
      %v1324 = vunpack.c.l.b16 %v1220
      %v1325 = vunpack.c.h.b16 %v1220
      %v1326 = vunpack.c.l.b16 %v1221
      %v1327 = vunpack.c.h.b16 %v1221
      %v1328 = vunpack.c.l.b16 %v1222
      %v1329 = vunpack.c.h.b16 %v1222
      %v1330 = vunpack.c.l.b16 %v1223
      %v1331 = vunpack.c.h.b16 %v1223
      %v1332 = vunpack.c.l.b16 %v1224
      %v1333 = vunpack.c.h.b16 %v1224
      %v1334 = vpack.c.b16 %v1272, %v1270
      %v1335 = vpack.c.b16 %v1273, %v1271
      %v1336 = vpack.c.b16 %v1276, %v1274
      %v1337 = vpack.c.b16 %v1277, %v1275
      %v1338 = vpack.c.b16 %v1280, %v1278
      %v1339 = vpack.c.b16 %v1281, %v1279
      %v1340 = vpack.c.b16 %v1284, %v1282
      %v1341 = vpack.c.b16 %v1285, %v1283
      %v1342 = vpack.c.b16 %v1288, %v1286
      %v1343 = vpack.c.b16 %v1289, %v1287
      %v1344 = vpack.c.b16 %v1292, %v1290
      %v1345 = vpack.c.b16 %v1293, %v1291
      %v1346 = vpack.c.b16 %v1296, %v1294
      %v1347 = vpack.c.b16 %v1297, %v1295
      %v1348 = vpack.c.b16 %v1300, %v1298
      %v1349 = vpack.c.b16 %v1301, %v1299
      %v1350 = vpack.c.b16 %v1304, %v1302
      %v1351 = vpack.c.b16 %v1305, %v1303
      %v1352 = vpack.c.b16 %v1308, %v1306
      %v1353 = vpack.c.b16 %v1309, %v1307
      %v1354 = vpack.c.b16 %v1312, %v1310
      %v1355 = vpack.c.b16 %v1313, %v1311
      %v1356 = vpack.c.b16 %v1316, %v1314
      %v1357 = vpack.c.b16 %v1317, %v1315
      %v1358 = vpack.c.b16 %v1320, %v1318
      %v1359 = vpack.c.b16 %v1321, %v1319
      %v1360 = vpack.c.b16 %v1324, %v1322
      %v1361 = vpack.c.b16 %v1325, %v1323
      %v1362 = vpack.c.b16 %v1328, %v1326
      %v1363 = vpack.c.b16 %v1329, %v1327
      %v1364 = vpack.c.b16 %v1332, %v1330
      %v1365 = vpack.c.b16 %v1333, %v1331
      %1398 = vmatprep.subr.bf16.mxu0 %v1335
      %1399 = vmatpush1.bf16.msra.mxu0 %v1334
      %1400 = vmatprep.subr.bf16.mxu0 %v1337
      %1401 = vmatpush1.bf16.msra.mxu0 %v1336
      %1402 = vmatprep.subr.bf16.mxu0 %v1339
      %1403 = vmatpush1.bf16.msra.mxu0 %v1338
      %1404 = vmatprep.subr.bf16.mxu0 %v1341
      %1405 = vmatpush1.bf16.msra.mxu0 %v1340
      %1406 = vmatprep.subr.bf16.mxu0 %v1343
      %1407 = vmatpush1.bf16.msra.mxu0 %v1342
      %1408 = vmatprep.subr.bf16.mxu0 %v1345
      %1409 = vmatpush1.bf16.msra.mxu0 %v1344
      %1410 = vmatprep.subr.bf16.mxu0 %v1347
      %1411 = vmatpush1.bf16.msra.mxu0 %v1346
      %1412 = vmatprep.subr.bf16.mxu0 %v1349
      %1413 = vmatpush1.bf16.msra.mxu0 %v1348
      %1414 = vmatprep.subr.bf16.mxu0 %v1351
      %1415 = vmatpush1.bf16.msra.mxu0 %v1350
      %1416 = vmatprep.subr.bf16.mxu0 %v1353
      %1417 = vmatpush1.bf16.msra.mxu0 %v1352
      %1418 = vmatprep.subr.bf16.mxu0 %v1355
      %1419 = vmatpush1.bf16.msra.mxu0 %v1354
      %1420 = vmatprep.subr.bf16.mxu0 %v1357
      %1421 = vmatpush1.bf16.msra.mxu0 %v1356
      %1422 = vmatprep.subr.bf16.mxu0 %v1359
      %1423 = vmatpush1.bf16.msra.mxu0 %v1358
      %1424 = vmatprep.subr.bf16.mxu0 %v1361
      %1425 = vmatpush1.bf16.msra.mxu0 %v1360
      %1426 = vmatprep.subr.bf16.mxu0 %v1363
      %1427 = vmatpush1.bf16.msra.mxu0 %v1362
      %1428 = vmatprep.subr.bf16.mxu0 %v1365
      %1429 = vmatpush1.bf16.msra.mxu0 %v1364
      %1430 = vmatprep.mubr.bf16.mxu0 %v1161
      %1431 = vmatmul.mubr.bf16.gmra.mrb[0].mxu0 %v1160
      %v1432 = vpop.f32.mrb[0].mxu0
      %v1433 = vadd.f32 %v1231, %v1432
      %v1434 = vpop.f32.mrb[0].mxu0
      %v1435 = vadd.f32 %v1235, %v1434
      %v1436 = vpop.f32.mrb[0].mxu0
      %v1437 = vadd.f32 %v1231, %v1436
      %v1438 = vpop.f32.mrb[0].mxu0
      %v1439 = vadd.f32 %v1235, %v1438
      %1440 = vmatprep.mubr.bf16.mxu0 %v1163
      %1441 = vmatmul.mubr.bf16.gmra.mrb[0].mxu0 %v1162
      %v1442 = vpop.f32.mrb[0].mxu0
      %v1443 = vadd.f32 %v1231, %v1442
      %v1444 = vpop.f32.mrb[0].mxu0
      %v1445 = vadd.f32 %v1235, %v1444
      %v1446 = vpop.f32.mrb[0].mxu0
      %v1447 = vadd.f32 %v1231, %v1446
      %v1448 = vpop.f32.mrb[0].mxu0
      %v1449 = vadd.f32 %v1235, %v1448
      %1450 = vmatprep.mubr.bf16.mxu0 %v1165
      %1451 = vmatmul.mubr.bf16.gmra.mrb[0].mxu0 %v1164
      %v1452 = vpop.f32.mrb[0].mxu0
      %v1453 = vadd.f32 %v1231, %v1452
      %v1454 = vpop.f32.mrb[0].mxu0
      %v1455 = vadd.f32 %v1235, %v1454
      %v1456 = vpop.f32.mrb[0].mxu0
      %v1457 = vadd.f32 %v1231, %v1456
      %v1458 = vpop.f32.mrb[0].mxu0
      %v1459 = vadd.f32 %v1235, %v1458
      %1460 = vmatprep.mubr.bf16.mxu0 %v1167
      %1461 = vmatmul.mubr.bf16.gmra.mrb[0].mxu0 %v1166
      %v1462 = vpop.f32.mrb[0].mxu0
      %v1463 = vadd.f32 %v1231, %v1462
      %v1464 = vpop.f32.mrb[0].mxu0
      %v1465 = vadd.f32 %v1235, %v1464
      %v1466 = vpop.f32.mrb[0].mxu0
      %v1467 = vadd.f32 %v1231, %v1466
      %v1468 = vpop.f32.mrb[0].mxu0
      %v1469 = vadd.f32 %v1235, %v1468
      %1470 = vmatprep.mubr.bf16.mxu0 %v1169
      %1471 = vmatmul.mubr.bf16.gmra.mrb[0].mxu0 %v1168
      %v1472 = vpop.f32.mrb[0].mxu0
      %v1473 = vadd.f32 %v1231, %v1472
      %v1474 = vpop.f32.mrb[0].mxu0
      %v1475 = vadd.f32 %v1235, %v1474
      %v1476 = vpop.f32.mrb[0].mxu0
      %v1477 = vadd.f32 %v1231, %v1476
      %v1478 = vpop.f32.mrb[0].mxu0
      %v1479 = vadd.f32 %v1235, %v1478
      %1480 = vmatprep.mubr.bf16.mxu0 %v1171
      %1481 = vmatmul.mubr.bf16.gmra.mrb[0].mxu0 %v1170
      %v1482 = vpop.f32.mrb[0].mxu0
      %v1483 = vadd.f32 %v1231, %v1482
      %v1484 = vpop.f32.mrb[0].mxu0
      %v1485 = vadd.f32 %v1235, %v1484
      %v1486 = vpop.f32.mrb[0].mxu0
      %v1487 = vadd.f32 %v1231, %v1486
      %v1488 = vpop.f32.mrb[0].mxu0
      %v1489 = vadd.f32 %v1235, %v1488
      %1490 = vmatprep.mubr.bf16.mxu0 %v1173
      %1491 = vmatmul.mubr.bf16.gmra.mrb[0].mxu0 %v1172
      %v1492 = vpop.f32.mrb[0].mxu0
      %v1493 = vadd.f32 %v1231, %v1492
      %v1494 = vpop.f32.mrb[0].mxu0
      %v1495 = vadd.f32 %v1235, %v1494
      %v1496 = vpop.f32.mrb[0].mxu0
      %v1497 = vadd.f32 %v1231, %v1496
      %v1498 = vpop.f32.mrb[0].mxu0
      %v1499 = vadd.f32 %v1235, %v1498
      %1500 = vmatprep.mubr.bf16.mxu0 %v1175
      %1501 = vmatmul.mubr.bf16.gmra.mrb[0].mxu0 %v1174
      %v1502 = vpop.f32.mrb[0].mxu0
      %v1503 = vadd.f32 %v1231, %v1502
      %v1504 = vpop.f32.mrb[0].mxu0
      %v1505 = vadd.f32 %v1235, %v1504
      %v1506 = vpop.f32.mrb[0].mxu0
      %v1507 = vadd.f32 %v1231, %v1506
      %v1508 = vpop.f32.mrb[0].mxu0
      %v1509 = vadd.f32 %v1235, %v1508
      %1510 = vmatprep.mubr.bf16.mxu0 %v1177
      %1511 = vmatmul.mubr.bf16.gmra.mrb[0].mxu0 %v1176
      %v1512 = vpop.f32.mrb[0].mxu0
      %v1513 = vadd.f32 %v1231, %v1512
      %v1514 = vpop.f32.mrb[0].mxu0
      %v1515 = vadd.f32 %v1235, %v1514
      %v1516 = vpop.f32.mrb[0].mxu0
      %v1517 = vadd.f32 %v1231, %v1516
      %v1518 = vpop.f32.mrb[0].mxu0
      %v1519 = vadd.f32 %v1235, %v1518
      %1520 = vmatprep.mubr.bf16.mxu0 %v1179
      %1521 = vmatmul.mubr.bf16.gmra.mrb[0].mxu0 %v1178
      %v1522 = vpop.f32.mrb[0].mxu0
      %v1523 = vadd.f32 %v1231, %v1522
      %v1524 = vpop.f32.mrb[0].mxu0
      %v1525 = vadd.f32 %v1235, %v1524
      %v1526 = vpop.f32.mrb[0].mxu0
      %v1527 = vadd.f32 %v1231, %v1526
      %v1528 = vpop.f32.mrb[0].mxu0
      %v1529 = vadd.f32 %v1235, %v1528
      %1530 = vmatprep.mubr.bf16.mxu0 %v1181
      %1531 = vmatmul.mubr.bf16.gmra.mrb[0].mxu0 %v1180
      %v1532 = vpop.f32.mrb[0].mxu0
      %v1533 = vadd.f32 %v1231, %v1532
      %v1534 = vpop.f32.mrb[0].mxu0
      %v1535 = vadd.f32 %v1235, %v1534
      %v1536 = vpop.f32.mrb[0].mxu0
      %v1537 = vadd.f32 %v1231, %v1536
      %v1538 = vpop.f32.mrb[0].mxu0
      %v1539 = vadd.f32 %v1235, %v1538
      %1540 = vmatprep.mubr.bf16.mxu0 %v1183
      %1541 = vmatmul.mubr.bf16.gmra.mrb[0].mxu0 %v1182
      %v1542 = vpop.f32.mrb[0].mxu0
      %v1543 = vadd.f32 %v1231, %v1542
      %v1544 = vpop.f32.mrb[0].mxu0
      %v1545 = vadd.f32 %v1235, %v1544
      %v1546 = vpop.f32.mrb[0].mxu0
      %v1547 = vadd.f32 %v1231, %v1546
      %v1548 = vpop.f32.mrb[0].mxu0
      %v1549 = vadd.f32 %v1235, %v1548
      %1550 = vmatprep.mubr.bf16.mxu0 %v1185
      %1551 = vmatmul.mubr.bf16.gmra.mrb[0].mxu0 %v1184
      %v1552 = vpop.f32.mrb[0].mxu0
      %v1553 = vadd.f32 %v1231, %v1552
      %v1554 = vpop.f32.mrb[0].mxu0
      %v1555 = vadd.f32 %v1235, %v1554
      %v1556 = vpop.f32.mrb[0].mxu0
      %v1557 = vadd.f32 %v1231, %v1556
      %v1558 = vpop.f32.mrb[0].mxu0
      %v1559 = vadd.f32 %v1235, %v1558
      %1560 = vmatprep.mubr.bf16.mxu0 %v1187
      %1561 = vmatmul.mubr.bf16.gmra.mrb[0].mxu0 %v1186
      %v1562 = vpop.f32.mrb[0].mxu0
      %v1563 = vadd.f32 %v1231, %v1562
      %v1564 = vpop.f32.mrb[0].mxu0
      %v1565 = vadd.f32 %v1235, %v1564
      %v1566 = vpop.f32.mrb[0].mxu0
      %v1567 = vadd.f32 %v1231, %v1566
      %v1568 = vpop.f32.mrb[0].mxu0
      %v1569 = vadd.f32 %v1235, %v1568
      %1570 = vmatprep.mubr.bf16.mxu0 %v1189
      %1571 = vmatmul.mubr.bf16.gmra.mrb[0].mxu0 %v1188
      %v1572 = vpop.f32.mrb[0].mxu0
      %v1573 = vadd.f32 %v1231, %v1572
      %v1574 = vpop.f32.mrb[0].mxu0
      %v1575 = vadd.f32 %v1235, %v1574
      %v1576 = vpop.f32.mrb[0].mxu0
      %v1577 = vadd.f32 %v1231, %v1576
      %v1578 = vpop.f32.mrb[0].mxu0
      %v1579 = vadd.f32 %v1235, %v1578
      %1580 = vmatprep.mubr.bf16.mxu0 %v1191
      %1581 = vmatmul.mubr.bf16.gmra.mrb[0].mxu0 %v1190
      %v1582 = vpop.f32.mrb[0].mxu0
      %v1583 = vadd.f32 %v1231, %v1582
      %v1584 = vpop.f32.mrb[0].mxu0
      %v1585 = vadd.f32 %v1235, %v1584
      %v1586 = vpop.f32.mrb[0].mxu0
      %v1587 = vadd.f32 %v1231, %v1586
      %v1588 = vpop.f32.mrb[0].mxu0
      %v1589 = vadd.f32 %v1235, %v1588
      %1590 = vdwg.mxu0
      %v1591 = vmax.f32 %v1433, 0.0
      %v1592 = vmax.f32 %v1435, 0.0
      %v1593 = vmax.f32 %v1437, 0.0
      %v1594 = vmax.f32 %v1439, 0.0
      %v1595 = vmax.f32 %v1443, 0.0
      %v1596 = vmax.f32 %v1445, 0.0
      %v1597 = vmax.f32 %v1447, 0.0
      %v1598 = vmax.f32 %v1449, 0.0
      %v1599 = vmax.f32 %v1453, 0.0
      %v1600 = vmax.f32 %v1455, 0.0
      %v1601 = vmax.f32 %v1457, 0.0
      %v1602 = vmax.f32 %v1459, 0.0
      %v1603 = vmax.f32 %v1463, 0.0
      %v1604 = vmax.f32 %v1465, 0.0
      %v1605 = vmax.f32 %v1467, 0.0
      %v1606 = vmax.f32 %v1469, 0.0
      %v1607 = vmax.f32 %v1473, 0.0
      %v1608 = vmax.f32 %v1475, 0.0
      %v1609 = vmax.f32 %v1477, 0.0
      %v1610 = vmax.f32 %v1479, 0.0
      %v1611 = vmax.f32 %v1483, 0.0
      %v1612 = vmax.f32 %v1485, 0.0
      %v1613 = vmax.f32 %v1487, 0.0
      %v1614 = vmax.f32 %v1489, 0.0
      %v1615 = vmax.f32 %v1493, 0.0
      %v1616 = vmax.f32 %v1495, 0.0
      %v1617 = vmax.f32 %v1497, 0.0
      %v1618 = vmax.f32 %v1499, 0.0
      %v1619 = vmax.f32 %v1503, 0.0
      %v1620 = vmax.f32 %v1505, 0.0
      %v1621 = vmax.f32 %v1507, 0.0
      %v1622 = vmax.f32 %v1509, 0.0
      %v1623 = vmax.f32 %v1513, 0.0
      %v1624 = vmax.f32 %v1515, 0.0
      %v1625 = vmax.f32 %v1517, 0.0
      %v1626 = vmax.f32 %v1519, 0.0
      %v1627 = vmax.f32 %v1523, 0.0
      %v1628 = vmax.f32 %v1525, 0.0
      %v1629 = vmax.f32 %v1527, 0.0
      %v1630 = vmax.f32 %v1529, 0.0
      %v1631 = vmax.f32 %v1533, 0.0
      %v1632 = vmax.f32 %v1535, 0.0
      %v1633 = vmax.f32 %v1537, 0.0
      %v1634 = vmax.f32 %v1539, 0.0
      %v1635 = vmax.f32 %v1543, 0.0
      %v1636 = vmax.f32 %v1545, 0.0
      %v1637 = vmax.f32 %v1547, 0.0
      %v1638 = vmax.f32 %v1549, 0.0
      %v1639 = vmax.f32 %v1553, 0.0
      %v1640 = vmax.f32 %v1555, 0.0
      %v1641 = vmax.f32 %v1557, 0.0
      %v1642 = vmax.f32 %v1559, 0.0
      %v1643 = vmax.f32 %v1563, 0.0
      %v1644 = vmax.f32 %v1565, 0.0
      %v1645 = vmax.f32 %v1567, 0.0
      %v1646 = vmax.f32 %v1569, 0.0
      %v1647 = vmax.f32 %v1573, 0.0
      %v1648 = vmax.f32 %v1575, 0.0
      %v1649 = vmax.f32 %v1577, 0.0
      %v1650 = vmax.f32 %v1579, 0.0
      %v1651 = vmax.f32 %v1583, 0.0
      %v1652 = vmax.f32 %v1585, 0.0
      %v1653 = vmax.f32 %v1587, 0.0
      %v1654 = vmax.f32 %v1589, 0.0
      %v1655 = vpack.c.bf16 %v1593, %v1591
      %v1656 = vpack.c.bf16 %v1594, %v1592
      %v1657 = vpack.c.bf16 %v1597, %v1595
      %v1658 = vpack.c.bf16 %v1598, %v1596
      %v1659 = vpack.c.bf16 %v1601, %v1599
      %v1660 = vpack.c.bf16 %v1602, %v1600
      %v1661 = vpack.c.bf16 %v1605, %v1603
      %v1662 = vpack.c.bf16 %v1606, %v1604
      %v1663 = vpack.c.bf16 %v1609, %v1607
      %v1664 = vpack.c.bf16 %v1610, %v1608
      %v1665 = vpack.c.bf16 %v1613, %v1611
      %v1666 = vpack.c.bf16 %v1614, %v1612
      %v1667 = vpack.c.bf16 %v1617, %v1615
      %v1668 = vpack.c.bf16 %v1618, %v1616
      %v1669 = vpack.c.bf16 %v1621, %v1619
      %v1670 = vpack.c.bf16 %v1622, %v1620
      %v1671 = vpack.c.bf16 %v1625, %v1623
      %v1672 = vpack.c.bf16 %v1626, %v1624
      %v1673 = vpack.c.bf16 %v1629, %v1627
      %v1674 = vpack.c.bf16 %v1630, %v1628
      %v1675 = vpack.c.bf16 %v1633, %v1631
      %v1676 = vpack.c.bf16 %v1634, %v1632
      %v1677 = vpack.c.bf16 %v1637, %v1635
      %v1678 = vpack.c.bf16 %v1638, %v1636
      %v1679 = vpack.c.bf16 %v1641, %v1639
      %v1680 = vpack.c.bf16 %v1642, %v1640
      %v1681 = vpack.c.bf16 %v1645, %v1643
      %v1682 = vpack.c.bf16 %v1646, %v1644
      %v1683 = vpack.c.bf16 %v1649, %v1647
      %v1684 = vpack.c.bf16 %v1650, %v1648
      %v1685 = vpack.c.bf16 %v1653, %v1651
      %v1686 = vpack.c.bf16 %v1654, %v1652
      %s1687 = scalar_lea.vmem %s3, 512
      %v1688 = vld [vmem:[%s1687] sm:$0xff]
      %v1689 = vld [vmem:[%s1687 + $0x8] sm:$0xff]
      %v1690 = vld [vmem:[%s1687 + $0x10] sm:$0xff]
      %v1691 = vld [vmem:[%s1687 + $0x18] sm:$0xff]
      %v1692 = vld [vmem:[%s1687 + $0x20] sm:$0xff]
      %v1693 = vld [vmem:[%s1687 + $0x28] sm:$0xff]
      %v1694 = vld [vmem:[%s1687 + $0x30] sm:$0xff]
      %v1695 = vld [vmem:[%s1687 + $0x38] sm:$0xff]
      %v1696 = vld [vmem:[%s1687 + $0x40] sm:$0xff]
      %v1697 = vld [vmem:[%s1687 + $0x48] sm:$0xff]
      %v1698 = vld [vmem:[%s1687 + $0x50] sm:$0xff]
      %v1699 = vld [vmem:[%s1687 + $0x58] sm:$0xff]
      %v1700 = vld [vmem:[%s1687 + $0x60] sm:$0xff]
      %v1701 = vld [vmem:[%s1687 + $0x68] sm:$0xff]
      %v1702 = vld [vmem:[%s1687 + $0x70] sm:$0xff]
      %v1703 = vld [vmem:[%s1687 + $0x78] sm:$0xff]
      %v1704 = vld [vmem:[%s1687 + $0x80] sm:$0xff]
      %v1705 = vld [vmem:[%s1687 + $0x88] sm:$0xff]
      %v1706 = vld [vmem:[%s1687 + $0x90] sm:$0xff]
      %v1707 = vld [vmem:[%s1687 + $0x98] sm:$0xff]
      %v1708 = vld [vmem:[%s1687 + $0xa0] sm:$0xff]
      %v1709 = vld [vmem:[%s1687 + $0xa8] sm:$0xff]
      %v1710 = vld [vmem:[%s1687 + $0xb0] sm:$0xff]
      %v1711 = vld [vmem:[%s1687 + $0xb8] sm:$0xff]
      %v1712 = vld [vmem:[%s1687 + $0xc0] sm:$0xff]
      %v1713 = vld [vmem:[%s1687 + $0xc8] sm:$0xff]
      %v1714 = vld [vmem:[%s1687 + $0xd0] sm:$0xff]
      %v1715 = vld [vmem:[%s1687 + $0xd8] sm:$0xff]
      %v1716 = vld [vmem:[%s1687 + $0xe0] sm:$0xff]
      %v1717 = vld [vmem:[%s1687 + $0xe8] sm:$0xff]
      %v1718 = vld [vmem:[%s1687 + $0xf0] sm:$0xff]
      %v1719 = vld [vmem:[%s1687 + $0xf8] sm:$0xff]
      %s1720 = scalar_lea.vmem %s4, 3
      %v1721 = vld [vmem:[%s1720] ss:$8 sm:$0x3]
      %v1723 = vlaneseq
      %v1724 = vshrl.u32 %v1723, 7
      %v1725 = vsub.s32 0, %v1724
      %v1726 = vrot.slane %v1721, %v1725
      %v1727 = vlaneseq
      %v1728 = vshrl.u32 %v1727, 7
      %v1729 = vsub.s32 1, %v1728
      %v1730 = vrot.slane %v1721, %v1729
      %v1765 = vunpack.c.l.b16 %v1688
      %v1766 = vunpack.c.h.b16 %v1688
      %v1767 = vunpack.c.l.b16 %v1689
      %v1768 = vunpack.c.h.b16 %v1689
      %v1769 = vunpack.c.l.b16 %v1690
      %v1770 = vunpack.c.h.b16 %v1690
      %v1771 = vunpack.c.l.b16 %v1691
      %v1772 = vunpack.c.h.b16 %v1691
      %v1773 = vunpack.c.l.b16 %v1692
      %v1774 = vunpack.c.h.b16 %v1692
      %v1775 = vunpack.c.l.b16 %v1693
      %v1776 = vunpack.c.h.b16 %v1693
      %v1777 = vunpack.c.l.b16 %v1694
      %v1778 = vunpack.c.h.b16 %v1694
      %v1779 = vunpack.c.l.b16 %v1695
      %v1780 = vunpack.c.h.b16 %v1695
      %v1781 = vunpack.c.l.b16 %v1696
      %v1782 = vunpack.c.h.b16 %v1696
      %v1783 = vunpack.c.l.b16 %v1697
      %v1784 = vunpack.c.h.b16 %v1697
      %v1785 = vunpack.c.l.b16 %v1698
      %v1786 = vunpack.c.h.b16 %v1698
      %v1787 = vunpack.c.l.b16 %v1699
      %v1788 = vunpack.c.h.b16 %v1699
      %v1789 = vunpack.c.l.b16 %v1700
      %v1790 = vunpack.c.h.b16 %v1700
      %v1791 = vunpack.c.l.b16 %v1701
      %v1792 = vunpack.c.h.b16 %v1701
      %v1793 = vunpack.c.l.b16 %v1702
      %v1794 = vunpack.c.h.b16 %v1702
      %v1795 = vunpack.c.l.b16 %v1703
      %v1796 = vunpack.c.h.b16 %v1703
      %v1797 = vunpack.c.l.b16 %v1704
      %v1798 = vunpack.c.h.b16 %v1704
      %v1799 = vunpack.c.l.b16 %v1705
      %v1800 = vunpack.c.h.b16 %v1705
      %v1801 = vunpack.c.l.b16 %v1706
      %v1802 = vunpack.c.h.b16 %v1706
      %v1803 = vunpack.c.l.b16 %v1707
      %v1804 = vunpack.c.h.b16 %v1707
      %v1805 = vunpack.c.l.b16 %v1708
      %v1806 = vunpack.c.h.b16 %v1708
      %v1807 = vunpack.c.l.b16 %v1709
      %v1808 = vunpack.c.h.b16 %v1709
      %v1809 = vunpack.c.l.b16 %v1710
      %v1810 = vunpack.c.h.b16 %v1710
      %v1811 = vunpack.c.l.b16 %v1711
      %v1812 = vunpack.c.h.b16 %v1711
      %v1813 = vunpack.c.l.b16 %v1712
      %v1814 = vunpack.c.h.b16 %v1712
      %v1815 = vunpack.c.l.b16 %v1713
      %v1816 = vunpack.c.h.b16 %v1713
      %v1817 = vunpack.c.l.b16 %v1714
      %v1818 = vunpack.c.h.b16 %v1714
      %v1819 = vunpack.c.l.b16 %v1715
      %v1820 = vunpack.c.h.b16 %v1715
      %v1821 = vunpack.c.l.b16 %v1716
      %v1822 = vunpack.c.h.b16 %v1716
      %v1823 = vunpack.c.l.b16 %v1717
      %v1824 = vunpack.c.h.b16 %v1717
      %v1825 = vunpack.c.l.b16 %v1718
      %v1826 = vunpack.c.h.b16 %v1718
      %v1827 = vunpack.c.l.b16 %v1719
      %v1828 = vunpack.c.h.b16 %v1719
      %v1829 = vpack.c.b16 %v1767, %v1765
      %v1830 = vpack.c.b16 %v1768, %v1766
      %v1831 = vpack.c.b16 %v1771, %v1769
      %v1832 = vpack.c.b16 %v1772, %v1770
      %v1833 = vpack.c.b16 %v1775, %v1773
      %v1834 = vpack.c.b16 %v1776, %v1774
      %v1835 = vpack.c.b16 %v1779, %v1777
      %v1836 = vpack.c.b16 %v1780, %v1778
      %v1837 = vpack.c.b16 %v1783, %v1781
      %v1838 = vpack.c.b16 %v1784, %v1782
      %v1839 = vpack.c.b16 %v1787, %v1785
      %v1840 = vpack.c.b16 %v1788, %v1786
      %v1841 = vpack.c.b16 %v1791, %v1789
      %v1842 = vpack.c.b16 %v1792, %v1790
      %v1843 = vpack.c.b16 %v1795, %v1793
      %v1844 = vpack.c.b16 %v1796, %v1794
      %v1845 = vpack.c.b16 %v1799, %v1797
      %v1846 = vpack.c.b16 %v1800, %v1798
      %v1847 = vpack.c.b16 %v1803, %v1801
      %v1848 = vpack.c.b16 %v1804, %v1802
      %v1849 = vpack.c.b16 %v1807, %v1805
      %v1850 = vpack.c.b16 %v1808, %v1806
      %v1851 = vpack.c.b16 %v1811, %v1809
      %v1852 = vpack.c.b16 %v1812, %v1810
      %v1853 = vpack.c.b16 %v1815, %v1813
      %v1854 = vpack.c.b16 %v1816, %v1814
      %v1855 = vpack.c.b16 %v1819, %v1817
      %v1856 = vpack.c.b16 %v1820, %v1818
      %v1857 = vpack.c.b16 %v1823, %v1821
      %v1858 = vpack.c.b16 %v1824, %v1822
      %v1859 = vpack.c.b16 %v1827, %v1825
      %v1860 = vpack.c.b16 %v1828, %v1826
      %1893 = vmatprep.subr.bf16.mxu0 %v1830
      %1894 = vmatpush1.bf16.msra.mxu0 %v1829
      %1895 = vmatprep.subr.bf16.mxu0 %v1832
      %1896 = vmatpush1.bf16.msra.mxu0 %v1831
      %1897 = vmatprep.subr.bf16.mxu0 %v1834
      %1898 = vmatpush1.bf16.msra.mxu0 %v1833
      %1899 = vmatprep.subr.bf16.mxu0 %v1836
      %1900 = vmatpush1.bf16.msra.mxu0 %v1835
      %1901 = vmatprep.subr.bf16.mxu0 %v1838
      %1902 = vmatpush1.bf16.msra.mxu0 %v1837
      %1903 = vmatprep.subr.bf16.mxu0 %v1840
      %1904 = vmatpush1.bf16.msra.mxu0 %v1839
      %1905 = vmatprep.subr.bf16.mxu0 %v1842
      %1906 = vmatpush1.bf16.msra.mxu0 %v1841
      %1907 = vmatprep.subr.bf16.mxu0 %v1844
      %1908 = vmatpush1.bf16.msra.mxu0 %v1843
      %1909 = vmatprep.subr.bf16.mxu0 %v1846
      %1910 = vmatpush1.bf16.msra.mxu0 %v1845
      %1911 = vmatprep.subr.bf16.mxu0 %v1848
      %1912 = vmatpush1.bf16.msra.mxu0 %v1847
      %1913 = vmatprep.subr.bf16.mxu0 %v1850
      %1914 = vmatpush1.bf16.msra.mxu0 %v1849
      %1915 = vmatprep.subr.bf16.mxu0 %v1852
      %1916 = vmatpush1.bf16.msra.mxu0 %v1851
      %1917 = vmatprep.subr.bf16.mxu0 %v1854
      %1918 = vmatpush1.bf16.msra.mxu0 %v1853
      %1919 = vmatprep.subr.bf16.mxu0 %v1856
      %1920 = vmatpush1.bf16.msra.mxu0 %v1855
      %1921 = vmatprep.subr.bf16.mxu0 %v1858
      %1922 = vmatpush1.bf16.msra.mxu0 %v1857
      %1923 = vmatprep.subr.bf16.mxu0 %v1860
      %1924 = vmatpush1.bf16.msra.mxu0 %v1859
      %1925 = vmatprep.mubr.bf16.mxu0 %v1656
      %1926 = vmatmul.mubr.bf16.gmra.mrb[0].mxu0 %v1655
      %v1927 = vpop.f32.mrb[0].mxu0
      %v1928 = vadd.f32 %v1726, %v1927
      %v1929 = vpop.f32.mrb[0].mxu0
      %v1930 = vadd.f32 %v1730, %v1929
      %v1931 = vpop.f32.mrb[0].mxu0
      %v1932 = vadd.f32 %v1726, %v1931
      %v1933 = vpop.f32.mrb[0].mxu0
      %v1934 = vadd.f32 %v1730, %v1933
      %1935 = vmatprep.mubr.bf16.mxu0 %v1658
      %1936 = vmatmul.mubr.bf16.gmra.mrb[0].mxu0 %v1657
      %v1937 = vpop.f32.mrb[0].mxu0
      %v1938 = vadd.f32 %v1726, %v1937
      %v1939 = vpop.f32.mrb[0].mxu0
      %v1940 = vadd.f32 %v1730, %v1939
      %v1941 = vpop.f32.mrb[0].mxu0
      %v1942 = vadd.f32 %v1726, %v1941
      %v1943 = vpop.f32.mrb[0].mxu0
      %v1944 = vadd.f32 %v1730, %v1943
      %1945 = vmatprep.mubr.bf16.mxu0 %v1660
      %1946 = vmatmul.mubr.bf16.gmra.mrb[0].mxu0 %v1659
      %v1947 = vpop.f32.mrb[0].mxu0
      %v1948 = vadd.f32 %v1726, %v1947
      %v1949 = vpop.f32.mrb[0].mxu0
      %v1950 = vadd.f32 %v1730, %v1949
      %v1951 = vpop.f32.mrb[0].mxu0
      %v1952 = vadd.f32 %v1726, %v1951
      %v1953 = vpop.f32.mrb[0].mxu0
      %v1954 = vadd.f32 %v1730, %v1953
      %1955 = vmatprep.mubr.bf16.mxu0 %v1662
      %1956 = vmatmul.mubr.bf16.gmra.mrb[0].mxu0 %v1661
      %v1957 = vpop.f32.mrb[0].mxu0
      %v1958 = vadd.f32 %v1726, %v1957
      %v1959 = vpop.f32.mrb[0].mxu0
      %v1960 = vadd.f32 %v1730, %v1959
      %v1961 = vpop.f32.mrb[0].mxu0
      %v1962 = vadd.f32 %v1726, %v1961
      %v1963 = vpop.f32.mrb[0].mxu0
      %v1964 = vadd.f32 %v1730, %v1963
      %1965 = vmatprep.mubr.bf16.mxu0 %v1664
      %1966 = vmatmul.mubr.bf16.gmra.mrb[0].mxu0 %v1663
      %v1967 = vpop.f32.mrb[0].mxu0
      %v1968 = vadd.f32 %v1726, %v1967
      %v1969 = vpop.f32.mrb[0].mxu0
      %v1970 = vadd.f32 %v1730, %v1969
      %v1971 = vpop.f32.mrb[0].mxu0
      %v1972 = vadd.f32 %v1726, %v1971
      %v1973 = vpop.f32.mrb[0].mxu0
      %v1974 = vadd.f32 %v1730, %v1973
      %1975 = vmatprep.mubr.bf16.mxu0 %v1666
      %1976 = vmatmul.mubr.bf16.gmra.mrb[0].mxu0 %v1665
      %v1977 = vpop.f32.mrb[0].mxu0
      %v1978 = vadd.f32 %v1726, %v1977
      %v1979 = vpop.f32.mrb[0].mxu0
      %v1980 = vadd.f32 %v1730, %v1979
      %v1981 = vpop.f32.mrb[0].mxu0
      %v1982 = vadd.f32 %v1726, %v1981
      %v1983 = vpop.f32.mrb[0].mxu0
      %v1984 = vadd.f32 %v1730, %v1983
      %1985 = vmatprep.mubr.bf16.mxu0 %v1668
      %1986 = vmatmul.mubr.bf16.gmra.mrb[0].mxu0 %v1667
      %v1987 = vpop.f32.mrb[0].mxu0
      %v1988 = vadd.f32 %v1726, %v1987
      %v1989 = vpop.f32.mrb[0].mxu0
      %v1990 = vadd.f32 %v1730, %v1989
      %v1991 = vpop.f32.mrb[0].mxu0
      %v1992 = vadd.f32 %v1726, %v1991
      %v1993 = vpop.f32.mrb[0].mxu0
      %v1994 = vadd.f32 %v1730, %v1993
      %1995 = vmatprep.mubr.bf16.mxu0 %v1670
      %1996 = vmatmul.mubr.bf16.gmra.mrb[0].mxu0 %v1669
      %v1997 = vpop.f32.mrb[0].mxu0
      %v1998 = vadd.f32 %v1726, %v1997
      %v1999 = vpop.f32.mrb[0].mxu0
      %v2000 = vadd.f32 %v1730, %v1999
      %v2001 = vpop.f32.mrb[0].mxu0
      %v2002 = vadd.f32 %v1726, %v2001
      %v2003 = vpop.f32.mrb[0].mxu0
      %v2004 = vadd.f32 %v1730, %v2003
      %2005 = vmatprep.mubr.bf16.mxu0 %v1672
      %2006 = vmatmul.mubr.bf16.gmra.mrb[0].mxu0 %v1671
      %v2007 = vpop.f32.mrb[0].mxu0
      %v2008 = vadd.f32 %v1726, %v2007
      %v2009 = vpop.f32.mrb[0].mxu0
      %v2010 = vadd.f32 %v1730, %v2009
      %v2011 = vpop.f32.mrb[0].mxu0
      %v2012 = vadd.f32 %v1726, %v2011
      %v2013 = vpop.f32.mrb[0].mxu0
      %v2014 = vadd.f32 %v1730, %v2013
      %2015 = vmatprep.mubr.bf16.mxu0 %v1674
      %2016 = vmatmul.mubr.bf16.gmra.mrb[0].mxu0 %v1673
      %v2017 = vpop.f32.mrb[0].mxu0
      %v2018 = vadd.f32 %v1726, %v2017
      %v2019 = vpop.f32.mrb[0].mxu0
      %v2020 = vadd.f32 %v1730, %v2019
      %v2021 = vpop.f32.mrb[0].mxu0
      %v2022 = vadd.f32 %v1726, %v2021
      %v2023 = vpop.f32.mrb[0].mxu0
      %v2024 = vadd.f32 %v1730, %v2023
      %2025 = vmatprep.mubr.bf16.mxu0 %v1676
      %2026 = vmatmul.mubr.bf16.gmra.mrb[0].mxu0 %v1675
      %v2027 = vpop.f32.mrb[0].mxu0
      %v2028 = vadd.f32 %v1726, %v2027
      %v2029 = vpop.f32.mrb[0].mxu0
      %v2030 = vadd.f32 %v1730, %v2029
      %v2031 = vpop.f32.mrb[0].mxu0
      %v2032 = vadd.f32 %v1726, %v2031
      %v2033 = vpop.f32.mrb[0].mxu0
      %v2034 = vadd.f32 %v1730, %v2033
      %2035 = vmatprep.mubr.bf16.mxu0 %v1678
      %2036 = vmatmul.mubr.bf16.gmra.mrb[0].mxu0 %v1677
      %v2037 = vpop.f32.mrb[0].mxu0
      %v2038 = vadd.f32 %v1726, %v2037
      %v2039 = vpop.f32.mrb[0].mxu0
      %v2040 = vadd.f32 %v1730, %v2039
      %v2041 = vpop.f32.mrb[0].mxu0
      %v2042 = vadd.f32 %v1726, %v2041
      %v2043 = vpop.f32.mrb[0].mxu0
      %v2044 = vadd.f32 %v1730, %v2043
      %2045 = vmatprep.mubr.bf16.mxu0 %v1680
      %2046 = vmatmul.mubr.bf16.gmra.mrb[0].mxu0 %v1679
      %v2047 = vpop.f32.mrb[0].mxu0
      %v2048 = vadd.f32 %v1726, %v2047
      %v2049 = vpop.f32.mrb[0].mxu0
      %v2050 = vadd.f32 %v1730, %v2049
      %v2051 = vpop.f32.mrb[0].mxu0
      %v2052 = vadd.f32 %v1726, %v2051
      %v2053 = vpop.f32.mrb[0].mxu0
      %v2054 = vadd.f32 %v1730, %v2053
      %2055 = vmatprep.mubr.bf16.mxu0 %v1682
      %2056 = vmatmul.mubr.bf16.gmra.mrb[0].mxu0 %v1681
      %v2057 = vpop.f32.mrb[0].mxu0
      %v2058 = vadd.f32 %v1726, %v2057
      %v2059 = vpop.f32.mrb[0].mxu0
      %v2060 = vadd.f32 %v1730, %v2059
      %v2061 = vpop.f32.mrb[0].mxu0
      %v2062 = vadd.f32 %v1726, %v2061
      %v2063 = vpop.f32.mrb[0].mxu0
      %v2064 = vadd.f32 %v1730, %v2063
      %2065 = vmatprep.mubr.bf16.mxu0 %v1684
      %2066 = vmatmul.mubr.bf16.gmra.mrb[0].mxu0 %v1683
      %v2067 = vpop.f32.mrb[0].mxu0
      %v2068 = vadd.f32 %v1726, %v2067
      %v2069 = vpop.f32.mrb[0].mxu0
      %v2070 = vadd.f32 %v1730, %v2069
      %v2071 = vpop.f32.mrb[0].mxu0
      %v2072 = vadd.f32 %v1726, %v2071
      %v2073 = vpop.f32.mrb[0].mxu0
      %v2074 = vadd.f32 %v1730, %v2073
      %2075 = vmatprep.mubr.bf16.mxu0 %v1686
      %2076 = vmatmul.mubr.bf16.gmra.mrb[0].mxu0 %v1685
      %v2077 = vpop.f32.mrb[0].mxu0
      %v2078 = vadd.f32 %v1726, %v2077
      %v2079 = vpop.f32.mrb[0].mxu0
      %v2080 = vadd.f32 %v1730, %v2079
      %v2081 = vpop.f32.mrb[0].mxu0
      %v2082 = vadd.f32 %v1726, %v2081
      %v2083 = vpop.f32.mrb[0].mxu0
      %v2084 = vadd.f32 %v1730, %v2083
      %2085 = vdwg.mxu0
      %v2086 = vmax.f32 %v1928, 0.0
      %v2087 = vmax.f32 %v1930, 0.0
      %v2088 = vmax.f32 %v1932, 0.0
      %v2089 = vmax.f32 %v1934, 0.0
      %v2090 = vmax.f32 %v1938, 0.0
      %v2091 = vmax.f32 %v1940, 0.0
      %v2092 = vmax.f32 %v1942, 0.0
      %v2093 = vmax.f32 %v1944, 0.0
      %v2094 = vmax.f32 %v1948, 0.0
      %v2095 = vmax.f32 %v1950, 0.0
      %v2096 = vmax.f32 %v1952, 0.0
      %v2097 = vmax.f32 %v1954, 0.0
      %v2098 = vmax.f32 %v1958, 0.0
      %v2099 = vmax.f32 %v1960, 0.0
      %v2100 = vmax.f32 %v1962, 0.0
      %v2101 = vmax.f32 %v1964, 0.0
      %v2102 = vmax.f32 %v1968, 0.0
      %v2103 = vmax.f32 %v1970, 0.0
      %v2104 = vmax.f32 %v1972, 0.0
      %v2105 = vmax.f32 %v1974, 0.0
      %v2106 = vmax.f32 %v1978, 0.0
      %v2107 = vmax.f32 %v1980, 0.0
      %v2108 = vmax.f32 %v1982, 0.0
      %v2109 = vmax.f32 %v1984, 0.0
      %v2110 = vmax.f32 %v1988, 0.0
      %v2111 = vmax.f32 %v1990, 0.0
      %v2112 = vmax.f32 %v1992, 0.0
      %v2113 = vmax.f32 %v1994, 0.0
      %v2114 = vmax.f32 %v1998, 0.0
      %v2115 = vmax.f32 %v2000, 0.0
      %v2116 = vmax.f32 %v2002, 0.0
      %v2117 = vmax.f32 %v2004, 0.0
      %v2118 = vmax.f32 %v2008, 0.0
      %v2119 = vmax.f32 %v2010, 0.0
      %v2120 = vmax.f32 %v2012, 0.0
      %v2121 = vmax.f32 %v2014, 0.0
      %v2122 = vmax.f32 %v2018, 0.0
      %v2123 = vmax.f32 %v2020, 0.0
      %v2124 = vmax.f32 %v2022, 0.0
      %v2125 = vmax.f32 %v2024, 0.0
      %v2126 = vmax.f32 %v2028, 0.0
      %v2127 = vmax.f32 %v2030, 0.0
      %v2128 = vmax.f32 %v2032, 0.0
      %v2129 = vmax.f32 %v2034, 0.0
      %v2130 = vmax.f32 %v2038, 0.0
      %v2131 = vmax.f32 %v2040, 0.0
      %v2132 = vmax.f32 %v2042, 0.0
      %v2133 = vmax.f32 %v2044, 0.0
      %v2134 = vmax.f32 %v2048, 0.0
      %v2135 = vmax.f32 %v2050, 0.0
      %v2136 = vmax.f32 %v2052, 0.0
      %v2137 = vmax.f32 %v2054, 0.0
      %v2138 = vmax.f32 %v2058, 0.0
      %v2139 = vmax.f32 %v2060, 0.0
      %v2140 = vmax.f32 %v2062, 0.0
      %v2141 = vmax.f32 %v2064, 0.0
      %v2142 = vmax.f32 %v2068, 0.0
      %v2143 = vmax.f32 %v2070, 0.0
      %v2144 = vmax.f32 %v2072, 0.0
      %v2145 = vmax.f32 %v2074, 0.0
      %v2146 = vmax.f32 %v2078, 0.0
      %v2147 = vmax.f32 %v2080, 0.0
      %v2148 = vmax.f32 %v2082, 0.0
      %v2149 = vmax.f32 %v2084, 0.0
      %v2150 = vpack.c.bf16 %v2088, %v2086
      %v2151 = vpack.c.bf16 %v2089, %v2087
      %v2152 = vpack.c.bf16 %v2092, %v2090
      %v2153 = vpack.c.bf16 %v2093, %v2091
      %v2154 = vpack.c.bf16 %v2096, %v2094
      %v2155 = vpack.c.bf16 %v2097, %v2095
      %v2156 = vpack.c.bf16 %v2100, %v2098
      %v2157 = vpack.c.bf16 %v2101, %v2099
      %v2158 = vpack.c.bf16 %v2104, %v2102
      %v2159 = vpack.c.bf16 %v2105, %v2103
      %v2160 = vpack.c.bf16 %v2108, %v2106
      %v2161 = vpack.c.bf16 %v2109, %v2107
      %v2162 = vpack.c.bf16 %v2112, %v2110
      %v2163 = vpack.c.bf16 %v2113, %v2111
      %v2164 = vpack.c.bf16 %v2116, %v2114
      %v2165 = vpack.c.bf16 %v2117, %v2115
      %v2166 = vpack.c.bf16 %v2120, %v2118
      %v2167 = vpack.c.bf16 %v2121, %v2119
      %v2168 = vpack.c.bf16 %v2124, %v2122
      %v2169 = vpack.c.bf16 %v2125, %v2123
      %v2170 = vpack.c.bf16 %v2128, %v2126
      %v2171 = vpack.c.bf16 %v2129, %v2127
      %v2172 = vpack.c.bf16 %v2132, %v2130
      %v2173 = vpack.c.bf16 %v2133, %v2131
      %v2174 = vpack.c.bf16 %v2136, %v2134
      %v2175 = vpack.c.bf16 %v2137, %v2135
      %v2176 = vpack.c.bf16 %v2140, %v2138
      %v2177 = vpack.c.bf16 %v2141, %v2139
      %v2178 = vpack.c.bf16 %v2144, %v2142
      %v2179 = vpack.c.bf16 %v2145, %v2143
      %v2180 = vpack.c.bf16 %v2148, %v2146
      %v2181 = vpack.c.bf16 %v2149, %v2147
      %s2182 = scalar_lea.vmem %s3, 768
      %v2183 = vld [vmem:[%s2182] sm:$0xff]
      %v2184 = vld [vmem:[%s2182 + $0x8] sm:$0xff]
      %v2185 = vld [vmem:[%s2182 + $0x10] sm:$0xff]
      %v2186 = vld [vmem:[%s2182 + $0x18] sm:$0xff]
      %v2187 = vld [vmem:[%s2182 + $0x20] sm:$0xff]
      %v2188 = vld [vmem:[%s2182 + $0x28] sm:$0xff]
      %v2189 = vld [vmem:[%s2182 + $0x30] sm:$0xff]
      %v2190 = vld [vmem:[%s2182 + $0x38] sm:$0xff]
      %v2191 = vld [vmem:[%s2182 + $0x40] sm:$0xff]
      %v2192 = vld [vmem:[%s2182 + $0x48] sm:$0xff]
      %v2193 = vld [vmem:[%s2182 + $0x50] sm:$0xff]
      %v2194 = vld [vmem:[%s2182 + $0x58] sm:$0xff]
      %v2195 = vld [vmem:[%s2182 + $0x60] sm:$0xff]
      %v2196 = vld [vmem:[%s2182 + $0x68] sm:$0xff]
      %v2197 = vld [vmem:[%s2182 + $0x70] sm:$0xff]
      %v2198 = vld [vmem:[%s2182 + $0x78] sm:$0xff]
      %v2199 = vld [vmem:[%s2182 + $0x80] sm:$0xff]
      %v2200 = vld [vmem:[%s2182 + $0x88] sm:$0xff]
      %v2201 = vld [vmem:[%s2182 + $0x90] sm:$0xff]
      %v2202 = vld [vmem:[%s2182 + $0x98] sm:$0xff]
      %v2203 = vld [vmem:[%s2182 + $0xa0] sm:$0xff]
      %v2204 = vld [vmem:[%s2182 + $0xa8] sm:$0xff]
      %v2205 = vld [vmem:[%s2182 + $0xb0] sm:$0xff]
      %v2206 = vld [vmem:[%s2182 + $0xb8] sm:$0xff]
      %v2207 = vld [vmem:[%s2182 + $0xc0] sm:$0xff]
      %v2208 = vld [vmem:[%s2182 + $0xc8] sm:$0xff]
      %v2209 = vld [vmem:[%s2182 + $0xd0] sm:$0xff]
      %v2210 = vld [vmem:[%s2182 + $0xd8] sm:$0xff]
      %v2211 = vld [vmem:[%s2182 + $0xe0] sm:$0xff]
      %v2212 = vld [vmem:[%s2182 + $0xe8] sm:$0xff]
      %v2213 = vld [vmem:[%s2182 + $0xf0] sm:$0xff]
      %v2214 = vld [vmem:[%s2182 + $0xf8] sm:$0xff]
      %s2215 = scalar_lea.vmem %s4, 4
      %v2216 = vld [vmem:[%s2215] ss:$8 sm:$0x3]
      %v2218 = vlaneseq
      %v2219 = vshrl.u32 %v2218, 7
      %v2220 = vsub.s32 0, %v2219
      %v2221 = vrot.slane %v2216, %v2220
      %v2222 = vlaneseq
      %v2223 = vshrl.u32 %v2222, 7
      %v2224 = vsub.s32 1, %v2223
      %v2225 = vrot.slane %v2216, %v2224
      %v2260 = vunpack.c.l.b16 %v2183
      %v2261 = vunpack.c.h.b16 %v2183
      %v2262 = vunpack.c.l.b16 %v2184
      %v2263 = vunpack.c.h.b16 %v2184
      %v2264 = vunpack.c.l.b16 %v2185
      %v2265 = vunpack.c.h.b16 %v2185
      %v2266 = vunpack.c.l.b16 %v2186
      %v2267 = vunpack.c.h.b16 %v2186
      %v2268 = vunpack.c.l.b16 %v2187
      %v2269 = vunpack.c.h.b16 %v2187
      %v2270 = vunpack.c.l.b16 %v2188
      %v2271 = vunpack.c.h.b16 %v2188
      %v2272 = vunpack.c.l.b16 %v2189
      %v2273 = vunpack.c.h.b16 %v2189
      %v2274 = vunpack.c.l.b16 %v2190
      %v2275 = vunpack.c.h.b16 %v2190
      %v2276 = vunpack.c.l.b16 %v2191
      %v2277 = vunpack.c.h.b16 %v2191
      %v2278 = vunpack.c.l.b16 %v2192
      %v2279 = vunpack.c.h.b16 %v2192
      %v2280 = vunpack.c.l.b16 %v2193
      %v2281 = vunpack.c.h.b16 %v2193
      %v2282 = vunpack.c.l.b16 %v2194
      %v2283 = vunpack.c.h.b16 %v2194
      %v2284 = vunpack.c.l.b16 %v2195
      %v2285 = vunpack.c.h.b16 %v2195
      %v2286 = vunpack.c.l.b16 %v2196
      %v2287 = vunpack.c.h.b16 %v2196
      %v2288 = vunpack.c.l.b16 %v2197
      %v2289 = vunpack.c.h.b16 %v2197
      %v2290 = vunpack.c.l.b16 %v2198
      %v2291 = vunpack.c.h.b16 %v2198
      %v2292 = vunpack.c.l.b16 %v2199
      %v2293 = vunpack.c.h.b16 %v2199
      %v2294 = vunpack.c.l.b16 %v2200
      %v2295 = vunpack.c.h.b16 %v2200
      %v2296 = vunpack.c.l.b16 %v2201
      %v2297 = vunpack.c.h.b16 %v2201
      %v2298 = vunpack.c.l.b16 %v2202
      %v2299 = vunpack.c.h.b16 %v2202
      %v2300 = vunpack.c.l.b16 %v2203
      %v2301 = vunpack.c.h.b16 %v2203
      %v2302 = vunpack.c.l.b16 %v2204
      %v2303 = vunpack.c.h.b16 %v2204
      %v2304 = vunpack.c.l.b16 %v2205
      %v2305 = vunpack.c.h.b16 %v2205
      %v2306 = vunpack.c.l.b16 %v2206
      %v2307 = vunpack.c.h.b16 %v2206
      %v2308 = vunpack.c.l.b16 %v2207
      %v2309 = vunpack.c.h.b16 %v2207
      %v2310 = vunpack.c.l.b16 %v2208
      %v2311 = vunpack.c.h.b16 %v2208
      %v2312 = vunpack.c.l.b16 %v2209
      %v2313 = vunpack.c.h.b16 %v2209
      %v2314 = vunpack.c.l.b16 %v2210
      %v2315 = vunpack.c.h.b16 %v2210
      %v2316 = vunpack.c.l.b16 %v2211
      %v2317 = vunpack.c.h.b16 %v2211
      %v2318 = vunpack.c.l.b16 %v2212
      %v2319 = vunpack.c.h.b16 %v2212
      %v2320 = vunpack.c.l.b16 %v2213
      %v2321 = vunpack.c.h.b16 %v2213
      %v2322 = vunpack.c.l.b16 %v2214
      %v2323 = vunpack.c.h.b16 %v2214
      %v2324 = vpack.c.b16 %v2262, %v2260
      %v2325 = vpack.c.b16 %v2263, %v2261
      %v2326 = vpack.c.b16 %v2266, %v2264
      %v2327 = vpack.c.b16 %v2267, %v2265
      %v2328 = vpack.c.b16 %v2270, %v2268
      %v2329 = vpack.c.b16 %v2271, %v2269
      %v2330 = vpack.c.b16 %v2274, %v2272
      %v2331 = vpack.c.b16 %v2275, %v2273
      %v2332 = vpack.c.b16 %v2278, %v2276
      %v2333 = vpack.c.b16 %v2279, %v2277
      %v2334 = vpack.c.b16 %v2282, %v2280
      %v2335 = vpack.c.b16 %v2283, %v2281
      %v2336 = vpack.c.b16 %v2286, %v2284
      %v2337 = vpack.c.b16 %v2287, %v2285
      %v2338 = vpack.c.b16 %v2290, %v2288
      %v2339 = vpack.c.b16 %v2291, %v2289
      %v2340 = vpack.c.b16 %v2294, %v2292
      %v2341 = vpack.c.b16 %v2295, %v2293
      %v2342 = vpack.c.b16 %v2298, %v2296
      %v2343 = vpack.c.b16 %v2299, %v2297
      %v2344 = vpack.c.b16 %v2302, %v2300
      %v2345 = vpack.c.b16 %v2303, %v2301
      %v2346 = vpack.c.b16 %v2306, %v2304
      %v2347 = vpack.c.b16 %v2307, %v2305
      %v2348 = vpack.c.b16 %v2310, %v2308
      %v2349 = vpack.c.b16 %v2311, %v2309
      %v2350 = vpack.c.b16 %v2314, %v2312
      %v2351 = vpack.c.b16 %v2315, %v2313
      %v2352 = vpack.c.b16 %v2318, %v2316
      %v2353 = vpack.c.b16 %v2319, %v2317
      %v2354 = vpack.c.b16 %v2322, %v2320
      %v2355 = vpack.c.b16 %v2323, %v2321
      %2388 = vmatprep.subr.bf16.mxu0 %v2325
      %2389 = vmatpush1.bf16.msra.mxu0 %v2324
      %2390 = vmatprep.subr.bf16.mxu0 %v2327
      %2391 = vmatpush1.bf16.msra.mxu0 %v2326
      %2392 = vmatprep.subr.bf16.mxu0 %v2329
      %2393 = vmatpush1.bf16.msra.mxu0 %v2328
      %2394 = vmatprep.subr.bf16.mxu0 %v2331
      %2395 = vmatpush1.bf16.msra.mxu0 %v2330
      %2396 = vmatprep.subr.bf16.mxu0 %v2333
      %2397 = vmatpush1.bf16.msra.mxu0 %v2332
      %2398 = vmatprep.subr.bf16.mxu0 %v2335
      %2399 = vmatpush1.bf16.msra.mxu0 %v2334
      %2400 = vmatprep.subr.bf16.mxu0 %v2337
      %2401 = vmatpush1.bf16.msra.mxu0 %v2336
      %2402 = vmatprep.subr.bf16.mxu0 %v2339
      %2403 = vmatpush1.bf16.msra.mxu0 %v2338
      %2404 = vmatprep.subr.bf16.mxu0 %v2341
      %2405 = vmatpush1.bf16.msra.mxu0 %v2340
      %2406 = vmatprep.subr.bf16.mxu0 %v2343
      %2407 = vmatpush1.bf16.msra.mxu0 %v2342
      %2408 = vmatprep.subr.bf16.mxu0 %v2345
      %2409 = vmatpush1.bf16.msra.mxu0 %v2344
      %2410 = vmatprep.subr.bf16.mxu0 %v2347
      %2411 = vmatpush1.bf16.msra.mxu0 %v2346
      %2412 = vmatprep.subr.bf16.mxu0 %v2349
      %2413 = vmatpush1.bf16.msra.mxu0 %v2348
      %2414 = vmatprep.subr.bf16.mxu0 %v2351
      %2415 = vmatpush1.bf16.msra.mxu0 %v2350
      %2416 = vmatprep.subr.bf16.mxu0 %v2353
      %2417 = vmatpush1.bf16.msra.mxu0 %v2352
      %2418 = vmatprep.subr.bf16.mxu0 %v2355
      %2419 = vmatpush1.bf16.msra.mxu0 %v2354
      %2420 = vmatprep.mubr.bf16.mxu0 %v2151
      %2421 = vmatmul.mubr.bf16.gmra.mrb[0].mxu0 %v2150
      %v2422 = vpop.f32.mrb[0].mxu0
      %v2423 = vadd.f32 %v2221, %v2422
      %v2424 = vpop.f32.mrb[0].mxu0
      %v2425 = vadd.f32 %v2225, %v2424
      %v2426 = vpop.f32.mrb[0].mxu0
      %v2427 = vadd.f32 %v2221, %v2426
      %v2428 = vpop.f32.mrb[0].mxu0
      %v2429 = vadd.f32 %v2225, %v2428
      %2430 = vmatprep.mubr.bf16.mxu0 %v2153
      %2431 = vmatmul.mubr.bf16.gmra.mrb[0].mxu0 %v2152
      %v2432 = vpop.f32.mrb[0].mxu0
      %v2433 = vadd.f32 %v2221, %v2432
      %v2434 = vpop.f32.mrb[0].mxu0
      %v2435 = vadd.f32 %v2225, %v2434
      %v2436 = vpop.f32.mrb[0].mxu0
      %v2437 = vadd.f32 %v2221, %v2436
      %v2438 = vpop.f32.mrb[0].mxu0
      %v2439 = vadd.f32 %v2225, %v2438
      %2440 = vmatprep.mubr.bf16.mxu0 %v2155
      %2441 = vmatmul.mubr.bf16.gmra.mrb[0].mxu0 %v2154
      %v2442 = vpop.f32.mrb[0].mxu0
      %v2443 = vadd.f32 %v2221, %v2442
      %v2444 = vpop.f32.mrb[0].mxu0
      %v2445 = vadd.f32 %v2225, %v2444
      %v2446 = vpop.f32.mrb[0].mxu0
      %v2447 = vadd.f32 %v2221, %v2446
      %v2448 = vpop.f32.mrb[0].mxu0
      %v2449 = vadd.f32 %v2225, %v2448
      %2450 = vmatprep.mubr.bf16.mxu0 %v2157
      %2451 = vmatmul.mubr.bf16.gmra.mrb[0].mxu0 %v2156
      %v2452 = vpop.f32.mrb[0].mxu0
      %v2453 = vadd.f32 %v2221, %v2452
      %v2454 = vpop.f32.mrb[0].mxu0
      %v2455 = vadd.f32 %v2225, %v2454
      %v2456 = vpop.f32.mrb[0].mxu0
      %v2457 = vadd.f32 %v2221, %v2456
      %v2458 = vpop.f32.mrb[0].mxu0
      %v2459 = vadd.f32 %v2225, %v2458
      %2460 = vmatprep.mubr.bf16.mxu0 %v2159
      %2461 = vmatmul.mubr.bf16.gmra.mrb[0].mxu0 %v2158
      %v2462 = vpop.f32.mrb[0].mxu0
      %v2463 = vadd.f32 %v2221, %v2462
      %v2464 = vpop.f32.mrb[0].mxu0
      %v2465 = vadd.f32 %v2225, %v2464
      %v2466 = vpop.f32.mrb[0].mxu0
      %v2467 = vadd.f32 %v2221, %v2466
      %v2468 = vpop.f32.mrb[0].mxu0
      %v2469 = vadd.f32 %v2225, %v2468
      %2470 = vmatprep.mubr.bf16.mxu0 %v2161
      %2471 = vmatmul.mubr.bf16.gmra.mrb[0].mxu0 %v2160
      %v2472 = vpop.f32.mrb[0].mxu0
      %v2473 = vadd.f32 %v2221, %v2472
      %v2474 = vpop.f32.mrb[0].mxu0
      %v2475 = vadd.f32 %v2225, %v2474
      %v2476 = vpop.f32.mrb[0].mxu0
      %v2477 = vadd.f32 %v2221, %v2476
      %v2478 = vpop.f32.mrb[0].mxu0
      %v2479 = vadd.f32 %v2225, %v2478
      %2480 = vmatprep.mubr.bf16.mxu0 %v2163
      %2481 = vmatmul.mubr.bf16.gmra.mrb[0].mxu0 %v2162
      %v2482 = vpop.f32.mrb[0].mxu0
      %v2483 = vadd.f32 %v2221, %v2482
      %v2484 = vpop.f32.mrb[0].mxu0
      %v2485 = vadd.f32 %v2225, %v2484
      %v2486 = vpop.f32.mrb[0].mxu0
      %v2487 = vadd.f32 %v2221, %v2486
      %v2488 = vpop.f32.mrb[0].mxu0
      %v2489 = vadd.f32 %v2225, %v2488
      %2490 = vmatprep.mubr.bf16.mxu0 %v2165
      %2491 = vmatmul.mubr.bf16.gmra.mrb[0].mxu0 %v2164
      %v2492 = vpop.f32.mrb[0].mxu0
      %v2493 = vadd.f32 %v2221, %v2492
      %v2494 = vpop.f32.mrb[0].mxu0
      %v2495 = vadd.f32 %v2225, %v2494
      %v2496 = vpop.f32.mrb[0].mxu0
      %v2497 = vadd.f32 %v2221, %v2496
      %v2498 = vpop.f32.mrb[0].mxu0
      %v2499 = vadd.f32 %v2225, %v2498
      %2500 = vmatprep.mubr.bf16.mxu0 %v2167
      %2501 = vmatmul.mubr.bf16.gmra.mrb[0].mxu0 %v2166
      %v2502 = vpop.f32.mrb[0].mxu0
      %v2503 = vadd.f32 %v2221, %v2502
      %v2504 = vpop.f32.mrb[0].mxu0
      %v2505 = vadd.f32 %v2225, %v2504
      %v2506 = vpop.f32.mrb[0].mxu0
      %v2507 = vadd.f32 %v2221, %v2506
      %v2508 = vpop.f32.mrb[0].mxu0
      %v2509 = vadd.f32 %v2225, %v2508
      %2510 = vmatprep.mubr.bf16.mxu0 %v2169
      %2511 = vmatmul.mubr.bf16.gmra.mrb[0].mxu0 %v2168
      %v2512 = vpop.f32.mrb[0].mxu0
      %v2513 = vadd.f32 %v2221, %v2512
      %v2514 = vpop.f32.mrb[0].mxu0
      %v2515 = vadd.f32 %v2225, %v2514
      %v2516 = vpop.f32.mrb[0].mxu0
      %v2517 = vadd.f32 %v2221, %v2516
      %v2518 = vpop.f32.mrb[0].mxu0
      %v2519 = vadd.f32 %v2225, %v2518
      %2520 = vmatprep.mubr.bf16.mxu0 %v2171
      %2521 = vmatmul.mubr.bf16.gmra.mrb[0].mxu0 %v2170
      %v2522 = vpop.f32.mrb[0].mxu0
      %v2523 = vadd.f32 %v2221, %v2522
      %v2524 = vpop.f32.mrb[0].mxu0
      %v2525 = vadd.f32 %v2225, %v2524
      %v2526 = vpop.f32.mrb[0].mxu0
      %v2527 = vadd.f32 %v2221, %v2526
      %v2528 = vpop.f32.mrb[0].mxu0
      %v2529 = vadd.f32 %v2225, %v2528
      %2530 = vmatprep.mubr.bf16.mxu0 %v2173
      %2531 = vmatmul.mubr.bf16.gmra.mrb[0].mxu0 %v2172
      %v2532 = vpop.f32.mrb[0].mxu0
      %v2533 = vadd.f32 %v2221, %v2532
      %v2534 = vpop.f32.mrb[0].mxu0
      %v2535 = vadd.f32 %v2225, %v2534
      %v2536 = vpop.f32.mrb[0].mxu0
      %v2537 = vadd.f32 %v2221, %v2536
      %v2538 = vpop.f32.mrb[0].mxu0
      %v2539 = vadd.f32 %v2225, %v2538
      %2540 = vmatprep.mubr.bf16.mxu0 %v2175
      %2541 = vmatmul.mubr.bf16.gmra.mrb[0].mxu0 %v2174
      %v2542 = vpop.f32.mrb[0].mxu0
      %v2543 = vadd.f32 %v2221, %v2542
      %v2544 = vpop.f32.mrb[0].mxu0
      %v2545 = vadd.f32 %v2225, %v2544
      %v2546 = vpop.f32.mrb[0].mxu0
      %v2547 = vadd.f32 %v2221, %v2546
      %v2548 = vpop.f32.mrb[0].mxu0
      %v2549 = vadd.f32 %v2225, %v2548
      %2550 = vmatprep.mubr.bf16.mxu0 %v2177
      %2551 = vmatmul.mubr.bf16.gmra.mrb[0].mxu0 %v2176
      %v2552 = vpop.f32.mrb[0].mxu0
      %v2553 = vadd.f32 %v2221, %v2552
      %v2554 = vpop.f32.mrb[0].mxu0
      %v2555 = vadd.f32 %v2225, %v2554
      %v2556 = vpop.f32.mrb[0].mxu0
      %v2557 = vadd.f32 %v2221, %v2556
      %v2558 = vpop.f32.mrb[0].mxu0
      %v2559 = vadd.f32 %v2225, %v2558
      %2560 = vmatprep.mubr.bf16.mxu0 %v2179
      %2561 = vmatmul.mubr.bf16.gmra.mrb[0].mxu0 %v2178
      %v2562 = vpop.f32.mrb[0].mxu0
      %v2563 = vadd.f32 %v2221, %v2562
      %v2564 = vpop.f32.mrb[0].mxu0
      %v2565 = vadd.f32 %v2225, %v2564
      %v2566 = vpop.f32.mrb[0].mxu0
      %v2567 = vadd.f32 %v2221, %v2566
      %v2568 = vpop.f32.mrb[0].mxu0
      %v2569 = vadd.f32 %v2225, %v2568
      %2570 = vmatprep.mubr.bf16.mxu0 %v2181
      %2571 = vmatmul.mubr.bf16.gmra.mrb[0].mxu0 %v2180
      %v2572 = vpop.f32.mrb[0].mxu0
      %v2573 = vadd.f32 %v2221, %v2572
      %v2574 = vpop.f32.mrb[0].mxu0
      %v2575 = vadd.f32 %v2225, %v2574
      %v2576 = vpop.f32.mrb[0].mxu0
      %v2577 = vadd.f32 %v2221, %v2576
      %v2578 = vpop.f32.mrb[0].mxu0
      %v2579 = vadd.f32 %v2225, %v2578
      %2580 = vdwg.mxu0
      %v2581 = vmax.f32 %v2423, 0.0
      %v2582 = vmax.f32 %v2425, 0.0
      %v2583 = vmax.f32 %v2427, 0.0
      %v2584 = vmax.f32 %v2429, 0.0
      %v2585 = vmax.f32 %v2433, 0.0
      %v2586 = vmax.f32 %v2435, 0.0
      %v2587 = vmax.f32 %v2437, 0.0
      %v2588 = vmax.f32 %v2439, 0.0
      %v2589 = vmax.f32 %v2443, 0.0
      %v2590 = vmax.f32 %v2445, 0.0
      %v2591 = vmax.f32 %v2447, 0.0
      %v2592 = vmax.f32 %v2449, 0.0
      %v2593 = vmax.f32 %v2453, 0.0
      %v2594 = vmax.f32 %v2455, 0.0
      %v2595 = vmax.f32 %v2457, 0.0
      %v2596 = vmax.f32 %v2459, 0.0
      %v2597 = vmax.f32 %v2463, 0.0
      %v2598 = vmax.f32 %v2465, 0.0
      %v2599 = vmax.f32 %v2467, 0.0
      %v2600 = vmax.f32 %v2469, 0.0
      %v2601 = vmax.f32 %v2473, 0.0
      %v2602 = vmax.f32 %v2475, 0.0
      %v2603 = vmax.f32 %v2477, 0.0
      %v2604 = vmax.f32 %v2479, 0.0
      %v2605 = vmax.f32 %v2483, 0.0
      %v2606 = vmax.f32 %v2485, 0.0
      %v2607 = vmax.f32 %v2487, 0.0
      %v2608 = vmax.f32 %v2489, 0.0
      %v2609 = vmax.f32 %v2493, 0.0
      %v2610 = vmax.f32 %v2495, 0.0
      %v2611 = vmax.f32 %v2497, 0.0
      %v2612 = vmax.f32 %v2499, 0.0
      %v2613 = vmax.f32 %v2503, 0.0
      %v2614 = vmax.f32 %v2505, 0.0
      %v2615 = vmax.f32 %v2507, 0.0
      %v2616 = vmax.f32 %v2509, 0.0
      %v2617 = vmax.f32 %v2513, 0.0
      %v2618 = vmax.f32 %v2515, 0.0
      %v2619 = vmax.f32 %v2517, 0.0
      %v2620 = vmax.f32 %v2519, 0.0
      %v2621 = vmax.f32 %v2523, 0.0
      %v2622 = vmax.f32 %v2525, 0.0
      %v2623 = vmax.f32 %v2527, 0.0
      %v2624 = vmax.f32 %v2529, 0.0
      %v2625 = vmax.f32 %v2533, 0.0
      %v2626 = vmax.f32 %v2535, 0.0
      %v2627 = vmax.f32 %v2537, 0.0
      %v2628 = vmax.f32 %v2539, 0.0
      %v2629 = vmax.f32 %v2543, 0.0
      %v2630 = vmax.f32 %v2545, 0.0
      %v2631 = vmax.f32 %v2547, 0.0
      %v2632 = vmax.f32 %v2549, 0.0
      %v2633 = vmax.f32 %v2553, 0.0
      %v2634 = vmax.f32 %v2555, 0.0
      %v2635 = vmax.f32 %v2557, 0.0
      %v2636 = vmax.f32 %v2559, 0.0
      %v2637 = vmax.f32 %v2563, 0.0
      %v2638 = vmax.f32 %v2565, 0.0
      %v2639 = vmax.f32 %v2567, 0.0
      %v2640 = vmax.f32 %v2569, 0.0
      %v2641 = vmax.f32 %v2573, 0.0
      %v2642 = vmax.f32 %v2575, 0.0
      %v2643 = vmax.f32 %v2577, 0.0
      %v2644 = vmax.f32 %v2579, 0.0
      %v2645 = vpack.c.bf16 %v2583, %v2581
      %v2646 = vpack.c.bf16 %v2584, %v2582
      %v2647 = vpack.c.bf16 %v2587, %v2585
      %v2648 = vpack.c.bf16 %v2588, %v2586
      %v2649 = vpack.c.bf16 %v2591, %v2589
      %v2650 = vpack.c.bf16 %v2592, %v2590
      %v2651 = vpack.c.bf16 %v2595, %v2593
      %v2652 = vpack.c.bf16 %v2596, %v2594
      %v2653 = vpack.c.bf16 %v2599, %v2597
      %v2654 = vpack.c.bf16 %v2600, %v2598
      %v2655 = vpack.c.bf16 %v2603, %v2601
      %v2656 = vpack.c.bf16 %v2604, %v2602
      %v2657 = vpack.c.bf16 %v2607, %v2605
      %v2658 = vpack.c.bf16 %v2608, %v2606
      %v2659 = vpack.c.bf16 %v2611, %v2609
      %v2660 = vpack.c.bf16 %v2612, %v2610
      %v2661 = vpack.c.bf16 %v2615, %v2613
      %v2662 = vpack.c.bf16 %v2616, %v2614
      %v2663 = vpack.c.bf16 %v2619, %v2617
      %v2664 = vpack.c.bf16 %v2620, %v2618
      %v2665 = vpack.c.bf16 %v2623, %v2621
      %v2666 = vpack.c.bf16 %v2624, %v2622
      %v2667 = vpack.c.bf16 %v2627, %v2625
      %v2668 = vpack.c.bf16 %v2628, %v2626
      %v2669 = vpack.c.bf16 %v2631, %v2629
      %v2670 = vpack.c.bf16 %v2632, %v2630
      %v2671 = vpack.c.bf16 %v2635, %v2633
      %v2672 = vpack.c.bf16 %v2636, %v2634
      %v2673 = vpack.c.bf16 %v2639, %v2637
      %v2674 = vpack.c.bf16 %v2640, %v2638
      %v2675 = vpack.c.bf16 %v2643, %v2641
      %v2676 = vpack.c.bf16 %v2644, %v2642
      %s2677 = scalar_lea.vmem %s3, 1024
      %v2678 = vld [vmem:[%s2677] sm:$0xff]
      %v2679 = vld [vmem:[%s2677 + $0x8] sm:$0xff]
      %v2680 = vld [vmem:[%s2677 + $0x10] sm:$0xff]
      %v2681 = vld [vmem:[%s2677 + $0x18] sm:$0xff]
      %v2682 = vld [vmem:[%s2677 + $0x20] sm:$0xff]
      %v2683 = vld [vmem:[%s2677 + $0x28] sm:$0xff]
      %v2684 = vld [vmem:[%s2677 + $0x30] sm:$0xff]
      %v2685 = vld [vmem:[%s2677 + $0x38] sm:$0xff]
      %v2686 = vld [vmem:[%s2677 + $0x40] sm:$0xff]
      %v2687 = vld [vmem:[%s2677 + $0x48] sm:$0xff]
      %v2688 = vld [vmem:[%s2677 + $0x50] sm:$0xff]
      %v2689 = vld [vmem:[%s2677 + $0x58] sm:$0xff]
      %v2690 = vld [vmem:[%s2677 + $0x60] sm:$0xff]
      %v2691 = vld [vmem:[%s2677 + $0x68] sm:$0xff]
      %v2692 = vld [vmem:[%s2677 + $0x70] sm:$0xff]
      %v2693 = vld [vmem:[%s2677 + $0x78] sm:$0xff]
      %v2694 = vld [vmem:[%s2677 + $0x80] sm:$0xff]
      %v2695 = vld [vmem:[%s2677 + $0x88] sm:$0xff]
      %v2696 = vld [vmem:[%s2677 + $0x90] sm:$0xff]
      %v2697 = vld [vmem:[%s2677 + $0x98] sm:$0xff]
      %v2698 = vld [vmem:[%s2677 + $0xa0] sm:$0xff]
      %v2699 = vld [vmem:[%s2677 + $0xa8] sm:$0xff]
      %v2700 = vld [vmem:[%s2677 + $0xb0] sm:$0xff]
      %v2701 = vld [vmem:[%s2677 + $0xb8] sm:$0xff]
      %v2702 = vld [vmem:[%s2677 + $0xc0] sm:$0xff]
      %v2703 = vld [vmem:[%s2677 + $0xc8] sm:$0xff]
      %v2704 = vld [vmem:[%s2677 + $0xd0] sm:$0xff]
      %v2705 = vld [vmem:[%s2677 + $0xd8] sm:$0xff]
      %v2706 = vld [vmem:[%s2677 + $0xe0] sm:$0xff]
      %v2707 = vld [vmem:[%s2677 + $0xe8] sm:$0xff]
      %v2708 = vld [vmem:[%s2677 + $0xf0] sm:$0xff]
      %v2709 = vld [vmem:[%s2677 + $0xf8] sm:$0xff]
      %v2710 = vld [vmem:[%s2] sm:$0xff]
      %v2711 = vld [vmem:[%s2 + $0x8] sm:$0x77]
      %v2714 = vunpack.c.l.b16 %v2710
      %v2715 = vunpack.c.h.b16 %v2710
      %v2716 = vunpack.c.l.b16 %v2711
      %v2717 = vunpack.c.h.b16 %v2711
      %v2718 = vpack.c.b16 %v2716, %v2714
      %v2719 = vpack.c.b16 %v2717, %v2715
      %v2721 = vsel %vm402, %v2718, 0
      %v2724 = vsel %vm402, %v2719, 0
      %2726 = vmatprep.subr.bf16.mxu0 %v2724
      %2727 = vmatpush1.bf16.msra.mxu0 %v2721
      %2728 = vmatprep.subr.bf16.mxu0 0
      %2729 = vmatpush1.bf16.msra.mxu0 0
      %2730 = vmatprep.subr.bf16.mxu0 0
      %2731 = vmatpush1.bf16.msra.mxu0 0
      %2732 = vmatprep.subr.bf16.mxu0 0
      %2733 = vmatpush1.bf16.msra.mxu0 0
      %2734 = vmatprep.subr.bf16.mxu0 0
      %2735 = vmatpush1.bf16.msra.mxu0 0
      %2736 = vmatprep.subr.bf16.mxu0 0
      %2737 = vmatpush1.bf16.msra.mxu0 0
      %2738 = vmatprep.subr.bf16.mxu0 0
      %2739 = vmatpush1.bf16.msra.mxu0 0
      %2740 = vmatprep.subr.bf16.mxu0 0
      %2741 = vmatpush1.bf16.msra.mxu0 0
      %2742 = vmatprep.subr.bf16.mxu0 0
      %2743 = vmatpush1.bf16.msra.mxu0 0
      %2744 = vmatprep.subr.bf16.mxu0 0
      %2745 = vmatpush1.bf16.msra.mxu0 0
      %2746 = vmatprep.subr.bf16.mxu0 0
      %2747 = vmatpush1.bf16.msra.mxu0 0
      %2748 = vmatprep.subr.bf16.mxu0 0
      %2749 = vmatpush1.bf16.msra.mxu0 0
      %2750 = vmatprep.subr.bf16.mxu0 0
      %2751 = vmatpush1.bf16.msra.mxu0 0
      %2752 = vmatprep.subr.bf16.mxu0 0
      %2753 = vmatpush1.bf16.msra.mxu0 0
      %2754 = vmatprep.subr.bf16.mxu0 0
      %2755 = vmatpush1.bf16.msra.mxu0 0
      %2756 = vmatprep.subr.bf16.mxu0 0
      %2757 = vmatpush1.bf16.msra.mxu0 0
      %2758 = vmatprep.mubr.bf16.mxu0 0
      %2759 = vmatmul.mubr.bf16.gmra.mrb[0].mxu0 %v355
      %v2760 = vpop.f32.mrb[0].mxu0
      %v2761 = vadd.f32 0.0, %v2760
      %v2762 = vpop.f32.mrb[0].mxu0
      %v2763 = vadd.f32 0.0, %v2762
      %v2764 = vpop.f32.mrb[0].mxu0
      %v2765 = vadd.f32 0.0, %v2764
      %v2766 = vpop.f32.mrb[0].mxu0
      %v2767 = vadd.f32 0.0, %v2766
      %2768 = vmatprep.mubr.bf16.mxu0 0
      %2769 = vmatmul.mubr.bf16.gmra.mrb[0].mxu0 %v358
      %v2770 = vpop.f32.mrb[0].mxu0
      %v2771 = vadd.f32 0.0, %v2770
      %v2772 = vpop.f32.mrb[0].mxu0
      %v2773 = vadd.f32 0.0, %v2772
      %v2774 = vpop.f32.mrb[0].mxu0
      %v2775 = vadd.f32 0.0, %v2774
      %v2776 = vpop.f32.mrb[0].mxu0
      %v2777 = vadd.f32 0.0, %v2776
      %2778 = vmatprep.mubr.bf16.mxu0 0
      %2779 = vmatmul.mubr.bf16.gmra.mrb[0].mxu0 %v361
      %v2780 = vpop.f32.mrb[0].mxu0
      %v2781 = vadd.f32 0.0, %v2780
      %v2782 = vpop.f32.mrb[0].mxu0
      %v2783 = vadd.f32 0.0, %v2782
      %v2784 = vpop.f32.mrb[0].mxu0
      %v2785 = vadd.f32 0.0, %v2784
      %v2786 = vpop.f32.mrb[0].mxu0
      %v2787 = vadd.f32 0.0, %v2786
      %2788 = vmatprep.mubr.bf16.mxu0 0
      %2789 = vmatmul.mubr.bf16.gmra.mrb[0].mxu0 %v364
      %v2790 = vpop.f32.mrb[0].mxu0
      %v2791 = vadd.f32 0.0, %v2790
      %v2792 = vpop.f32.mrb[0].mxu0
      %v2793 = vadd.f32 0.0, %v2792
      %v2794 = vpop.f32.mrb[0].mxu0
      %v2795 = vadd.f32 0.0, %v2794
      %v2796 = vpop.f32.mrb[0].mxu0
      %v2797 = vadd.f32 0.0, %v2796
      %2798 = vmatprep.mubr.bf16.mxu0 0
      %2799 = vmatmul.mubr.bf16.gmra.mrb[0].mxu0 %v367
      %v2800 = vpop.f32.mrb[0].mxu0
      %v2801 = vadd.f32 0.0, %v2800
      %v2802 = vpop.f32.mrb[0].mxu0
      %v2803 = vadd.f32 0.0, %v2802
      %v2804 = vpop.f32.mrb[0].mxu0
      %v2805 = vadd.f32 0.0, %v2804
      %v2806 = vpop.f32.mrb[0].mxu0
      %v2807 = vadd.f32 0.0, %v2806
      %2808 = vmatprep.mubr.bf16.mxu0 0
      %2809 = vmatmul.mubr.bf16.gmra.mrb[0].mxu0 %v370
      %v2810 = vpop.f32.mrb[0].mxu0
      %v2811 = vadd.f32 0.0, %v2810
      %v2812 = vpop.f32.mrb[0].mxu0
      %v2813 = vadd.f32 0.0, %v2812
      %v2814 = vpop.f32.mrb[0].mxu0
      %v2815 = vadd.f32 0.0, %v2814
      %v2816 = vpop.f32.mrb[0].mxu0
      %v2817 = vadd.f32 0.0, %v2816
      %2818 = vmatprep.mubr.bf16.mxu0 0
      %2819 = vmatmul.mubr.bf16.gmra.mrb[0].mxu0 %v373
      %v2820 = vpop.f32.mrb[0].mxu0
      %v2821 = vadd.f32 0.0, %v2820
      %v2822 = vpop.f32.mrb[0].mxu0
      %v2823 = vadd.f32 0.0, %v2822
      %v2824 = vpop.f32.mrb[0].mxu0
      %v2825 = vadd.f32 0.0, %v2824
      %v2826 = vpop.f32.mrb[0].mxu0
      %v2827 = vadd.f32 0.0, %v2826
      %2828 = vmatprep.mubr.bf16.mxu0 0
      %2829 = vmatmul.mubr.bf16.gmra.mrb[0].mxu0 %v376
      %v2830 = vpop.f32.mrb[0].mxu0
      %v2831 = vadd.f32 0.0, %v2830
      %v2832 = vpop.f32.mrb[0].mxu0
      %v2833 = vadd.f32 0.0, %v2832
      %v2834 = vpop.f32.mrb[0].mxu0
      %v2835 = vadd.f32 0.0, %v2834
      %v2836 = vpop.f32.mrb[0].mxu0
      %v2837 = vadd.f32 0.0, %v2836
      %2838 = vmatprep.mubr.bf16.mxu0 0
      %2839 = vmatmul.mubr.bf16.gmra.mrb[0].mxu0 %v379
      %v2840 = vpop.f32.mrb[0].mxu0
      %v2841 = vadd.f32 0.0, %v2840
      %v2842 = vpop.f32.mrb[0].mxu0
      %v2843 = vadd.f32 0.0, %v2842
      %v2844 = vpop.f32.mrb[0].mxu0
      %v2845 = vadd.f32 0.0, %v2844
      %v2846 = vpop.f32.mrb[0].mxu0
      %v2847 = vadd.f32 0.0, %v2846
      %2848 = vmatprep.mubr.bf16.mxu0 0
      %2849 = vmatmul.mubr.bf16.gmra.mrb[0].mxu0 %v382
      %v2850 = vpop.f32.mrb[0].mxu0
      %v2851 = vadd.f32 0.0, %v2850
      %v2852 = vpop.f32.mrb[0].mxu0
      %v2853 = vadd.f32 0.0, %v2852
      %v2854 = vpop.f32.mrb[0].mxu0
      %v2855 = vadd.f32 0.0, %v2854
      %v2856 = vpop.f32.mrb[0].mxu0
      %v2857 = vadd.f32 0.0, %v2856
      %2858 = vmatprep.mubr.bf16.mxu0 0
      %2859 = vmatmul.mubr.bf16.gmra.mrb[0].mxu0 %v385
      %v2860 = vpop.f32.mrb[0].mxu0
      %v2861 = vadd.f32 0.0, %v2860
      %v2862 = vpop.f32.mrb[0].mxu0
      %v2863 = vadd.f32 0.0, %v2862
      %v2864 = vpop.f32.mrb[0].mxu0
      %v2865 = vadd.f32 0.0, %v2864
      %v2866 = vpop.f32.mrb[0].mxu0
      %v2867 = vadd.f32 0.0, %v2866
      %2868 = vmatprep.mubr.bf16.mxu0 0
      %2869 = vmatmul.mubr.bf16.gmra.mrb[0].mxu0 %v388
      %v2870 = vpop.f32.mrb[0].mxu0
      %v2871 = vadd.f32 0.0, %v2870
      %v2872 = vpop.f32.mrb[0].mxu0
      %v2873 = vadd.f32 0.0, %v2872
      %v2874 = vpop.f32.mrb[0].mxu0
      %v2875 = vadd.f32 0.0, %v2874
      %v2876 = vpop.f32.mrb[0].mxu0
      %v2877 = vadd.f32 0.0, %v2876
      %2878 = vmatprep.mubr.bf16.mxu0 0
      %2879 = vmatmul.mubr.bf16.gmra.mrb[0].mxu0 %v391
      %v2880 = vpop.f32.mrb[0].mxu0
      %v2881 = vadd.f32 0.0, %v2880
      %v2882 = vpop.f32.mrb[0].mxu0
      %v2883 = vadd.f32 0.0, %v2882
      %v2884 = vpop.f32.mrb[0].mxu0
      %v2885 = vadd.f32 0.0, %v2884
      %v2886 = vpop.f32.mrb[0].mxu0
      %v2887 = vadd.f32 0.0, %v2886
      %2888 = vmatprep.mubr.bf16.mxu0 0
      %2889 = vmatmul.mubr.bf16.gmra.mrb[0].mxu0 %v394
      %v2890 = vpop.f32.mrb[0].mxu0
      %v2891 = vadd.f32 0.0, %v2890
      %v2892 = vpop.f32.mrb[0].mxu0
      %v2893 = vadd.f32 0.0, %v2892
      %v2894 = vpop.f32.mrb[0].mxu0
      %v2895 = vadd.f32 0.0, %v2894
      %v2896 = vpop.f32.mrb[0].mxu0
      %v2897 = vadd.f32 0.0, %v2896
      %2898 = vmatprep.mubr.bf16.mxu0 0
      %2899 = vmatmul.mubr.bf16.gmra.mrb[0].mxu0 %v397
      %v2900 = vpop.f32.mrb[0].mxu0
      %v2901 = vadd.f32 0.0, %v2900
      %v2902 = vpop.f32.mrb[0].mxu0
      %v2903 = vadd.f32 0.0, %v2902
      %v2904 = vpop.f32.mrb[0].mxu0
      %v2905 = vadd.f32 0.0, %v2904
      %v2906 = vpop.f32.mrb[0].mxu0
      %v2907 = vadd.f32 0.0, %v2906
      %2908 = vmatprep.mubr.bf16.mxu0 0
      %2909 = vmatmul.mubr.bf16.gmra.mrb[0].mxu0 %v400
      %v2910 = vpop.f32.mrb[0].mxu0
      %v2911 = vadd.f32 0.0, %v2910
      %v2912 = vpop.f32.mrb[0].mxu0
      %v2913 = vadd.f32 0.0, %v2912
      %v2914 = vpop.f32.mrb[0].mxu0
      %v2915 = vadd.f32 0.0, %v2914
      %v2916 = vpop.f32.mrb[0].mxu0
      %v2917 = vadd.f32 0.0, %v2916
      %2918 = vdwg.mxu0
      %v2951 = vunpack.c.l.b16 %v2678
      %v2952 = vunpack.c.h.b16 %v2678
      %v2953 = vunpack.c.l.b16 %v2679
      %v2954 = vunpack.c.h.b16 %v2679
      %v2955 = vunpack.c.l.b16 %v2680
      %v2956 = vunpack.c.h.b16 %v2680
      %v2957 = vunpack.c.l.b16 %v2681
      %v2958 = vunpack.c.h.b16 %v2681
      %v2959 = vunpack.c.l.b16 %v2682
      %v2960 = vunpack.c.h.b16 %v2682
      %v2961 = vunpack.c.l.b16 %v2683
      %v2962 = vunpack.c.h.b16 %v2683
      %v2963 = vunpack.c.l.b16 %v2684
      %v2964 = vunpack.c.h.b16 %v2684
      %v2965 = vunpack.c.l.b16 %v2685
      %v2966 = vunpack.c.h.b16 %v2685
      %v2967 = vunpack.c.l.b16 %v2686
      %v2968 = vunpack.c.h.b16 %v2686
      %v2969 = vunpack.c.l.b16 %v2687
      %v2970 = vunpack.c.h.b16 %v2687
      %v2971 = vunpack.c.l.b16 %v2688
      %v2972 = vunpack.c.h.b16 %v2688
      %v2973 = vunpack.c.l.b16 %v2689
      %v2974 = vunpack.c.h.b16 %v2689
      %v2975 = vunpack.c.l.b16 %v2690
      %v2976 = vunpack.c.h.b16 %v2690
      %v2977 = vunpack.c.l.b16 %v2691
      %v2978 = vunpack.c.h.b16 %v2691
      %v2979 = vunpack.c.l.b16 %v2692
      %v2980 = vunpack.c.h.b16 %v2692
      %v2981 = vunpack.c.l.b16 %v2693
      %v2982 = vunpack.c.h.b16 %v2693
      %v2983 = vunpack.c.l.b16 %v2694
      %v2984 = vunpack.c.h.b16 %v2694
      %v2985 = vunpack.c.l.b16 %v2695
      %v2986 = vunpack.c.h.b16 %v2695
      %v2987 = vunpack.c.l.b16 %v2696
      %v2988 = vunpack.c.h.b16 %v2696
      %v2989 = vunpack.c.l.b16 %v2697
      %v2990 = vunpack.c.h.b16 %v2697
      %v2991 = vunpack.c.l.b16 %v2698
      %v2992 = vunpack.c.h.b16 %v2698
      %v2993 = vunpack.c.l.b16 %v2699
      %v2994 = vunpack.c.h.b16 %v2699
      %v2995 = vunpack.c.l.b16 %v2700
      %v2996 = vunpack.c.h.b16 %v2700
      %v2997 = vunpack.c.l.b16 %v2701
      %v2998 = vunpack.c.h.b16 %v2701
      %v2999 = vunpack.c.l.b16 %v2702
      %v3000 = vunpack.c.h.b16 %v2702
      %v3001 = vunpack.c.l.b16 %v2703
      %v3002 = vunpack.c.h.b16 %v2703
      %v3003 = vunpack.c.l.b16 %v2704
      %v3004 = vunpack.c.h.b16 %v2704
      %v3005 = vunpack.c.l.b16 %v2705
      %v3006 = vunpack.c.h.b16 %v2705
      %v3007 = vunpack.c.l.b16 %v2706
      %v3008 = vunpack.c.h.b16 %v2706
      %v3009 = vunpack.c.l.b16 %v2707
      %v3010 = vunpack.c.h.b16 %v2707
      %v3011 = vunpack.c.l.b16 %v2708
      %v3012 = vunpack.c.h.b16 %v2708
      %v3013 = vunpack.c.l.b16 %v2709
      %v3014 = vunpack.c.h.b16 %v2709
      %v3015 = vpack.c.b16 %v2953, %v2951
      %v3016 = vpack.c.b16 %v2954, %v2952
      %v3017 = vpack.c.b16 %v2957, %v2955
      %v3018 = vpack.c.b16 %v2958, %v2956
      %v3019 = vpack.c.b16 %v2961, %v2959
      %v3020 = vpack.c.b16 %v2962, %v2960
      %v3021 = vpack.c.b16 %v2965, %v2963
      %v3022 = vpack.c.b16 %v2966, %v2964
      %v3023 = vpack.c.b16 %v2969, %v2967
      %v3024 = vpack.c.b16 %v2970, %v2968
      %v3025 = vpack.c.b16 %v2973, %v2971
      %v3026 = vpack.c.b16 %v2974, %v2972
      %v3027 = vpack.c.b16 %v2977, %v2975
      %v3028 = vpack.c.b16 %v2978, %v2976
      %v3029 = vpack.c.b16 %v2981, %v2979
      %v3030 = vpack.c.b16 %v2982, %v2980
      %v3031 = vpack.c.b16 %v2985, %v2983
      %v3032 = vpack.c.b16 %v2986, %v2984
      %v3033 = vpack.c.b16 %v2989, %v2987
      %v3034 = vpack.c.b16 %v2990, %v2988
      %v3035 = vpack.c.b16 %v2993, %v2991
      %v3036 = vpack.c.b16 %v2994, %v2992
      %v3037 = vpack.c.b16 %v2997, %v2995
      %v3038 = vpack.c.b16 %v2998, %v2996
      %v3039 = vpack.c.b16 %v3001, %v2999
      %v3040 = vpack.c.b16 %v3002, %v3000
      %v3041 = vpack.c.b16 %v3005, %v3003
      %v3042 = vpack.c.b16 %v3006, %v3004
      %v3043 = vpack.c.b16 %v3009, %v3007
      %v3044 = vpack.c.b16 %v3010, %v3008
      %v3045 = vpack.c.b16 %v3013, %v3011
      %v3046 = vpack.c.b16 %v3014, %v3012
      %3079 = vmatprep.subr.bf16.mxu0 %v3016
      %3080 = vmatpush1.bf16.msra.mxu0 %v3015
      %3081 = vmatprep.subr.bf16.mxu0 %v3018
      %3082 = vmatpush1.bf16.msra.mxu0 %v3017
      %3083 = vmatprep.subr.bf16.mxu0 %v3020
      %3084 = vmatpush1.bf16.msra.mxu0 %v3019
      %3085 = vmatprep.subr.bf16.mxu0 %v3022
      %3086 = vmatpush1.bf16.msra.mxu0 %v3021
      %3087 = vmatprep.subr.bf16.mxu0 %v3024
      %3088 = vmatpush1.bf16.msra.mxu0 %v3023
      %3089 = vmatprep.subr.bf16.mxu0 %v3026
      %3090 = vmatpush1.bf16.msra.mxu0 %v3025
      %3091 = vmatprep.subr.bf16.mxu0 %v3028
      %3092 = vmatpush1.bf16.msra.mxu0 %v3027
      %3093 = vmatprep.subr.bf16.mxu0 %v3030
      %3094 = vmatpush1.bf16.msra.mxu0 %v3029
      %3095 = vmatprep.subr.bf16.mxu0 %v3032
      %3096 = vmatpush1.bf16.msra.mxu0 %v3031
      %3097 = vmatprep.subr.bf16.mxu0 %v3034
      %3098 = vmatpush1.bf16.msra.mxu0 %v3033
      %3099 = vmatprep.subr.bf16.mxu0 %v3036
      %3100 = vmatpush1.bf16.msra.mxu0 %v3035
      %3101 = vmatprep.subr.bf16.mxu0 %v3038
      %3102 = vmatpush1.bf16.msra.mxu0 %v3037
      %3103 = vmatprep.subr.bf16.mxu0 %v3040
      %3104 = vmatpush1.bf16.msra.mxu0 %v3039
      %3105 = vmatprep.subr.bf16.mxu0 %v3042
      %3106 = vmatpush1.bf16.msra.mxu0 %v3041
      %3107 = vmatprep.subr.bf16.mxu0 %v3044
      %3108 = vmatpush1.bf16.msra.mxu0 %v3043
      %3109 = vmatprep.subr.bf16.mxu0 %v3046
      %3110 = vmatpush1.bf16.msra.mxu0 %v3045
      %3111 = vmatprep.mubr.bf16.mxu0 %v2646
      %3112 = vmatmul.mubr.bf16.gmra.mrb[0].mxu0 %v2645
      %v3113 = vpop.f32.mrb[0].mxu0
      %v3114 = vadd.f32 %v2761, %v3113
      %v3115 = vpop.f32.mrb[0].mxu0
      %v3116 = vadd.f32 %v2763, %v3115
      %v3117 = vpop.f32.mrb[0].mxu0
      %v3118 = vadd.f32 %v2765, %v3117
      %v3119 = vpop.f32.mrb[0].mxu0
      %v3120 = vadd.f32 %v2767, %v3119
      %3121 = vmatprep.mubr.bf16.mxu0 %v2648
      %3122 = vmatmul.mubr.bf16.gmra.mrb[0].mxu0 %v2647
      %v3123 = vpop.f32.mrb[0].mxu0
      %v3124 = vadd.f32 %v2771, %v3123
      %v3125 = vpop.f32.mrb[0].mxu0
      %v3126 = vadd.f32 %v2773, %v3125
      %v3127 = vpop.f32.mrb[0].mxu0
      %v3128 = vadd.f32 %v2775, %v3127
      %v3129 = vpop.f32.mrb[0].mxu0
      %v3130 = vadd.f32 %v2777, %v3129
      %3131 = vmatprep.mubr.bf16.mxu0 %v2650
      %3132 = vmatmul.mubr.bf16.gmra.mrb[0].mxu0 %v2649
      %v3133 = vpop.f32.mrb[0].mxu0
      %v3134 = vadd.f32 %v2781, %v3133
      %v3135 = vpop.f32.mrb[0].mxu0
      %v3136 = vadd.f32 %v2783, %v3135
      %v3137 = vpop.f32.mrb[0].mxu0
      %v3138 = vadd.f32 %v2785, %v3137
      %v3139 = vpop.f32.mrb[0].mxu0
      %v3140 = vadd.f32 %v2787, %v3139
      %3141 = vmatprep.mubr.bf16.mxu0 %v2652
      %3142 = vmatmul.mubr.bf16.gmra.mrb[0].mxu0 %v2651
      %v3143 = vpop.f32.mrb[0].mxu0
      %v3144 = vadd.f32 %v2791, %v3143
      %v3145 = vpop.f32.mrb[0].mxu0
      %v3146 = vadd.f32 %v2793, %v3145
      %v3147 = vpop.f32.mrb[0].mxu0
      %v3148 = vadd.f32 %v2795, %v3147
      %v3149 = vpop.f32.mrb[0].mxu0
      %v3150 = vadd.f32 %v2797, %v3149
      %3151 = vmatprep.mubr.bf16.mxu0 %v2654
      %3152 = vmatmul.mubr.bf16.gmra.mrb[0].mxu0 %v2653
      %v3153 = vpop.f32.mrb[0].mxu0
      %v3154 = vadd.f32 %v2801, %v3153
      %v3155 = vpop.f32.mrb[0].mxu0
      %v3156 = vadd.f32 %v2803, %v3155
      %v3157 = vpop.f32.mrb[0].mxu0
      %v3158 = vadd.f32 %v2805, %v3157
      %v3159 = vpop.f32.mrb[0].mxu0
      %v3160 = vadd.f32 %v2807, %v3159
      %3161 = vmatprep.mubr.bf16.mxu0 %v2656
      %3162 = vmatmul.mubr.bf16.gmra.mrb[0].mxu0 %v2655
      %v3163 = vpop.f32.mrb[0].mxu0
      %v3164 = vadd.f32 %v2811, %v3163
      %v3165 = vpop.f32.mrb[0].mxu0
      %v3166 = vadd.f32 %v2813, %v3165
      %v3167 = vpop.f32.mrb[0].mxu0
      %v3168 = vadd.f32 %v2815, %v3167
      %v3169 = vpop.f32.mrb[0].mxu0
      %v3170 = vadd.f32 %v2817, %v3169
      %3171 = vmatprep.mubr.bf16.mxu0 %v2658
      %3172 = vmatmul.mubr.bf16.gmra.mrb[0].mxu0 %v2657
      %v3173 = vpop.f32.mrb[0].mxu0
      %v3174 = vadd.f32 %v2821, %v3173
      %v3175 = vpop.f32.mrb[0].mxu0
      %v3176 = vadd.f32 %v2823, %v3175
      %v3177 = vpop.f32.mrb[0].mxu0
      %v3178 = vadd.f32 %v2825, %v3177
      %v3179 = vpop.f32.mrb[0].mxu0
      %v3180 = vadd.f32 %v2827, %v3179
      %3181 = vmatprep.mubr.bf16.mxu0 %v2660
      %3182 = vmatmul.mubr.bf16.gmra.mrb[0].mxu0 %v2659
      %v3183 = vpop.f32.mrb[0].mxu0
      %v3184 = vadd.f32 %v2831, %v3183
      %v3185 = vpop.f32.mrb[0].mxu0
      %v3186 = vadd.f32 %v2833, %v3185
      %v3187 = vpop.f32.mrb[0].mxu0
      %v3188 = vadd.f32 %v2835, %v3187
      %v3189 = vpop.f32.mrb[0].mxu0
      %v3190 = vadd.f32 %v2837, %v3189
      %3191 = vmatprep.mubr.bf16.mxu0 %v2662
      %3192 = vmatmul.mubr.bf16.gmra.mrb[0].mxu0 %v2661
      %v3193 = vpop.f32.mrb[0].mxu0
      %v3194 = vadd.f32 %v2841, %v3193
      %v3195 = vpop.f32.mrb[0].mxu0
      %v3196 = vadd.f32 %v2843, %v3195
      %v3197 = vpop.f32.mrb[0].mxu0
      %v3198 = vadd.f32 %v2845, %v3197
      %v3199 = vpop.f32.mrb[0].mxu0
      %v3200 = vadd.f32 %v2847, %v3199
      %3201 = vmatprep.mubr.bf16.mxu0 %v2664
      %3202 = vmatmul.mubr.bf16.gmra.mrb[0].mxu0 %v2663
      %v3203 = vpop.f32.mrb[0].mxu0
      %v3204 = vadd.f32 %v2851, %v3203
      %v3205 = vpop.f32.mrb[0].mxu0
      %v3206 = vadd.f32 %v2853, %v3205
      %v3207 = vpop.f32.mrb[0].mxu0
      %v3208 = vadd.f32 %v2855, %v3207
      %v3209 = vpop.f32.mrb[0].mxu0
      %v3210 = vadd.f32 %v2857, %v3209
      %3211 = vmatprep.mubr.bf16.mxu0 %v2666
      %3212 = vmatmul.mubr.bf16.gmra.mrb[0].mxu0 %v2665
      %v3213 = vpop.f32.mrb[0].mxu0
      %v3214 = vadd.f32 %v2861, %v3213
      %v3215 = vpop.f32.mrb[0].mxu0
      %v3216 = vadd.f32 %v2863, %v3215
      %v3217 = vpop.f32.mrb[0].mxu0
      %v3218 = vadd.f32 %v2865, %v3217
      %v3219 = vpop.f32.mrb[0].mxu0
      %v3220 = vadd.f32 %v2867, %v3219
      %3221 = vmatprep.mubr.bf16.mxu0 %v2668
      %3222 = vmatmul.mubr.bf16.gmra.mrb[0].mxu0 %v2667
      %v3223 = vpop.f32.mrb[0].mxu0
      %v3224 = vadd.f32 %v2871, %v3223
      %v3225 = vpop.f32.mrb[0].mxu0
      %v3226 = vadd.f32 %v2873, %v3225
      %v3227 = vpop.f32.mrb[0].mxu0
      %v3228 = vadd.f32 %v2875, %v3227
      %v3229 = vpop.f32.mrb[0].mxu0
      %v3230 = vadd.f32 %v2877, %v3229
      %3231 = vmatprep.mubr.bf16.mxu0 %v2670
      %3232 = vmatmul.mubr.bf16.gmra.mrb[0].mxu0 %v2669
      %v3233 = vpop.f32.mrb[0].mxu0
      %v3234 = vadd.f32 %v2881, %v3233
      %v3235 = vpop.f32.mrb[0].mxu0
      %v3236 = vadd.f32 %v2883, %v3235
      %v3237 = vpop.f32.mrb[0].mxu0
      %v3238 = vadd.f32 %v2885, %v3237
      %v3239 = vpop.f32.mrb[0].mxu0
      %v3240 = vadd.f32 %v2887, %v3239
      %3241 = vmatprep.mubr.bf16.mxu0 %v2672
      %3242 = vmatmul.mubr.bf16.gmra.mrb[0].mxu0 %v2671
      %v3243 = vpop.f32.mrb[0].mxu0
      %v3244 = vadd.f32 %v2891, %v3243
      %v3245 = vpop.f32.mrb[0].mxu0
      %v3246 = vadd.f32 %v2893, %v3245
      %v3247 = vpop.f32.mrb[0].mxu0
      %v3248 = vadd.f32 %v2895, %v3247
      %v3249 = vpop.f32.mrb[0].mxu0
      %v3250 = vadd.f32 %v2897, %v3249
      %3251 = vmatprep.mubr.bf16.mxu0 %v2674
      %3252 = vmatmul.mubr.bf16.gmra.mrb[0].mxu0 %v2673
      %v3253 = vpop.f32.mrb[0].mxu0
      %v3254 = vadd.f32 %v2901, %v3253
      %v3255 = vpop.f32.mrb[0].mxu0
      %v3256 = vadd.f32 %v2903, %v3255
      %v3257 = vpop.f32.mrb[0].mxu0
      %v3258 = vadd.f32 %v2905, %v3257
      %v3259 = vpop.f32.mrb[0].mxu0
      %v3260 = vadd.f32 %v2907, %v3259
      %3261 = vmatprep.mubr.bf16.mxu0 %v2676
      %3262 = vmatmul.mubr.bf16.gmra.mrb[0].mxu0 %v2675
      %v3263 = vpop.f32.mrb[0].mxu0
      %v3264 = vadd.f32 %v2911, %v3263
      %v3265 = vpop.f32.mrb[0].mxu0
      %v3266 = vadd.f32 %v2913, %v3265
      %v3267 = vpop.f32.mrb[0].mxu0
      %v3268 = vadd.f32 %v2915, %v3267
      %v3269 = vpop.f32.mrb[0].mxu0
      %v3270 = vadd.f32 %v2917, %v3269
      %3271 = vdwg.mxu0
      %s3272 = scalar_lea.vmem %s4, 5
      %v3273 = vld [vmem:[%s3272] ss:$8 sm:$0x3]
      %v3275 = vlaneseq
      %v3276 = vshrl.u32 %v3275, 7
      %v3277 = vsub.s32 0, %v3276
      %v3278 = vrot.slane %v3273, %v3277
      %v3279 = vlaneseq
      %v3280 = vshrl.u32 %v3279, 7
      %v3281 = vsub.s32 1, %v3280
      %v3282 = vrot.slane %v3273, %v3281
      %v3285 = vadd.f32 %v3114, %v3278
      %v3286 = vadd.f32 %v3116, %v3282
      %v3287 = vadd.f32 %v3118, %v3278
      %v3288 = vadd.f32 %v3120, %v3282
      %v3289 = vadd.f32 %v3124, %v3278
      %v3290 = vadd.f32 %v3126, %v3282
      %v3291 = vadd.f32 %v3128, %v3278
      %v3292 = vadd.f32 %v3130, %v3282
      %v3293 = vadd.f32 %v3134, %v3278
      %v3294 = vadd.f32 %v3136, %v3282
      %v3295 = vadd.f32 %v3138, %v3278
      %v3296 = vadd.f32 %v3140, %v3282
      %v3297 = vadd.f32 %v3144, %v3278
      %v3298 = vadd.f32 %v3146, %v3282
      %v3299 = vadd.f32 %v3148, %v3278
      %v3300 = vadd.f32 %v3150, %v3282
      %v3301 = vadd.f32 %v3154, %v3278
      %v3302 = vadd.f32 %v3156, %v3282
      %v3303 = vadd.f32 %v3158, %v3278
      %v3304 = vadd.f32 %v3160, %v3282
      %v3305 = vadd.f32 %v3164, %v3278
      %v3306 = vadd.f32 %v3166, %v3282
      %v3307 = vadd.f32 %v3168, %v3278
      %v3308 = vadd.f32 %v3170, %v3282
      %v3309 = vadd.f32 %v3174, %v3278
      %v3310 = vadd.f32 %v3176, %v3282
      %v3311 = vadd.f32 %v3178, %v3278
      %v3312 = vadd.f32 %v3180, %v3282
      %v3313 = vadd.f32 %v3184, %v3278
      %v3314 = vadd.f32 %v3186, %v3282
      %v3315 = vadd.f32 %v3188, %v3278
      %v3316 = vadd.f32 %v3190, %v3282
      %v3317 = vadd.f32 %v3194, %v3278
      %v3318 = vadd.f32 %v3196, %v3282
      %v3319 = vadd.f32 %v3198, %v3278
      %v3320 = vadd.f32 %v3200, %v3282
      %v3321 = vadd.f32 %v3204, %v3278
      %v3322 = vadd.f32 %v3206, %v3282
      %v3323 = vadd.f32 %v3208, %v3278
      %v3324 = vadd.f32 %v3210, %v3282
      %v3325 = vadd.f32 %v3214, %v3278
      %v3326 = vadd.f32 %v3216, %v3282
      %v3327 = vadd.f32 %v3218, %v3278
      %v3328 = vadd.f32 %v3220, %v3282
      %v3329 = vadd.f32 %v3224, %v3278
      %v3330 = vadd.f32 %v3226, %v3282
      %v3331 = vadd.f32 %v3228, %v3278
      %v3332 = vadd.f32 %v3230, %v3282
      %v3333 = vadd.f32 %v3234, %v3278
      %v3334 = vadd.f32 %v3236, %v3282
      %v3335 = vadd.f32 %v3238, %v3278
      %v3336 = vadd.f32 %v3240, %v3282
      %v3337 = vadd.f32 %v3244, %v3278
      %v3338 = vadd.f32 %v3246, %v3282
      %v3339 = vadd.f32 %v3248, %v3278
      %v3340 = vadd.f32 %v3250, %v3282
      %v3341 = vadd.f32 %v3254, %v3278
      %v3342 = vadd.f32 %v3256, %v3282
      %v3343 = vadd.f32 %v3258, %v3278
      %v3344 = vadd.f32 %v3260, %v3282
      %v3345 = vadd.f32 %v3264, %v3278
      %v3346 = vadd.f32 %v3266, %v3282
      %v3347 = vadd.f32 %v3268, %v3278
      %v3348 = vadd.f32 %v3270, %v3282
      %v3349 = vmax.f32 %v3285, 0.0
      %v3350 = vmax.f32 %v3286, 0.0
      %v3351 = vmax.f32 %v3287, 0.0
      %v3352 = vmax.f32 %v3288, 0.0
      %v3353 = vmax.f32 %v3289, 0.0
      %v3354 = vmax.f32 %v3290, 0.0
      %v3355 = vmax.f32 %v3291, 0.0
      %v3356 = vmax.f32 %v3292, 0.0
      %v3357 = vmax.f32 %v3293, 0.0
      %v3358 = vmax.f32 %v3294, 0.0
      %v3359 = vmax.f32 %v3295, 0.0
      %v3360 = vmax.f32 %v3296, 0.0
      %v3361 = vmax.f32 %v3297, 0.0
      %v3362 = vmax.f32 %v3298, 0.0
      %v3363 = vmax.f32 %v3299, 0.0
      %v3364 = vmax.f32 %v3300, 0.0
      %v3365 = vmax.f32 %v3301, 0.0
      %v3366 = vmax.f32 %v3302, 0.0
      %v3367 = vmax.f32 %v3303, 0.0
      %v3368 = vmax.f32 %v3304, 0.0
      %v3369 = vmax.f32 %v3305, 0.0
      %v3370 = vmax.f32 %v3306, 0.0
      %v3371 = vmax.f32 %v3307, 0.0
      %v3372 = vmax.f32 %v3308, 0.0
      %v3373 = vmax.f32 %v3309, 0.0
      %v3374 = vmax.f32 %v3310, 0.0
      %v3375 = vmax.f32 %v3311, 0.0
      %v3376 = vmax.f32 %v3312, 0.0
      %v3377 = vmax.f32 %v3313, 0.0
      %v3378 = vmax.f32 %v3314, 0.0
      %v3379 = vmax.f32 %v3315, 0.0
      %v3380 = vmax.f32 %v3316, 0.0
      %v3381 = vmax.f32 %v3317, 0.0
      %v3382 = vmax.f32 %v3318, 0.0
      %v3383 = vmax.f32 %v3319, 0.0
      %v3384 = vmax.f32 %v3320, 0.0
      %v3385 = vmax.f32 %v3321, 0.0
      %v3386 = vmax.f32 %v3322, 0.0
      %v3387 = vmax.f32 %v3323, 0.0
      %v3388 = vmax.f32 %v3324, 0.0
      %v3389 = vmax.f32 %v3325, 0.0
      %v3390 = vmax.f32 %v3326, 0.0
      %v3391 = vmax.f32 %v3327, 0.0
      %v3392 = vmax.f32 %v3328, 0.0
      %v3393 = vmax.f32 %v3329, 0.0
      %v3394 = vmax.f32 %v3330, 0.0
      %v3395 = vmax.f32 %v3331, 0.0
      %v3396 = vmax.f32 %v3332, 0.0
      %v3397 = vmax.f32 %v3333, 0.0
      %v3398 = vmax.f32 %v3334, 0.0
      %v3399 = vmax.f32 %v3335, 0.0
      %v3400 = vmax.f32 %v3336, 0.0
      %v3401 = vmax.f32 %v3337, 0.0
      %v3402 = vmax.f32 %v3338, 0.0
      %v3403 = vmax.f32 %v3339, 0.0
      %v3404 = vmax.f32 %v3340, 0.0
      %v3405 = vmax.f32 %v3341, 0.0
      %v3406 = vmax.f32 %v3342, 0.0
      %v3407 = vmax.f32 %v3343, 0.0
      %v3408 = vmax.f32 %v3344, 0.0
      %v3409 = vmax.f32 %v3345, 0.0
      %v3410 = vmax.f32 %v3346, 0.0
      %v3411 = vmax.f32 %v3347, 0.0
      %v3412 = vmax.f32 %v3348, 0.0
      %v3413 = vpack.c.bf16 %v3351, %v3349
      %v3414 = vpack.c.bf16 %v3352, %v3350
      %v3415 = vpack.c.bf16 %v3355, %v3353
      %v3416 = vpack.c.bf16 %v3356, %v3354
      %v3417 = vpack.c.bf16 %v3359, %v3357
      %v3418 = vpack.c.bf16 %v3360, %v3358
      %v3419 = vpack.c.bf16 %v3363, %v3361
      %v3420 = vpack.c.bf16 %v3364, %v3362
      %v3421 = vpack.c.bf16 %v3367, %v3365
      %v3422 = vpack.c.bf16 %v3368, %v3366
      %v3423 = vpack.c.bf16 %v3371, %v3369
      %v3424 = vpack.c.bf16 %v3372, %v3370
      %v3425 = vpack.c.bf16 %v3375, %v3373
      %v3426 = vpack.c.bf16 %v3376, %v3374
      %v3427 = vpack.c.bf16 %v3379, %v3377
      %v3428 = vpack.c.bf16 %v3380, %v3378
      %v3429 = vpack.c.bf16 %v3383, %v3381
      %v3430 = vpack.c.bf16 %v3384, %v3382
      %v3431 = vpack.c.bf16 %v3387, %v3385
      %v3432 = vpack.c.bf16 %v3388, %v3386
      %v3433 = vpack.c.bf16 %v3391, %v3389
      %v3434 = vpack.c.bf16 %v3392, %v3390
      %v3435 = vpack.c.bf16 %v3395, %v3393
      %v3436 = vpack.c.bf16 %v3396, %v3394
      %v3437 = vpack.c.bf16 %v3399, %v3397
      %v3438 = vpack.c.bf16 %v3400, %v3398
      %v3439 = vpack.c.bf16 %v3403, %v3401
      %v3440 = vpack.c.bf16 %v3404, %v3402
      %v3441 = vpack.c.bf16 %v3407, %v3405
      %v3442 = vpack.c.bf16 %v3408, %v3406
      %v3443 = vpack.c.bf16 %v3411, %v3409
      %v3444 = vpack.c.bf16 %v3412, %v3410
      %s3445 = scalar_lea.vmem %s3, 1280
      %v3446 = vld [vmem:[%s3445] sm:$0xff]
      %v3447 = vld [vmem:[%s3445 + $0x8] sm:$0xff]
      %v3448 = vld [vmem:[%s3445 + $0x10] sm:$0xff]
      %v3449 = vld [vmem:[%s3445 + $0x18] sm:$0xff]
      %v3450 = vld [vmem:[%s3445 + $0x20] sm:$0xff]
      %v3451 = vld [vmem:[%s3445 + $0x28] sm:$0xff]
      %v3452 = vld [vmem:[%s3445 + $0x30] sm:$0xff]
      %v3453 = vld [vmem:[%s3445 + $0x38] sm:$0xff]
      %v3454 = vld [vmem:[%s3445 + $0x40] sm:$0xff]
      %v3455 = vld [vmem:[%s3445 + $0x48] sm:$0xff]
      %v3456 = vld [vmem:[%s3445 + $0x50] sm:$0xff]
      %v3457 = vld [vmem:[%s3445 + $0x58] sm:$0xff]
      %v3458 = vld [vmem:[%s3445 + $0x60] sm:$0xff]
      %v3459 = vld [vmem:[%s3445 + $0x68] sm:$0xff]
      %v3460 = vld [vmem:[%s3445 + $0x70] sm:$0xff]
      %v3461 = vld [vmem:[%s3445 + $0x78] sm:$0xff]
      %v3462 = vld [vmem:[%s3445 + $0x80] sm:$0xff]
      %v3463 = vld [vmem:[%s3445 + $0x88] sm:$0xff]
      %v3464 = vld [vmem:[%s3445 + $0x90] sm:$0xff]
      %v3465 = vld [vmem:[%s3445 + $0x98] sm:$0xff]
      %v3466 = vld [vmem:[%s3445 + $0xa0] sm:$0xff]
      %v3467 = vld [vmem:[%s3445 + $0xa8] sm:$0xff]
      %v3468 = vld [vmem:[%s3445 + $0xb0] sm:$0xff]
      %v3469 = vld [vmem:[%s3445 + $0xb8] sm:$0xff]
      %v3470 = vld [vmem:[%s3445 + $0xc0] sm:$0xff]
      %v3471 = vld [vmem:[%s3445 + $0xc8] sm:$0xff]
      %v3472 = vld [vmem:[%s3445 + $0xd0] sm:$0xff]
      %v3473 = vld [vmem:[%s3445 + $0xd8] sm:$0xff]
      %v3474 = vld [vmem:[%s3445 + $0xe0] sm:$0xff]
      %v3475 = vld [vmem:[%s3445 + $0xe8] sm:$0xff]
      %v3476 = vld [vmem:[%s3445 + $0xf0] sm:$0xff]
      %v3477 = vld [vmem:[%s3445 + $0xf8] sm:$0xff]
      %s3478 = scalar_lea.vmem %s4, 6
      %v3479 = vld [vmem:[%s3478] ss:$8 sm:$0x3]
      %v3481 = vlaneseq
      %v3482 = vshrl.u32 %v3481, 7
      %v3483 = vsub.s32 0, %v3482
      %v3484 = vrot.slane %v3479, %v3483
      %v3485 = vlaneseq
      %v3486 = vshrl.u32 %v3485, 7
      %v3487 = vsub.s32 1, %v3486
      %v3488 = vrot.slane %v3479, %v3487
      %v3523 = vunpack.c.l.b16 %v3446
      %v3524 = vunpack.c.h.b16 %v3446
      %v3525 = vunpack.c.l.b16 %v3447
      %v3526 = vunpack.c.h.b16 %v3447
      %v3527 = vunpack.c.l.b16 %v3448
      %v3528 = vunpack.c.h.b16 %v3448
      %v3529 = vunpack.c.l.b16 %v3449
      %v3530 = vunpack.c.h.b16 %v3449
      %v3531 = vunpack.c.l.b16 %v3450
      %v3532 = vunpack.c.h.b16 %v3450
      %v3533 = vunpack.c.l.b16 %v3451
      %v3534 = vunpack.c.h.b16 %v3451
      %v3535 = vunpack.c.l.b16 %v3452
      %v3536 = vunpack.c.h.b16 %v3452
      %v3537 = vunpack.c.l.b16 %v3453
      %v3538 = vunpack.c.h.b16 %v3453
      %v3539 = vunpack.c.l.b16 %v3454
      %v3540 = vunpack.c.h.b16 %v3454
      %v3541 = vunpack.c.l.b16 %v3455
      %v3542 = vunpack.c.h.b16 %v3455
      %v3543 = vunpack.c.l.b16 %v3456
      %v3544 = vunpack.c.h.b16 %v3456
      %v3545 = vunpack.c.l.b16 %v3457
      %v3546 = vunpack.c.h.b16 %v3457
      %v3547 = vunpack.c.l.b16 %v3458
      %v3548 = vunpack.c.h.b16 %v3458
      %v3549 = vunpack.c.l.b16 %v3459
      %v3550 = vunpack.c.h.b16 %v3459
      %v3551 = vunpack.c.l.b16 %v3460
      %v3552 = vunpack.c.h.b16 %v3460
      %v3553 = vunpack.c.l.b16 %v3461
      %v3554 = vunpack.c.h.b16 %v3461
      %v3555 = vunpack.c.l.b16 %v3462
      %v3556 = vunpack.c.h.b16 %v3462
      %v3557 = vunpack.c.l.b16 %v3463
      %v3558 = vunpack.c.h.b16 %v3463
      %v3559 = vunpack.c.l.b16 %v3464
      %v3560 = vunpack.c.h.b16 %v3464
      %v3561 = vunpack.c.l.b16 %v3465
      %v3562 = vunpack.c.h.b16 %v3465
      %v3563 = vunpack.c.l.b16 %v3466
      %v3564 = vunpack.c.h.b16 %v3466
      %v3565 = vunpack.c.l.b16 %v3467
      %v3566 = vunpack.c.h.b16 %v3467
      %v3567 = vunpack.c.l.b16 %v3468
      %v3568 = vunpack.c.h.b16 %v3468
      %v3569 = vunpack.c.l.b16 %v3469
      %v3570 = vunpack.c.h.b16 %v3469
      %v3571 = vunpack.c.l.b16 %v3470
      %v3572 = vunpack.c.h.b16 %v3470
      %v3573 = vunpack.c.l.b16 %v3471
      %v3574 = vunpack.c.h.b16 %v3471
      %v3575 = vunpack.c.l.b16 %v3472
      %v3576 = vunpack.c.h.b16 %v3472
      %v3577 = vunpack.c.l.b16 %v3473
      %v3578 = vunpack.c.h.b16 %v3473
      %v3579 = vunpack.c.l.b16 %v3474
      %v3580 = vunpack.c.h.b16 %v3474
      %v3581 = vunpack.c.l.b16 %v3475
      %v3582 = vunpack.c.h.b16 %v3475
      %v3583 = vunpack.c.l.b16 %v3476
      %v3584 = vunpack.c.h.b16 %v3476
      %v3585 = vunpack.c.l.b16 %v3477
      %v3586 = vunpack.c.h.b16 %v3477
      %v3587 = vpack.c.b16 %v3525, %v3523
      %v3588 = vpack.c.b16 %v3526, %v3524
      %v3589 = vpack.c.b16 %v3529, %v3527
      %v3590 = vpack.c.b16 %v3530, %v3528
      %v3591 = vpack.c.b16 %v3533, %v3531
      %v3592 = vpack.c.b16 %v3534, %v3532
      %v3593 = vpack.c.b16 %v3537, %v3535
      %v3594 = vpack.c.b16 %v3538, %v3536
      %v3595 = vpack.c.b16 %v3541, %v3539
      %v3596 = vpack.c.b16 %v3542, %v3540
      %v3597 = vpack.c.b16 %v3545, %v3543
      %v3598 = vpack.c.b16 %v3546, %v3544
      %v3599 = vpack.c.b16 %v3549, %v3547
      %v3600 = vpack.c.b16 %v3550, %v3548
      %v3601 = vpack.c.b16 %v3553, %v3551
      %v3602 = vpack.c.b16 %v3554, %v3552
      %v3603 = vpack.c.b16 %v3557, %v3555
      %v3604 = vpack.c.b16 %v3558, %v3556
      %v3605 = vpack.c.b16 %v3561, %v3559
      %v3606 = vpack.c.b16 %v3562, %v3560
      %v3607 = vpack.c.b16 %v3565, %v3563
      %v3608 = vpack.c.b16 %v3566, %v3564
      %v3609 = vpack.c.b16 %v3569, %v3567
      %v3610 = vpack.c.b16 %v3570, %v3568
      %v3611 = vpack.c.b16 %v3573, %v3571
      %v3612 = vpack.c.b16 %v3574, %v3572
      %v3613 = vpack.c.b16 %v3577, %v3575
      %v3614 = vpack.c.b16 %v3578, %v3576
      %v3615 = vpack.c.b16 %v3581, %v3579
      %v3616 = vpack.c.b16 %v3582, %v3580
      %v3617 = vpack.c.b16 %v3585, %v3583
      %v3618 = vpack.c.b16 %v3586, %v3584
      %3651 = vmatprep.subr.bf16.mxu0 %v3588
      %3652 = vmatpush1.bf16.msra.mxu0 %v3587
      %3653 = vmatprep.subr.bf16.mxu0 %v3590
      %3654 = vmatpush1.bf16.msra.mxu0 %v3589
      %3655 = vmatprep.subr.bf16.mxu0 %v3592
      %3656 = vmatpush1.bf16.msra.mxu0 %v3591
      %3657 = vmatprep.subr.bf16.mxu0 %v3594
      %3658 = vmatpush1.bf16.msra.mxu0 %v3593
      %3659 = vmatprep.subr.bf16.mxu0 %v3596
      %3660 = vmatpush1.bf16.msra.mxu0 %v3595
      %3661 = vmatprep.subr.bf16.mxu0 %v3598
      %3662 = vmatpush1.bf16.msra.mxu0 %v3597
      %3663 = vmatprep.subr.bf16.mxu0 %v3600
      %3664 = vmatpush1.bf16.msra.mxu0 %v3599
      %3665 = vmatprep.subr.bf16.mxu0 %v3602
      %3666 = vmatpush1.bf16.msra.mxu0 %v3601
      %3667 = vmatprep.subr.bf16.mxu0 %v3604
      %3668 = vmatpush1.bf16.msra.mxu0 %v3603
      %3669 = vmatprep.subr.bf16.mxu0 %v3606
      %3670 = vmatpush1.bf16.msra.mxu0 %v3605
      %3671 = vmatprep.subr.bf16.mxu0 %v3608
      %3672 = vmatpush1.bf16.msra.mxu0 %v3607
      %3673 = vmatprep.subr.bf16.mxu0 %v3610
      %3674 = vmatpush1.bf16.msra.mxu0 %v3609
      %3675 = vmatprep.subr.bf16.mxu0 %v3612
      %3676 = vmatpush1.bf16.msra.mxu0 %v3611
      %3677 = vmatprep.subr.bf16.mxu0 %v3614
      %3678 = vmatpush1.bf16.msra.mxu0 %v3613
      %3679 = vmatprep.subr.bf16.mxu0 %v3616
      %3680 = vmatpush1.bf16.msra.mxu0 %v3615
      %3681 = vmatprep.subr.bf16.mxu0 %v3618
      %3682 = vmatpush1.bf16.msra.mxu0 %v3617
      %3683 = vmatprep.mubr.bf16.mxu0 %v3414
      %3684 = vmatmul.mubr.bf16.gmra.mrb[0].mxu0 %v3413
      %v3685 = vpop.f32.mrb[0].mxu0
      %v3686 = vadd.f32 %v3484, %v3685
      %v3687 = vpop.f32.mrb[0].mxu0
      %v3688 = vadd.f32 %v3488, %v3687
      %v3689 = vpop.f32.mrb[0].mxu0
      %v3690 = vadd.f32 %v3484, %v3689
      %v3691 = vpop.f32.mrb[0].mxu0
      %v3692 = vadd.f32 %v3488, %v3691
      %3693 = vmatprep.mubr.bf16.mxu0 %v3416
      %3694 = vmatmul.mubr.bf16.gmra.mrb[0].mxu0 %v3415
      %v3695 = vpop.f32.mrb[0].mxu0
      %v3696 = vadd.f32 %v3484, %v3695
      %v3697 = vpop.f32.mrb[0].mxu0
      %v3698 = vadd.f32 %v3488, %v3697
      %v3699 = vpop.f32.mrb[0].mxu0
      %v3700 = vadd.f32 %v3484, %v3699
      %v3701 = vpop.f32.mrb[0].mxu0
      %v3702 = vadd.f32 %v3488, %v3701
      %3703 = vmatprep.mubr.bf16.mxu0 %v3418
      %3704 = vmatmul.mubr.bf16.gmra.mrb[0].mxu0 %v3417
      %v3705 = vpop.f32.mrb[0].mxu0
      %v3706 = vadd.f32 %v3484, %v3705
      %v3707 = vpop.f32.mrb[0].mxu0
      %v3708 = vadd.f32 %v3488, %v3707
      %v3709 = vpop.f32.mrb[0].mxu0
      %v3710 = vadd.f32 %v3484, %v3709
      %v3711 = vpop.f32.mrb[0].mxu0
      %v3712 = vadd.f32 %v3488, %v3711
      %3713 = vmatprep.mubr.bf16.mxu0 %v3420
      %3714 = vmatmul.mubr.bf16.gmra.mrb[0].mxu0 %v3419
      %v3715 = vpop.f32.mrb[0].mxu0
      %v3716 = vadd.f32 %v3484, %v3715
      %v3717 = vpop.f32.mrb[0].mxu0
      %v3718 = vadd.f32 %v3488, %v3717
      %v3719 = vpop.f32.mrb[0].mxu0
      %v3720 = vadd.f32 %v3484, %v3719
      %v3721 = vpop.f32.mrb[0].mxu0
      %v3722 = vadd.f32 %v3488, %v3721
      %3723 = vmatprep.mubr.bf16.mxu0 %v3422
      %3724 = vmatmul.mubr.bf16.gmra.mrb[0].mxu0 %v3421
      %v3725 = vpop.f32.mrb[0].mxu0
      %v3726 = vadd.f32 %v3484, %v3725
      %v3727 = vpop.f32.mrb[0].mxu0
      %v3728 = vadd.f32 %v3488, %v3727
      %v3729 = vpop.f32.mrb[0].mxu0
      %v3730 = vadd.f32 %v3484, %v3729
      %v3731 = vpop.f32.mrb[0].mxu0
      %v3732 = vadd.f32 %v3488, %v3731
      %3733 = vmatprep.mubr.bf16.mxu0 %v3424
      %3734 = vmatmul.mubr.bf16.gmra.mrb[0].mxu0 %v3423
      %v3735 = vpop.f32.mrb[0].mxu0
      %v3736 = vadd.f32 %v3484, %v3735
      %v3737 = vpop.f32.mrb[0].mxu0
      %v3738 = vadd.f32 %v3488, %v3737
      %v3739 = vpop.f32.mrb[0].mxu0
      %v3740 = vadd.f32 %v3484, %v3739
      %v3741 = vpop.f32.mrb[0].mxu0
      %v3742 = vadd.f32 %v3488, %v3741
      %3743 = vmatprep.mubr.bf16.mxu0 %v3426
      %3744 = vmatmul.mubr.bf16.gmra.mrb[0].mxu0 %v3425
      %v3745 = vpop.f32.mrb[0].mxu0
      %v3746 = vadd.f32 %v3484, %v3745
      %v3747 = vpop.f32.mrb[0].mxu0
      %v3748 = vadd.f32 %v3488, %v3747
      %v3749 = vpop.f32.mrb[0].mxu0
      %v3750 = vadd.f32 %v3484, %v3749
      %v3751 = vpop.f32.mrb[0].mxu0
      %v3752 = vadd.f32 %v3488, %v3751
      %3753 = vmatprep.mubr.bf16.mxu0 %v3428
      %3754 = vmatmul.mubr.bf16.gmra.mrb[0].mxu0 %v3427
      %v3755 = vpop.f32.mrb[0].mxu0
      %v3756 = vadd.f32 %v3484, %v3755
      %v3757 = vpop.f32.mrb[0].mxu0
      %v3758 = vadd.f32 %v3488, %v3757
      %v3759 = vpop.f32.mrb[0].mxu0
      %v3760 = vadd.f32 %v3484, %v3759
      %v3761 = vpop.f32.mrb[0].mxu0
      %v3762 = vadd.f32 %v3488, %v3761
      %3763 = vmatprep.mubr.bf16.mxu0 %v3430
      %3764 = vmatmul.mubr.bf16.gmra.mrb[0].mxu0 %v3429
      %v3765 = vpop.f32.mrb[0].mxu0
      %v3766 = vadd.f32 %v3484, %v3765
      %v3767 = vpop.f32.mrb[0].mxu0
      %v3768 = vadd.f32 %v3488, %v3767
      %v3769 = vpop.f32.mrb[0].mxu0
      %v3770 = vadd.f32 %v3484, %v3769
      %v3771 = vpop.f32.mrb[0].mxu0
      %v3772 = vadd.f32 %v3488, %v3771
      %3773 = vmatprep.mubr.bf16.mxu0 %v3432
      %3774 = vmatmul.mubr.bf16.gmra.mrb[0].mxu0 %v3431
      %v3775 = vpop.f32.mrb[0].mxu0
      %v3776 = vadd.f32 %v3484, %v3775
      %v3777 = vpop.f32.mrb[0].mxu0
      %v3778 = vadd.f32 %v3488, %v3777
      %v3779 = vpop.f32.mrb[0].mxu0
      %v3780 = vadd.f32 %v3484, %v3779
      %v3781 = vpop.f32.mrb[0].mxu0
      %v3782 = vadd.f32 %v3488, %v3781
      %3783 = vmatprep.mubr.bf16.mxu0 %v3434
      %3784 = vmatmul.mubr.bf16.gmra.mrb[0].mxu0 %v3433
      %v3785 = vpop.f32.mrb[0].mxu0
      %v3786 = vadd.f32 %v3484, %v3785
      %v3787 = vpop.f32.mrb[0].mxu0
      %v3788 = vadd.f32 %v3488, %v3787
      %v3789 = vpop.f32.mrb[0].mxu0
      %v3790 = vadd.f32 %v3484, %v3789
      %v3791 = vpop.f32.mrb[0].mxu0
      %v3792 = vadd.f32 %v3488, %v3791
      %3793 = vmatprep.mubr.bf16.mxu0 %v3436
      %3794 = vmatmul.mubr.bf16.gmra.mrb[0].mxu0 %v3435
      %v3795 = vpop.f32.mrb[0].mxu0
      %v3796 = vadd.f32 %v3484, %v3795
      %v3797 = vpop.f32.mrb[0].mxu0
      %v3798 = vadd.f32 %v3488, %v3797
      %v3799 = vpop.f32.mrb[0].mxu0
      %v3800 = vadd.f32 %v3484, %v3799
      %v3801 = vpop.f32.mrb[0].mxu0
      %v3802 = vadd.f32 %v3488, %v3801
      %3803 = vmatprep.mubr.bf16.mxu0 %v3438
      %3804 = vmatmul.mubr.bf16.gmra.mrb[0].mxu0 %v3437
      %v3805 = vpop.f32.mrb[0].mxu0
      %v3806 = vadd.f32 %v3484, %v3805
      %v3807 = vpop.f32.mrb[0].mxu0
      %v3808 = vadd.f32 %v3488, %v3807
      %v3809 = vpop.f32.mrb[0].mxu0
      %v3810 = vadd.f32 %v3484, %v3809
      %v3811 = vpop.f32.mrb[0].mxu0
      %v3812 = vadd.f32 %v3488, %v3811
      %3813 = vmatprep.mubr.bf16.mxu0 %v3440
      %3814 = vmatmul.mubr.bf16.gmra.mrb[0].mxu0 %v3439
      %v3815 = vpop.f32.mrb[0].mxu0
      %v3816 = vadd.f32 %v3484, %v3815
      %v3817 = vpop.f32.mrb[0].mxu0
      %v3818 = vadd.f32 %v3488, %v3817
      %v3819 = vpop.f32.mrb[0].mxu0
      %v3820 = vadd.f32 %v3484, %v3819
      %v3821 = vpop.f32.mrb[0].mxu0
      %v3822 = vadd.f32 %v3488, %v3821
      %3823 = vmatprep.mubr.bf16.mxu0 %v3442
      %3824 = vmatmul.mubr.bf16.gmra.mrb[0].mxu0 %v3441
      %v3825 = vpop.f32.mrb[0].mxu0
      %v3826 = vadd.f32 %v3484, %v3825
      %v3827 = vpop.f32.mrb[0].mxu0
      %v3828 = vadd.f32 %v3488, %v3827
      %v3829 = vpop.f32.mrb[0].mxu0
      %v3830 = vadd.f32 %v3484, %v3829
      %v3831 = vpop.f32.mrb[0].mxu0
      %v3832 = vadd.f32 %v3488, %v3831
      %3833 = vmatprep.mubr.bf16.mxu0 %v3444
      %3834 = vmatmul.mubr.bf16.gmra.mrb[0].mxu0 %v3443
      %v3835 = vpop.f32.mrb[0].mxu0
      %v3836 = vadd.f32 %v3484, %v3835
      %v3837 = vpop.f32.mrb[0].mxu0
      %v3838 = vadd.f32 %v3488, %v3837
      %v3839 = vpop.f32.mrb[0].mxu0
      %v3840 = vadd.f32 %v3484, %v3839
      %v3841 = vpop.f32.mrb[0].mxu0
      %v3842 = vadd.f32 %v3488, %v3841
      %3843 = vdwg.mxu0
      %v3844 = vmax.f32 %v3686, 0.0
      %v3845 = vmax.f32 %v3688, 0.0
      %v3846 = vmax.f32 %v3690, 0.0
      %v3847 = vmax.f32 %v3692, 0.0
      %v3848 = vmax.f32 %v3696, 0.0
      %v3849 = vmax.f32 %v3698, 0.0
      %v3850 = vmax.f32 %v3700, 0.0
      %v3851 = vmax.f32 %v3702, 0.0
      %v3852 = vmax.f32 %v3706, 0.0
      %v3853 = vmax.f32 %v3708, 0.0
      %v3854 = vmax.f32 %v3710, 0.0
      %v3855 = vmax.f32 %v3712, 0.0
      %v3856 = vmax.f32 %v3716, 0.0
      %v3857 = vmax.f32 %v3718, 0.0
      %v3858 = vmax.f32 %v3720, 0.0
      %v3859 = vmax.f32 %v3722, 0.0
      %v3860 = vmax.f32 %v3726, 0.0
      %v3861 = vmax.f32 %v3728, 0.0
      %v3862 = vmax.f32 %v3730, 0.0
      %v3863 = vmax.f32 %v3732, 0.0
      %v3864 = vmax.f32 %v3736, 0.0
      %v3865 = vmax.f32 %v3738, 0.0
      %v3866 = vmax.f32 %v3740, 0.0
      %v3867 = vmax.f32 %v3742, 0.0
      %v3868 = vmax.f32 %v3746, 0.0
      %v3869 = vmax.f32 %v3748, 0.0
      %v3870 = vmax.f32 %v3750, 0.0
      %v3871 = vmax.f32 %v3752, 0.0
      %v3872 = vmax.f32 %v3756, 0.0
      %v3873 = vmax.f32 %v3758, 0.0
      %v3874 = vmax.f32 %v3760, 0.0
      %v3875 = vmax.f32 %v3762, 0.0
      %v3876 = vmax.f32 %v3766, 0.0
      %v3877 = vmax.f32 %v3768, 0.0
      %v3878 = vmax.f32 %v3770, 0.0
      %v3879 = vmax.f32 %v3772, 0.0
      %v3880 = vmax.f32 %v3776, 0.0
      %v3881 = vmax.f32 %v3778, 0.0
      %v3882 = vmax.f32 %v3780, 0.0
      %v3883 = vmax.f32 %v3782, 0.0
      %v3884 = vmax.f32 %v3786, 0.0
      %v3885 = vmax.f32 %v3788, 0.0
      %v3886 = vmax.f32 %v3790, 0.0
      %v3887 = vmax.f32 %v3792, 0.0
      %v3888 = vmax.f32 %v3796, 0.0
      %v3889 = vmax.f32 %v3798, 0.0
      %v3890 = vmax.f32 %v3800, 0.0
      %v3891 = vmax.f32 %v3802, 0.0
      %v3892 = vmax.f32 %v3806, 0.0
      %v3893 = vmax.f32 %v3808, 0.0
      %v3894 = vmax.f32 %v3810, 0.0
      %v3895 = vmax.f32 %v3812, 0.0
      %v3896 = vmax.f32 %v3816, 0.0
      %v3897 = vmax.f32 %v3818, 0.0
      %v3898 = vmax.f32 %v3820, 0.0
      %v3899 = vmax.f32 %v3822, 0.0
      %v3900 = vmax.f32 %v3826, 0.0
      %v3901 = vmax.f32 %v3828, 0.0
      %v3902 = vmax.f32 %v3830, 0.0
      %v3903 = vmax.f32 %v3832, 0.0
      %v3904 = vmax.f32 %v3836, 0.0
      %v3905 = vmax.f32 %v3838, 0.0
      %v3906 = vmax.f32 %v3840, 0.0
      %v3907 = vmax.f32 %v3842, 0.0
      %v3908 = vpack.c.bf16 %v3846, %v3844
      %v3909 = vpack.c.bf16 %v3847, %v3845
      %v3910 = vpack.c.bf16 %v3850, %v3848
      %v3911 = vpack.c.bf16 %v3851, %v3849
      %v3912 = vpack.c.bf16 %v3854, %v3852
      %v3913 = vpack.c.bf16 %v3855, %v3853
      %v3914 = vpack.c.bf16 %v3858, %v3856
      %v3915 = vpack.c.bf16 %v3859, %v3857
      %v3916 = vpack.c.bf16 %v3862, %v3860
      %v3917 = vpack.c.bf16 %v3863, %v3861
      %v3918 = vpack.c.bf16 %v3866, %v3864
      %v3919 = vpack.c.bf16 %v3867, %v3865
      %v3920 = vpack.c.bf16 %v3870, %v3868
      %v3921 = vpack.c.bf16 %v3871, %v3869
      %v3922 = vpack.c.bf16 %v3874, %v3872
      %v3923 = vpack.c.bf16 %v3875, %v3873
      %v3924 = vpack.c.bf16 %v3878, %v3876
      %v3925 = vpack.c.bf16 %v3879, %v3877
      %v3926 = vpack.c.bf16 %v3882, %v3880
      %v3927 = vpack.c.bf16 %v3883, %v3881
      %v3928 = vpack.c.bf16 %v3886, %v3884
      %v3929 = vpack.c.bf16 %v3887, %v3885
      %v3930 = vpack.c.bf16 %v3890, %v3888
      %v3931 = vpack.c.bf16 %v3891, %v3889
      %v3932 = vpack.c.bf16 %v3894, %v3892
      %v3933 = vpack.c.bf16 %v3895, %v3893
      %v3934 = vpack.c.bf16 %v3898, %v3896
      %v3935 = vpack.c.bf16 %v3899, %v3897
      %v3936 = vpack.c.bf16 %v3902, %v3900
      %v3937 = vpack.c.bf16 %v3903, %v3901
      %v3938 = vpack.c.bf16 %v3906, %v3904
      %v3939 = vpack.c.bf16 %v3907, %v3905
      %s3940 = scalar_lea.vmem %s3, 1536
      %v3941 = vld [vmem:[%s3940] sm:$0xff]
      %v3942 = vld [vmem:[%s3940 + $0x8] sm:$0xff]
      %v3943 = vld [vmem:[%s3940 + $0x10] sm:$0xff]
      %v3944 = vld [vmem:[%s3940 + $0x18] sm:$0xff]
      %v3945 = vld [vmem:[%s3940 + $0x20] sm:$0xff]
      %v3946 = vld [vmem:[%s3940 + $0x28] sm:$0xff]
      %v3947 = vld [vmem:[%s3940 + $0x30] sm:$0xff]
      %v3948 = vld [vmem:[%s3940 + $0x38] sm:$0xff]
      %v3949 = vld [vmem:[%s3940 + $0x40] sm:$0xff]
      %v3950 = vld [vmem:[%s3940 + $0x48] sm:$0xff]
      %v3951 = vld [vmem:[%s3940 + $0x50] sm:$0xff]
      %v3952 = vld [vmem:[%s3940 + $0x58] sm:$0xff]
      %v3953 = vld [vmem:[%s3940 + $0x60] sm:$0xff]
      %v3954 = vld [vmem:[%s3940 + $0x68] sm:$0xff]
      %v3955 = vld [vmem:[%s3940 + $0x70] sm:$0xff]
      %v3956 = vld [vmem:[%s3940 + $0x78] sm:$0xff]
      %v3957 = vld [vmem:[%s3940 + $0x80] sm:$0xff]
      %v3958 = vld [vmem:[%s3940 + $0x88] sm:$0xff]
      %v3959 = vld [vmem:[%s3940 + $0x90] sm:$0xff]
      %v3960 = vld [vmem:[%s3940 + $0x98] sm:$0xff]
      %v3961 = vld [vmem:[%s3940 + $0xa0] sm:$0xff]
      %v3962 = vld [vmem:[%s3940 + $0xa8] sm:$0xff]
      %v3963 = vld [vmem:[%s3940 + $0xb0] sm:$0xff]
      %v3964 = vld [vmem:[%s3940 + $0xb8] sm:$0xff]
      %v3965 = vld [vmem:[%s3940 + $0xc0] sm:$0xff]
      %v3966 = vld [vmem:[%s3940 + $0xc8] sm:$0xff]
      %v3967 = vld [vmem:[%s3940 + $0xd0] sm:$0xff]
      %v3968 = vld [vmem:[%s3940 + $0xd8] sm:$0xff]
      %v3969 = vld [vmem:[%s3940 + $0xe0] sm:$0xff]
      %v3970 = vld [vmem:[%s3940 + $0xe8] sm:$0xff]
      %v3971 = vld [vmem:[%s3940 + $0xf0] sm:$0xff]
      %v3972 = vld [vmem:[%s3940 + $0xf8] sm:$0xff]
      %s3973 = scalar_lea.vmem %s4, 7
      %v3974 = vld [vmem:[%s3973] ss:$8 sm:$0x3]
      %v3976 = vlaneseq
      %v3977 = vshrl.u32 %v3976, 7
      %v3978 = vsub.s32 0, %v3977
      %v3979 = vrot.slane %v3974, %v3978
      %v3980 = vlaneseq
      %v3981 = vshrl.u32 %v3980, 7
      %v3982 = vsub.s32 1, %v3981
      %v3983 = vrot.slane %v3974, %v3982
      %v4018 = vunpack.c.l.b16 %v3941
      %v4019 = vunpack.c.h.b16 %v3941
      %v4020 = vunpack.c.l.b16 %v3942
      %v4021 = vunpack.c.h.b16 %v3942
      %v4022 = vunpack.c.l.b16 %v3943
      %v4023 = vunpack.c.h.b16 %v3943
      %v4024 = vunpack.c.l.b16 %v3944
      %v4025 = vunpack.c.h.b16 %v3944
      %v4026 = vunpack.c.l.b16 %v3945
      %v4027 = vunpack.c.h.b16 %v3945
      %v4028 = vunpack.c.l.b16 %v3946
      %v4029 = vunpack.c.h.b16 %v3946
      %v4030 = vunpack.c.l.b16 %v3947
      %v4031 = vunpack.c.h.b16 %v3947
      %v4032 = vunpack.c.l.b16 %v3948
      %v4033 = vunpack.c.h.b16 %v3948
      %v4034 = vunpack.c.l.b16 %v3949
      %v4035 = vunpack.c.h.b16 %v3949
      %v4036 = vunpack.c.l.b16 %v3950
      %v4037 = vunpack.c.h.b16 %v3950
      %v4038 = vunpack.c.l.b16 %v3951
      %v4039 = vunpack.c.h.b16 %v3951
      %v4040 = vunpack.c.l.b16 %v3952
      %v4041 = vunpack.c.h.b16 %v3952
      %v4042 = vunpack.c.l.b16 %v3953
      %v4043 = vunpack.c.h.b16 %v3953
      %v4044 = vunpack.c.l.b16 %v3954
      %v4045 = vunpack.c.h.b16 %v3954
      %v4046 = vunpack.c.l.b16 %v3955
      %v4047 = vunpack.c.h.b16 %v3955
      %v4048 = vunpack.c.l.b16 %v3956
      %v4049 = vunpack.c.h.b16 %v3956
      %v4050 = vunpack.c.l.b16 %v3957
      %v4051 = vunpack.c.h.b16 %v3957
      %v4052 = vunpack.c.l.b16 %v3958
      %v4053 = vunpack.c.h.b16 %v3958
      %v4054 = vunpack.c.l.b16 %v3959
      %v4055 = vunpack.c.h.b16 %v3959
      %v4056 = vunpack.c.l.b16 %v3960
      %v4057 = vunpack.c.h.b16 %v3960
      %v4058 = vunpack.c.l.b16 %v3961
      %v4059 = vunpack.c.h.b16 %v3961
      %v4060 = vunpack.c.l.b16 %v3962
      %v4061 = vunpack.c.h.b16 %v3962
      %v4062 = vunpack.c.l.b16 %v3963
      %v4063 = vunpack.c.h.b16 %v3963
      %v4064 = vunpack.c.l.b16 %v3964
      %v4065 = vunpack.c.h.b16 %v3964
      %v4066 = vunpack.c.l.b16 %v3965
      %v4067 = vunpack.c.h.b16 %v3965
      %v4068 = vunpack.c.l.b16 %v3966
      %v4069 = vunpack.c.h.b16 %v3966
      %v4070 = vunpack.c.l.b16 %v3967
      %v4071 = vunpack.c.h.b16 %v3967
      %v4072 = vunpack.c.l.b16 %v3968
      %v4073 = vunpack.c.h.b16 %v3968
      %v4074 = vunpack.c.l.b16 %v3969
      %v4075 = vunpack.c.h.b16 %v3969
      %v4076 = vunpack.c.l.b16 %v3970
      %v4077 = vunpack.c.h.b16 %v3970
      %v4078 = vunpack.c.l.b16 %v3971
      %v4079 = vunpack.c.h.b16 %v3971
      %v4080 = vunpack.c.l.b16 %v3972
      %v4081 = vunpack.c.h.b16 %v3972
      %v4082 = vpack.c.b16 %v4020, %v4018
      %v4083 = vpack.c.b16 %v4021, %v4019
      %v4084 = vpack.c.b16 %v4024, %v4022
      %v4085 = vpack.c.b16 %v4025, %v4023
      %v4086 = vpack.c.b16 %v4028, %v4026
      %v4087 = vpack.c.b16 %v4029, %v4027
      %v4088 = vpack.c.b16 %v4032, %v4030
      %v4089 = vpack.c.b16 %v4033, %v4031
      %v4090 = vpack.c.b16 %v4036, %v4034
      %v4091 = vpack.c.b16 %v4037, %v4035
      %v4092 = vpack.c.b16 %v4040, %v4038
      %v4093 = vpack.c.b16 %v4041, %v4039
      %v4094 = vpack.c.b16 %v4044, %v4042
      %v4095 = vpack.c.b16 %v4045, %v4043
      %v4096 = vpack.c.b16 %v4048, %v4046
      %v4097 = vpack.c.b16 %v4049, %v4047
      %v4098 = vpack.c.b16 %v4052, %v4050
      %v4099 = vpack.c.b16 %v4053, %v4051
      %v4100 = vpack.c.b16 %v4056, %v4054
      %v4101 = vpack.c.b16 %v4057, %v4055
      %v4102 = vpack.c.b16 %v4060, %v4058
      %v4103 = vpack.c.b16 %v4061, %v4059
      %v4104 = vpack.c.b16 %v4064, %v4062
      %v4105 = vpack.c.b16 %v4065, %v4063
      %v4106 = vpack.c.b16 %v4068, %v4066
      %v4107 = vpack.c.b16 %v4069, %v4067
      %v4108 = vpack.c.b16 %v4072, %v4070
      %v4109 = vpack.c.b16 %v4073, %v4071
      %v4110 = vpack.c.b16 %v4076, %v4074
      %v4111 = vpack.c.b16 %v4077, %v4075
      %v4112 = vpack.c.b16 %v4080, %v4078
      %v4113 = vpack.c.b16 %v4081, %v4079
      %4146 = vmatprep.subr.bf16.mxu0 %v4083
      %4147 = vmatpush1.bf16.msra.mxu0 %v4082
      %4148 = vmatprep.subr.bf16.mxu0 %v4085
      %4149 = vmatpush1.bf16.msra.mxu0 %v4084
      %4150 = vmatprep.subr.bf16.mxu0 %v4087
      %4151 = vmatpush1.bf16.msra.mxu0 %v4086
      %4152 = vmatprep.subr.bf16.mxu0 %v4089
      %4153 = vmatpush1.bf16.msra.mxu0 %v4088
      %4154 = vmatprep.subr.bf16.mxu0 %v4091
      %4155 = vmatpush1.bf16.msra.mxu0 %v4090
      %4156 = vmatprep.subr.bf16.mxu0 %v4093
      %4157 = vmatpush1.bf16.msra.mxu0 %v4092
      %4158 = vmatprep.subr.bf16.mxu0 %v4095
      %4159 = vmatpush1.bf16.msra.mxu0 %v4094
      %4160 = vmatprep.subr.bf16.mxu0 %v4097
      %4161 = vmatpush1.bf16.msra.mxu0 %v4096
      %4162 = vmatprep.subr.bf16.mxu0 %v4099
      %4163 = vmatpush1.bf16.msra.mxu0 %v4098
      %4164 = vmatprep.subr.bf16.mxu0 %v4101
      %4165 = vmatpush1.bf16.msra.mxu0 %v4100
      %4166 = vmatprep.subr.bf16.mxu0 %v4103
      %4167 = vmatpush1.bf16.msra.mxu0 %v4102
      %4168 = vmatprep.subr.bf16.mxu0 %v4105
      %4169 = vmatpush1.bf16.msra.mxu0 %v4104
      %4170 = vmatprep.subr.bf16.mxu0 %v4107
      %4171 = vmatpush1.bf16.msra.mxu0 %v4106
      %4172 = vmatprep.subr.bf16.mxu0 %v4109
      %4173 = vmatpush1.bf16.msra.mxu0 %v4108
      %4174 = vmatprep.subr.bf16.mxu0 %v4111
      %4175 = vmatpush1.bf16.msra.mxu0 %v4110
      %4176 = vmatprep.subr.bf16.mxu0 %v4113
      %4177 = vmatpush1.bf16.msra.mxu0 %v4112
      %4178 = vmatprep.mubr.bf16.mxu0 %v3909
      %4179 = vmatmul.mubr.bf16.gmra.mrb[0].mxu0 %v3908
      %v4180 = vpop.f32.mrb[0].mxu0
      %v4181 = vadd.f32 %v3979, %v4180
      %v4182 = vpop.f32.mrb[0].mxu0
      %v4183 = vadd.f32 %v3983, %v4182
      %v4184 = vpop.f32.mrb[0].mxu0
      %v4185 = vadd.f32 %v3979, %v4184
      %v4186 = vpop.f32.mrb[0].mxu0
      %v4187 = vadd.f32 %v3983, %v4186
      %4188 = vmatprep.mubr.bf16.mxu0 %v3911
      %4189 = vmatmul.mubr.bf16.gmra.mrb[0].mxu0 %v3910
      %v4190 = vpop.f32.mrb[0].mxu0
      %v4191 = vadd.f32 %v3979, %v4190
      %v4192 = vpop.f32.mrb[0].mxu0
      %v4193 = vadd.f32 %v3983, %v4192
      %v4194 = vpop.f32.mrb[0].mxu0
      %v4195 = vadd.f32 %v3979, %v4194
      %v4196 = vpop.f32.mrb[0].mxu0
      %v4197 = vadd.f32 %v3983, %v4196
      %4198 = vmatprep.mubr.bf16.mxu0 %v3913
      %4199 = vmatmul.mubr.bf16.gmra.mrb[0].mxu0 %v3912
      %v4200 = vpop.f32.mrb[0].mxu0
      %v4201 = vadd.f32 %v3979, %v4200
      %v4202 = vpop.f32.mrb[0].mxu0
      %v4203 = vadd.f32 %v3983, %v4202
      %v4204 = vpop.f32.mrb[0].mxu0
      %v4205 = vadd.f32 %v3979, %v4204
      %v4206 = vpop.f32.mrb[0].mxu0
      %v4207 = vadd.f32 %v3983, %v4206
      %4208 = vmatprep.mubr.bf16.mxu0 %v3915
      %4209 = vmatmul.mubr.bf16.gmra.mrb[0].mxu0 %v3914
      %v4210 = vpop.f32.mrb[0].mxu0
      %v4211 = vadd.f32 %v3979, %v4210
      %v4212 = vpop.f32.mrb[0].mxu0
      %v4213 = vadd.f32 %v3983, %v4212
      %v4214 = vpop.f32.mrb[0].mxu0
      %v4215 = vadd.f32 %v3979, %v4214
      %v4216 = vpop.f32.mrb[0].mxu0
      %v4217 = vadd.f32 %v3983, %v4216
      %4218 = vmatprep.mubr.bf16.mxu0 %v3917
      %4219 = vmatmul.mubr.bf16.gmra.mrb[0].mxu0 %v3916
      %v4220 = vpop.f32.mrb[0].mxu0
      %v4221 = vadd.f32 %v3979, %v4220
      %v4222 = vpop.f32.mrb[0].mxu0
      %v4223 = vadd.f32 %v3983, %v4222
      %v4224 = vpop.f32.mrb[0].mxu0
      %v4225 = vadd.f32 %v3979, %v4224
      %v4226 = vpop.f32.mrb[0].mxu0
      %v4227 = vadd.f32 %v3983, %v4226
      %4228 = vmatprep.mubr.bf16.mxu0 %v3919
      %4229 = vmatmul.mubr.bf16.gmra.mrb[0].mxu0 %v3918
      %v4230 = vpop.f32.mrb[0].mxu0
      %v4231 = vadd.f32 %v3979, %v4230
      %v4232 = vpop.f32.mrb[0].mxu0
      %v4233 = vadd.f32 %v3983, %v4232
      %v4234 = vpop.f32.mrb[0].mxu0
      %v4235 = vadd.f32 %v3979, %v4234
      %v4236 = vpop.f32.mrb[0].mxu0
      %v4237 = vadd.f32 %v3983, %v4236
      %4238 = vmatprep.mubr.bf16.mxu0 %v3921
      %4239 = vmatmul.mubr.bf16.gmra.mrb[0].mxu0 %v3920
      %v4240 = vpop.f32.mrb[0].mxu0
      %v4241 = vadd.f32 %v3979, %v4240
      %v4242 = vpop.f32.mrb[0].mxu0
      %v4243 = vadd.f32 %v3983, %v4242
      %v4244 = vpop.f32.mrb[0].mxu0
      %v4245 = vadd.f32 %v3979, %v4244
      %v4246 = vpop.f32.mrb[0].mxu0
      %v4247 = vadd.f32 %v3983, %v4246
      %4248 = vmatprep.mubr.bf16.mxu0 %v3923
      %4249 = vmatmul.mubr.bf16.gmra.mrb[0].mxu0 %v3922
      %v4250 = vpop.f32.mrb[0].mxu0
      %v4251 = vadd.f32 %v3979, %v4250
      %v4252 = vpop.f32.mrb[0].mxu0
      %v4253 = vadd.f32 %v3983, %v4252
      %v4254 = vpop.f32.mrb[0].mxu0
      %v4255 = vadd.f32 %v3979, %v4254
      %v4256 = vpop.f32.mrb[0].mxu0
      %v4257 = vadd.f32 %v3983, %v4256
      %4258 = vmatprep.mubr.bf16.mxu0 %v3925
      %4259 = vmatmul.mubr.bf16.gmra.mrb[0].mxu0 %v3924
      %v4260 = vpop.f32.mrb[0].mxu0
      %v4261 = vadd.f32 %v3979, %v4260
      %v4262 = vpop.f32.mrb[0].mxu0
      %v4263 = vadd.f32 %v3983, %v4262
      %v4264 = vpop.f32.mrb[0].mxu0
      %v4265 = vadd.f32 %v3979, %v4264
      %v4266 = vpop.f32.mrb[0].mxu0
      %v4267 = vadd.f32 %v3983, %v4266
      %4268 = vmatprep.mubr.bf16.mxu0 %v3927
      %4269 = vmatmul.mubr.bf16.gmra.mrb[0].mxu0 %v3926
      %v4270 = vpop.f32.mrb[0].mxu0
      %v4271 = vadd.f32 %v3979, %v4270
      %v4272 = vpop.f32.mrb[0].mxu0
      %v4273 = vadd.f32 %v3983, %v4272
      %v4274 = vpop.f32.mrb[0].mxu0
      %v4275 = vadd.f32 %v3979, %v4274
      %v4276 = vpop.f32.mrb[0].mxu0
      %v4277 = vadd.f32 %v3983, %v4276
      %4278 = vmatprep.mubr.bf16.mxu0 %v3929
      %4279 = vmatmul.mubr.bf16.gmra.mrb[0].mxu0 %v3928
      %v4280 = vpop.f32.mrb[0].mxu0
      %v4281 = vadd.f32 %v3979, %v4280
      %v4282 = vpop.f32.mrb[0].mxu0
      %v4283 = vadd.f32 %v3983, %v4282
      %v4284 = vpop.f32.mrb[0].mxu0
      %v4285 = vadd.f32 %v3979, %v4284
      %v4286 = vpop.f32.mrb[0].mxu0
      %v4287 = vadd.f32 %v3983, %v4286
      %4288 = vmatprep.mubr.bf16.mxu0 %v3931
      %4289 = vmatmul.mubr.bf16.gmra.mrb[0].mxu0 %v3930
      %v4290 = vpop.f32.mrb[0].mxu0
      %v4291 = vadd.f32 %v3979, %v4290
      %v4292 = vpop.f32.mrb[0].mxu0
      %v4293 = vadd.f32 %v3983, %v4292
      %v4294 = vpop.f32.mrb[0].mxu0
      %v4295 = vadd.f32 %v3979, %v4294
      %v4296 = vpop.f32.mrb[0].mxu0
      %v4297 = vadd.f32 %v3983, %v4296
      %4298 = vmatprep.mubr.bf16.mxu0 %v3933
      %4299 = vmatmul.mubr.bf16.gmra.mrb[0].mxu0 %v3932
      %v4300 = vpop.f32.mrb[0].mxu0
      %v4301 = vadd.f32 %v3979, %v4300
      %v4302 = vpop.f32.mrb[0].mxu0
      %v4303 = vadd.f32 %v3983, %v4302
      %v4304 = vpop.f32.mrb[0].mxu0
      %v4305 = vadd.f32 %v3979, %v4304
      %v4306 = vpop.f32.mrb[0].mxu0
      %v4307 = vadd.f32 %v3983, %v4306
      %4308 = vmatprep.mubr.bf16.mxu0 %v3935
      %4309 = vmatmul.mubr.bf16.gmra.mrb[0].mxu0 %v3934
      %v4310 = vpop.f32.mrb[0].mxu0
      %v4311 = vadd.f32 %v3979, %v4310
      %v4312 = vpop.f32.mrb[0].mxu0
      %v4313 = vadd.f32 %v3983, %v4312
      %v4314 = vpop.f32.mrb[0].mxu0
      %v4315 = vadd.f32 %v3979, %v4314
      %v4316 = vpop.f32.mrb[0].mxu0
      %v4317 = vadd.f32 %v3983, %v4316
      %4318 = vmatprep.mubr.bf16.mxu0 %v3937
      %4319 = vmatmul.mubr.bf16.gmra.mrb[0].mxu0 %v3936
      %v4320 = vpop.f32.mrb[0].mxu0
      %v4321 = vadd.f32 %v3979, %v4320
      %v4322 = vpop.f32.mrb[0].mxu0
      %v4323 = vadd.f32 %v3983, %v4322
      %v4324 = vpop.f32.mrb[0].mxu0
      %v4325 = vadd.f32 %v3979, %v4324
      %v4326 = vpop.f32.mrb[0].mxu0
      %v4327 = vadd.f32 %v3983, %v4326
      %4328 = vmatprep.mubr.bf16.mxu0 %v3939
      %4329 = vmatmul.mubr.bf16.gmra.mrb[0].mxu0 %v3938
      %v4330 = vpop.f32.mrb[0].mxu0
      %v4331 = vadd.f32 %v3979, %v4330
      %v4332 = vpop.f32.mrb[0].mxu0
      %v4333 = vadd.f32 %v3983, %v4332
      %v4334 = vpop.f32.mrb[0].mxu0
      %v4335 = vadd.f32 %v3979, %v4334
      %v4336 = vpop.f32.mrb[0].mxu0
      %v4337 = vadd.f32 %v3983, %v4336
      %4338 = vdwg.mxu0
      %v4339 = vmax.f32 %v4181, 0.0
      %v4340 = vmax.f32 %v4183, 0.0
      %v4341 = vmax.f32 %v4185, 0.0
      %v4342 = vmax.f32 %v4187, 0.0
      %v4343 = vmax.f32 %v4191, 0.0
      %v4344 = vmax.f32 %v4193, 0.0
      %v4345 = vmax.f32 %v4195, 0.0
      %v4346 = vmax.f32 %v4197, 0.0
      %v4347 = vmax.f32 %v4201, 0.0
      %v4348 = vmax.f32 %v4203, 0.0
      %v4349 = vmax.f32 %v4205, 0.0
      %v4350 = vmax.f32 %v4207, 0.0
      %v4351 = vmax.f32 %v4211, 0.0
      %v4352 = vmax.f32 %v4213, 0.0
      %v4353 = vmax.f32 %v4215, 0.0
      %v4354 = vmax.f32 %v4217, 0.0
      %v4355 = vmax.f32 %v4221, 0.0
      %v4356 = vmax.f32 %v4223, 0.0
      %v4357 = vmax.f32 %v4225, 0.0
      %v4358 = vmax.f32 %v4227, 0.0
      %v4359 = vmax.f32 %v4231, 0.0
      %v4360 = vmax.f32 %v4233, 0.0
      %v4361 = vmax.f32 %v4235, 0.0
      %v4362 = vmax.f32 %v4237, 0.0
      %v4363 = vmax.f32 %v4241, 0.0
      %v4364 = vmax.f32 %v4243, 0.0
      %v4365 = vmax.f32 %v4245, 0.0
      %v4366 = vmax.f32 %v4247, 0.0
      %v4367 = vmax.f32 %v4251, 0.0
      %v4368 = vmax.f32 %v4253, 0.0
      %v4369 = vmax.f32 %v4255, 0.0
      %v4370 = vmax.f32 %v4257, 0.0
      %v4371 = vmax.f32 %v4261, 0.0
      %v4372 = vmax.f32 %v4263, 0.0
      %v4373 = vmax.f32 %v4265, 0.0
      %v4374 = vmax.f32 %v4267, 0.0
      %v4375 = vmax.f32 %v4271, 0.0
      %v4376 = vmax.f32 %v4273, 0.0
      %v4377 = vmax.f32 %v4275, 0.0
      %v4378 = vmax.f32 %v4277, 0.0
      %v4379 = vmax.f32 %v4281, 0.0
      %v4380 = vmax.f32 %v4283, 0.0
      %v4381 = vmax.f32 %v4285, 0.0
      %v4382 = vmax.f32 %v4287, 0.0
      %v4383 = vmax.f32 %v4291, 0.0
      %v4384 = vmax.f32 %v4293, 0.0
      %v4385 = vmax.f32 %v4295, 0.0
      %v4386 = vmax.f32 %v4297, 0.0
      %v4387 = vmax.f32 %v4301, 0.0
      %v4388 = vmax.f32 %v4303, 0.0
      %v4389 = vmax.f32 %v4305, 0.0
      %v4390 = vmax.f32 %v4307, 0.0
      %v4391 = vmax.f32 %v4311, 0.0
      %v4392 = vmax.f32 %v4313, 0.0
      %v4393 = vmax.f32 %v4315, 0.0
      %v4394 = vmax.f32 %v4317, 0.0
      %v4395 = vmax.f32 %v4321, 0.0
      %v4396 = vmax.f32 %v4323, 0.0
      %v4397 = vmax.f32 %v4325, 0.0
      %v4398 = vmax.f32 %v4327, 0.0
      %v4399 = vmax.f32 %v4331, 0.0
      %v4400 = vmax.f32 %v4333, 0.0
      %v4401 = vmax.f32 %v4335, 0.0
      %v4402 = vmax.f32 %v4337, 0.0
      %v4403 = vpack.c.bf16 %v4341, %v4339
      %v4404 = vpack.c.bf16 %v4342, %v4340
      %v4405 = vpack.c.bf16 %v4345, %v4343
      %v4406 = vpack.c.bf16 %v4346, %v4344
      %v4407 = vpack.c.bf16 %v4349, %v4347
      %v4408 = vpack.c.bf16 %v4350, %v4348
      %v4409 = vpack.c.bf16 %v4353, %v4351
      %v4410 = vpack.c.bf16 %v4354, %v4352
      %v4411 = vpack.c.bf16 %v4357, %v4355
      %v4412 = vpack.c.bf16 %v4358, %v4356
      %v4413 = vpack.c.bf16 %v4361, %v4359
      %v4414 = vpack.c.bf16 %v4362, %v4360
      %v4415 = vpack.c.bf16 %v4365, %v4363
      %v4416 = vpack.c.bf16 %v4366, %v4364
      %v4417 = vpack.c.bf16 %v4369, %v4367
      %v4418 = vpack.c.bf16 %v4370, %v4368
      %v4419 = vpack.c.bf16 %v4373, %v4371
      %v4420 = vpack.c.bf16 %v4374, %v4372
      %v4421 = vpack.c.bf16 %v4377, %v4375
      %v4422 = vpack.c.bf16 %v4378, %v4376
      %v4423 = vpack.c.bf16 %v4381, %v4379
      %v4424 = vpack.c.bf16 %v4382, %v4380
      %v4425 = vpack.c.bf16 %v4385, %v4383
      %v4426 = vpack.c.bf16 %v4386, %v4384
      %v4427 = vpack.c.bf16 %v4389, %v4387
      %v4428 = vpack.c.bf16 %v4390, %v4388
      %v4429 = vpack.c.bf16 %v4393, %v4391
      %v4430 = vpack.c.bf16 %v4394, %v4392
      %v4431 = vpack.c.bf16 %v4397, %v4395
      %v4432 = vpack.c.bf16 %v4398, %v4396
      %v4433 = vpack.c.bf16 %v4401, %v4399
      %v4434 = vpack.c.bf16 %v4402, %v4400
      %v4435 = vld [vmem:[%s5] sm:$0xf]
      %v4436 = vld [vmem:[%s6] sm:$0xf]
      %4438 = vset.pattern.permute.xlu0 0
      %4439 = vperm.xlu0 %4438, %v4436
      %v4440 = vpop.permute.xlu0 %4439
      %v4444 = vunpack.c.l.s4 1983009808
      %v4445 = vunpack.c.0.s8 %v4444
      %v4446 = vlaneseq
      %v4447 = vshrl.u32 %v4446, 7
      %v4448 = vsub.s32 %v4445, %v4447
      %v4449 = vrot.slane %v4435, %v4448
      %v4450 = vcombine.high %v4449, %v4449
      %4453 = vmatprep.subr.bf16.mxu0 %v4404
      %4454 = vmatpush1.bf16.xpose.msra.mxu0 %v4403
      %4455 = vmatprep.subr.bf16.mxu0 %v4406
      %4456 = vmatpush1.bf16.xpose.msra.mxu0 %v4405
      %4457 = vmatprep.subr.bf16.mxu0 %v4408
      %4458 = vmatpush1.bf16.xpose.msra.mxu0 %v4407
      %4459 = vmatprep.subr.bf16.mxu0 %v4410
      %4460 = vmatpush1.bf16.xpose.msra.mxu0 %v4409
      %4461 = vmatprep.subr.bf16.mxu0 %v4412
      %4462 = vmatpush1.bf16.xpose.msra.mxu0 %v4411
      %4463 = vmatprep.subr.bf16.mxu0 %v4414
      %4464 = vmatpush1.bf16.xpose.msra.mxu0 %v4413
      %4465 = vmatprep.subr.bf16.mxu0 %v4416
      %4466 = vmatpush1.bf16.xpose.msra.mxu0 %v4415
      %4467 = vmatprep.subr.bf16.mxu0 %v4418
      %4468 = vmatpush1.bf16.xpose.msra.mxu0 %v4417
      %4469 = vmatprep.subr.bf16.mxu0 %v4420
      %4470 = vmatpush1.bf16.xpose.msra.mxu0 %v4419
      %4471 = vmatprep.subr.bf16.mxu0 %v4422
      %4472 = vmatpush1.bf16.xpose.msra.mxu0 %v4421
      %4473 = vmatprep.subr.bf16.mxu0 %v4424
      %4474 = vmatpush1.bf16.xpose.msra.mxu0 %v4423
      %4475 = vmatprep.subr.bf16.mxu0 %v4426
      %4476 = vmatpush1.bf16.xpose.msra.mxu0 %v4425
      %4477 = vmatprep.subr.bf16.mxu0 %v4428
      %4478 = vmatpush1.bf16.xpose.msra.mxu0 %v4427
      %4479 = vmatprep.subr.bf16.mxu0 %v4430
      %4480 = vmatpush1.bf16.xpose.msra.mxu0 %v4429
      %4481 = vmatprep.subr.bf16.mxu0 %v4432
      %4482 = vmatpush1.bf16.xpose.msra.mxu0 %v4431
      %4483 = vmatprep.subr.bf16.mxu0 %v4434
      %4484 = vmatpush1.bf16.xpose.msra.mxu0 %v4433
      %4485 = vmatprep.mubr.bf16.mxu0 %v4450
      %4486 = vmatmul.mubr.bf16.gmra.mrb[0].mxu0 %v4449
      %v4487 = vpop.f32.mrb[0].mxu0
      %v4488 = vadd.f32 %v4440, %v4487
      %v4489 = vpop.f32.mrb[0].mxu0
      %v4490 = vadd.f32 %v4440, %v4489
      %v4491 = vpop.f32.mrb[0].mxu0
      %v4492 = vpop.f32.mrb[0].mxu0
      %4493 = vdwg.mxu0
      %v4496 = vcombine.low %v4488, %v4490
      %4498 = vst [vmem:[%s280] sm:$0xff] %v4496
      %s4499 = smul.u32 2, %s18
      %p4500 = scmp.lt.s32.totalorder %s4499, 7
      %s4501 = scalar_select %p4500, %s4499, 7
      %s4502 = smul.addr %s4501, 4
      %s4503 = scalar_lea.vmem %s7, %s4502
      // Predicated region
      $region49: #{nerf_forward.1} parent=47 // pred_check
        %p4504 = pneg %p188
      $region50: #{nerf_forward.1} parent=47 // pred_check_branch
        %4506 = sbr.rel (%p4504) target = $region52
      $region51: #{nerf_forward.1} parent=47 // pred_region
        %s4507 = smul.u32 2, %s18
      $region52: #{nerf_forward.1} parent=47 // pred_fallthru
        _
    $region48: #{nerf_forward.1} parent=5 // pred_fallthru
      _
    %p4508 = scmp.le.s32.totalorder 2, %s13
    // Predicated region
    $region53: #{nerf_forward.1} parent=5 // pred_check
      %p4509 = pneg %p4508
    $region54: #{nerf_forward.1} parent=5 // pred_check_branch
      %4511 = sbr.rel (%p4509) target = $region56
    $region55: #{nerf_forward.1} parent=5 // pred_region
      %s4512 = ssub.s32 %s13, 2
      // Predicated region
      $region57: #{nerf_forward.1} parent=55 // pred_check
        %p4513 = pneg %p194
      $region58: #{nerf_forward.1} parent=55 // pred_check_branch
        %4515 = sbr.rel (%p4513) target = $region60
      $region59: #{nerf_forward.1} parent=55 // pred_region
        %s4516 = smul.u32 2, %s19
        %p4517 = scmp.lt.s32.totalorder %s4516, 7
        %s4518 = scalar_select %p4517, %s4516, 7
        %s4519 = smul.addr %s4518, 4
        %s4520 = scalar_lea.vmem %s7, %s4519
      $region60: #{nerf_forward.1} parent=55 // pred_fallthru
        _
    $region56: #{nerf_forward.1} parent=5 // pred_fallthru
      _
  $region6: #{nerf_forward.1} parent=0 // loop_footer
    %s17 = sadd.s32 1, %s13
  $region7: #{nerf_forward.1} parent=0 // loop_footer_branch
    %12 = sbr.rel target = $region3
  $region8: #{nerf_forward.1} parent=0 // loop_exit
    _

</llo_original>
